<compile_context>
chip_gen: v5e
topology: v5e:2x2
jax: 0.10.0
libtpu: 0.0.40
codegen_flags: <defaults>
</compile_context>

<pallas_src>
from functools import partial

import jax
import jax.numpy as jnp
from jax import lax
from jax.experimental import pallas as pl
from jax.experimental.pallas import tpu as pltpu

RIR_LEN = 16                          # number of impulse-response taps
_LN10_OVER_20 = 0.11512925464970229   # ln(10)/20, folded on host
_LANE = 128                           # output block width (lanes)
_WIN = 3 * _LANE                      # 384-wide aligned input window per block
_MAX_UNROLL_BLOCKS = 32               # static unroll threshold for short signals


def _pick_b_tile(batch, time, slab_budget_bytes=4 << 20):
    """Batch tile: a multiple of 8 dividing `batch` (or the full batch), sized
    so one (B_TILE, T) f32 slab is ~4 MiB.  With x / noise / out double
    buffered plus the band matrix and small scratch the footprint is ~26 MiB,
    covered explicitly by vmem_limit_bytes=48 MiB (v5e's default scoped VMEM
    is only 16 MiB; physical VMEM is 128 MiB on v5e/v6e and 64 MiB per
    TensorCore on v7x).  When batch >= 16 the tile is capped at batch//2 so
    the grid has at least two steps for v7x's two TensorCores."""
    rows = max(8, slab_budget_bytes // max(4 * time, 1))
    rows -= rows % 8
    rows = max(rows, 8)
    if batch % 8 != 0:
        return batch                    # single full-batch tile (grid of 1)
    if batch >= 16:                     # guarantee >= 2 grid steps (v7x megacore)
        cap = (batch // 2) - ((batch // 2) % 8)
        rows = min(rows, max(cap, 8))
    if batch <= rows:
        return batch
    bt = min(rows, batch)
    while batch % bt != 0:
        bt -= 8
    return max(bt, 8)


def _build_band_matrix(rir, rot_idx):
    """W[p, u] = rir[u + rot_idx + 128 - p] (0 elsewhere).  For an output block
    starting at t0 and window[:, p] = x[:, (t0 - 128 + p) mod T]:
      (window @ W)[:, u] = sum_j rir[j] * x[:, (t0 + u + rot_idx - j) mod T]
    i.e. the direct-path-aligned circular reverb convolution."""
    rir = jnp.asarray(rir, jnp.float32)
    rir_len = rir.shape[0]
    u = jnp.arange(_LANE, dtype=jnp.int32)[None, :]
    p = jnp.arange(_WIN, dtype=jnp.int32)[:, None]
    j = u + rot_idx + _LANE - p
    valid = (j >= 0) & (j < rir_len)
    return jnp.where(valid, rir[jnp.clip(j, 0, rir_len - 1)], 0.0).astype(jnp.float32)


def _env_corrupt_kernel(w_ref, x_ref, side_ref, noise_ref, out_ref,
                        edge_ref, accx_ref, accy_ref, accn_ref, *, time):
    """Fused EnvCorrupt forward for one (B_TILE, T) batch tile.

    w_ref     : VMEM f32[384, 128]  band matrix (RIR taps), resident across steps
    x_ref     : VMEM f32[Bt, T]     input waveforms
    side_ref  : VMEM f32[Bt, 3]     [snr_factor, 1/(lengths*T), 1/noise_len]
    noise_ref : VMEM f32[Bt, T]     noise batch (padded/chopped to T)
    out_ref   : VMEM f32[Bt, T]     corrupted waveforms (also holds unscaled y)
    edge_ref  : VMEM f32[Bt, 384]   scratch for the two circular-wrap edge blocks
    acc*_ref  : VMEM f32[Bt, 128]   chunk-wise |x| / |y| / |noise| accumulators
    """
    nb = time // _LANE

    accx_ref[...] = jnp.zeros_like(accx_ref)
    accy_ref[...] = jnp.zeros_like(accy_ref)
    accn_ref[...] = jnp.zeros_like(accn_ref)

    def emit_block(t0, window):
        # MXU: (Bt, 384) @ (384, 128) band matmul -> one reverbed output block.
        y = jnp.dot(window, w_ref[...], preferred_element_type=jnp.float32)
        out_ref[:, pl.ds(t0, _LANE)] = y                      # accumulate into out
        accy_ref[...] += jnp.abs(y)
        accx_ref[...] += jnp.abs(x_ref[:, pl.ds(t0, _LANE)])
        accn_ref[...] += jnp.abs(noise_ref[:, pl.ds(t0, _LANE)])

    # ---- first output block: left halo wraps (circular convolution) --------
    edge_ref[:, 0:_LANE] = x_ref[:, time - _LANE:time]
    edge_ref[:, _LANE:_WIN] = x_ref[:, 0:2 * _LANE]
    emit_block(0, edge_ref[...])

    # ---- interior blocks: aligned 384-wide windows straight from x_ref -----
    if nb - 2 <= _MAX_UNROLL_BLOCKS:
        # short signals: fully static lane offsets
        for b in range(1, nb - 1):
            emit_block(b * _LANE, x_ref[:, (b - 1) * _LANE:(b + 2) * _LANE])
    else:
        # long signals: bounded code size, 128-aligned dynamic offsets
        def body(b, carry):
            start = pl.multiple_of((b - 1) * _LANE, _LANE)
            t0 = pl.multiple_of(b * _LANE, _LANE)
            emit_block(t0, x_ref[:, pl.ds(start, _WIN)])
            return carry
        lax.fori_loop(1, nb - 1, body, 0)

    # ---- last output block: right halo wraps --------------------------------
    edge_ref[:, 0:2 * _LANE] = x_ref[:, time - 2 * _LANE:time]
    edge_ref[:, 2 * _LANE:_WIN] = x_ref[:, 0:_LANE]
    emit_block(time - _LANE, edge_ref[...])

    # ---- per-row amplitude scalars ------------------------------------------
    inv_T = 1.0 / float(time)
    orig_amp = jnp.sum(accx_ref[...], axis=1, keepdims=True) * inv_T   # (Bt, 1)
    abs_y_sum = jnp.sum(accy_ref[...], axis=1, keepdims=True)          # (Bt, 1)
    noise_abs_sum = jnp.sum(accn_ref[...], axis=1, keepdims=True)      # (Bt, 1)

    factor = side_ref[:, 0:1]     # 1 / (dB_to_amplitude(SNR) + 1), host-folded
    inv_lens = side_ref[:, 1:2]   # 1 / (lengths * T)
    inv_nlen = side_ref[:, 2:3]   # 1 / noise_len (samples)

    rev_amp = abs_y_sum * inv_T
    inv_rev = pl.reciprocal(rev_amp + 1e-14, approx=True)      # EUP, ~free slot
    # amplitude of the avg-rescaled reverbed signal: sum|y*orig/rev| / lens
    clean_amp = abs_y_sum * orig_amp * inv_rev * inv_lens
    noise_amp = noise_abs_sum * inv_nlen

    s_y = orig_amp * inv_rev * (1.0 - factor)
    s_n = factor * clean_amp * pl.reciprocal(noise_amp + 1e-14, approx=True)

    # ---- single in-place output sweep ----------------------------------------
    out_ref[...] = out_ref[...] * s_y + noise_ref[...] * s_n


def env_corrupt(waveforms, lengths, rir, rot_idx, snr, noise, noise_len,
                *, b_tile=None):
    """EnvCorrupt forward: reverb (circular conv, direct-path aligned, avg
    rescale) then additive noise at the drawn SNR.

    waveforms : f32[B, T]        lengths   : f32[B]  (relative, 0..1]
    rir       : f32[L]           rot_idx   : static int = argmax(|rir|)
    snr       : f32[B, 1] (dB)   noise     : f32[B, T]
    noise_len : f32[B, 1] (samples)
    """
    B, T = waveforms.shape
    rir = jnp.asarray(rir, jnp.float32)
    rir_len = int(rir.shape[0])
    rot_idx = int(rot_idx)
    assert 0 <= rot_idx < rir_len
    # Band matrix fits a 3x128-lane window: taps on either side of the direct
    # path must stay within one 128-lane halo.
    # TODO(synk): RIRs longer than ~128 taps need a wider window / several
    # band-matrix column groups.
    assert rot_idx <= _LANE and (rir_len - 1 - rot_idx) <= _LANE
    # TODO(synk): the data pipeline pads waveforms to a multiple of 128
    # samples; arbitrary T would need a masked tail block.
    assert T % _LANE == 0 and T >= 2 * _LANE

    if b_tile is None:
        b_tile = _pick_b_tile(B, T)
    assert B % b_tile == 0
    grid = (B // b_tile,)

    w_band = _build_band_matrix(rir, rot_idx)                     # (384, 128)

    # Host-folded per-row scalars: [snr factor, 1/(lengths*T), 1/noise_len].
    lengths_f = jnp.asarray(lengths, jnp.float32).reshape(B)
    snr_f = jnp.asarray(snr, jnp.float32).reshape(B)
    nlen_f = jnp.asarray(noise_len, jnp.float32).reshape(B)
    factor = 1.0 / (jnp.exp(snr_f * _LN10_OVER_20) + 1.0)
    side = jnp.stack([factor, 1.0 / (lengths_f * float(T)), 1.0 / nlen_f],
                     axis=1).astype(jnp.float32)                  # (B, 3)

    kernel = partial(_env_corrupt_kernel, time=T)
    row = lambda i: (i, 0)

    return pl.pallas_call(
        kernel,
        out_shape=jax.ShapeDtypeStruct((B, T), jnp.float32),
        grid_spec=pltpu.PrefetchScalarGridSpec(
            num_scalar_prefetch=0,
            grid=grid,
            in_specs=[
                pl.BlockSpec((_WIN, _LANE), lambda i: (0, 0)),    # band matrix
                pl.BlockSpec((b_tile, T), row),                   # waveforms
                pl.BlockSpec((b_tile, 3), row),                   # packed scalars
                pl.BlockSpec((b_tile, T), row),                   # noise
            ],
            out_specs=pl.BlockSpec((b_tile, T), row),
            scratch_shapes=[
                pltpu.VMEM((b_tile, _WIN), jnp.float32),   # edge-wrap window
                pltpu.VMEM((b_tile, _LANE), jnp.float32),  # sum|x| accumulator
                pltpu.VMEM((b_tile, _LANE), jnp.float32),  # sum|y| accumulator
                pltpu.VMEM((b_tile, _LANE), jnp.float32),  # sum|noise| accumulator
            ],
        ),
        compiler_params=pltpu.CompilerParams(
            dimension_semantics=("parallel",),
            vmem_limit_bytes=48 * 1024 * 1024),
    )(w_band, waveforms.astype(jnp.float32), side, noise.astype(jnp.float32))


def _reference(waveforms, lengths, rir, rot_idx, snr, noise, noise_len):
    """Pure-JAX reference with the same semantics (circular reverb + AddNoise)."""
    B, T = waveforms.shape
    x = waveforms.astype(jnp.float32)
    y = jnp.zeros_like(x)
    for j in range(int(rir.shape[0])):
        y = y + rir[j] * jnp.roll(x, j - rot_idx, axis=1)
    orig_amp = jnp.mean(jnp.abs(x), axis=1, keepdims=True)
    rev_amp = jnp.mean(jnp.abs(y), axis=1, keepdims=True)
    y = y * orig_amp / (rev_amp + 1e-14)
    lens = lengths.reshape(B, 1) * T
    clean_amp = jnp.sum(jnp.abs(y), axis=1, keepdims=True) / lens
    factor = 1.0 / (10.0 ** (snr.reshape(B, 1) / 20.0) + 1.0)
    noise_amp = jnp.sum(jnp.abs(noise), axis=1, keepdims=True) / noise_len.reshape(B, 1)
    return y * (1.0 - factor) + noise * (factor * clean_amp / (noise_amp + 1e-14))


if __name__ == "__main__":
    key = jax.random.PRNGKey(0)
    k1, k2, k3 = jax.random.split(key, 3)

    B, T = 16, 2048
    waveforms = jax.random.normal(k1, (B, T), jnp.float32) * 0.1
    lengths = jnp.ones((B,), jnp.float32)

    # Synthetic RIR "loader": exponentially decaying tail, direct path at tap 2.
    taps = jnp.arange(RIR_LEN, dtype=jnp.float32)
    rir = jnp.exp(-0.5 * taps) * jnp.where(taps >= 2.0, 1.0, 0.0)
    rir = rir.at[2].set(1.0)
    rot_idx = 2  # static direct-path index (argmax |rir|), known to the loader

    # Synthetic noise "loader": noise already padded/chopped to T samples.
    # TODO(synk): random start_index chop and pad_noise tiling from _load_noise
    # are data-pipeline logic; noise is synthesized at full length with start=0.
    noise = jax.random.normal(k2, (B, T), jnp.float32) * 0.05
    noise_len = jnp.full((B, 1), float(T), jnp.float32)

    # SNR ~ U[snr_low, snr_high] = U[0, 15]  (matches torch.rand(B,1)*(hi-lo)+lo)
    snr = jax.random.uniform(k3, (B, 1), dtype=jnp.float32) * 15.0

    out = env_corrupt(waveforms, lengths, rir, rot_idx, snr, noise, noise_len)
    jax.block_until_ready(out)
    assert out.shape == (B, T) and out.dtype == jnp.float32
    assert bool(jnp.all(jnp.isfinite(out)))

    # numerical sanity check vs. pure-JAX reference (tolerance covers approx
    # reciprocals and MXU matmul precision)
    ref = _reference(waveforms, lengths, rir, rot_idx, snr, noise, noise_len)
    err = float(jnp.max(jnp.abs(out - ref)))
    scale = float(jnp.max(jnp.abs(ref)))
    assert err <= 3e-2 * scale + 1e-6, (err, scale)

    print("KERNEL_OK")
</pallas_src>

<mosaic_0001>
module attributes {stable_mosaic.version = 11 : i64} {
  func.func @_env_corrupt_kernel(%arg0: i32, %arg1: memref<384x128xf32, #tpu.memory_space<vmem>>, %arg2: memref<8x2048xf32, #tpu.memory_space<vmem>>, %arg3: memref<8x3xf32, #tpu.memory_space<vmem>>, %arg4: memref<8x2048xf32, #tpu.memory_space<vmem>>, %arg5: memref<8x2048xf32, #tpu.memory_space<vmem>>, %arg6: memref<8x384xf32, #tpu.memory_space<vmem>>, %arg7: memref<8x128xf32, #tpu.memory_space<vmem>>, %arg8: memref<8x128xf32, #tpu.memory_space<vmem>>, %arg9: memref<8x128xf32, #tpu.memory_space<vmem>>) attributes {dimension_semantics = [#tpu.dimension_semantics<parallel>], iteration_bounds = array<i64: 2>, scalar_prefetch = 0 : i64, scratch_operands = 4 : i64, tpu.core_type = #tpu.core_type<tc>, window_params = [{pipeline_mode = #tpu.pipeline_mode<synchronous>, transform_indices = @transform_0, window_bounds = array<i64: 384, 128>}, {transform_indices = @transform_1, window_bounds = array<i64: 8, 2048>}, {transform_indices = @transform_2, window_bounds = array<i64: 8, 3>}, {transform_indices = @transform_3, window_bounds = array<i64: 8, 2048>}, {transform_indices = @transform_4, window_bounds = array<i64: 8, 2048>}]} {
    %cst = arith.constant 0.000000e+00 : f32
    %0 = vector.broadcast %cst : f32 to vector<8x128xf32>
    %c0 = arith.constant 0 : index
    %c0_0 = arith.constant 0 : index
    %1 = vector.load %arg7[%c0, %c0_0] : memref<8x128xf32, #tpu.memory_space<vmem>>, vector<8x128xf32>
    tpu.vector_store %arg7[%c0, %c0_0], %0 {strides = array<i32>} : memref<8x128xf32, #tpu.memory_space<vmem>>, vector<8x128xf32>,
    %cst_1 = arith.constant 0.000000e+00 : f32
    %2 = vector.broadcast %cst_1 : f32 to vector<8x128xf32>
    %c0_2 = arith.constant 0 : index
    %c0_3 = arith.constant 0 : index
    %3 = vector.load %arg8[%c0_2, %c0_3] : memref<8x128xf32, #tpu.memory_space<vmem>>, vector<8x128xf32>
    tpu.vector_store %arg8[%c0_2, %c0_3], %2 {strides = array<i32>} : memref<8x128xf32, #tpu.memory_space<vmem>>, vector<8x128xf32>,
    %cst_4 = arith.constant 0.000000e+00 : f32
    %4 = vector.broadcast %cst_4 : f32 to vector<8x128xf32>
    %c0_5 = arith.constant 0 : index
    %c0_6 = arith.constant 0 : index
    %5 = vector.load %arg9[%c0_5, %c0_6] : memref<8x128xf32, #tpu.memory_space<vmem>>, vector<8x128xf32>
    tpu.vector_store %arg9[%c0_5, %c0_6], %4 {strides = array<i32>} : memref<8x128xf32, #tpu.memory_space<vmem>>, vector<8x128xf32>,
    %c0_7 = arith.constant 0 : index
    %c1920 = arith.constant 1920 : index
    %6 = vector.load %arg2[%c0_7, %c1920] : memref<8x2048xf32, #tpu.memory_space<vmem>>, vector<8x128xf32>
    %c0_8 = arith.constant 0 : index
    %c0_9 = arith.constant 0 : index
    %7 = vector.load %arg6[%c0_8, %c0_9] : memref<8x384xf32, #tpu.memory_space<vmem>>, vector<8x128xf32>
    tpu.vector_store %arg6[%c0_8, %c0_9], %6 {strides = array<i32>} : memref<8x384xf32, #tpu.memory_space<vmem>>, vector<8x128xf32>,
    %c0_10 = arith.constant 0 : index
    %c0_11 = arith.constant 0 : index
    %8 = vector.load %arg2[%c0_10, %c0_11] : memref<8x2048xf32, #tpu.memory_space<vmem>>, vector<8x256xf32>
    %c0_12 = arith.constant 0 : index
    %c128 = arith.constant 128 : index
    %9 = vector.load %arg6[%c0_12, %c128] : memref<8x384xf32, #tpu.memory_space<vmem>>, vector<8x256xf32>
    tpu.vector_store %arg6[%c0_12, %c128], %8 {strides = array<i32>} : memref<8x384xf32, #tpu.memory_space<vmem>>, vector<8x256xf32>,
    %c0_13 = arith.constant 0 : index
    %c0_14 = arith.constant 0 : index
    %10 = vector.load %arg6[%c0_13, %c0_14] : memref<8x384xf32, #tpu.memory_space<vmem>>, vector<8x384xf32>
    %c0_15 = arith.constant 0 : index
    %c0_16 = arith.constant 0 : index
    %11 = vector.load %arg1[%c0_15, %c0_16] : memref<384x128xf32, #tpu.memory_space<vmem>>, vector<384x128xf32>
    %cst_17 = arith.constant dense<0.000000e+00> : vector<8x128xf32>
    %12 = tpu.matmul %10, %11, %cst_17 {dimension_numbers = #tpu.dot_dimension_numbers<[1], [0], [0], [1], [0, 0, 1, 1], [], []>} : vector<8x384xf32>, vector<384x128xf32>, vector<8x128xf32> -> vector<8x128xf32>
    %c0_18 = arith.constant 0 : index
    %c0_19 = arith.constant 0 : index
    %13 = vector.load %arg5[%c0_18, %c0_19] : memref<8x2048xf32, #tpu.memory_space<vmem>>, vector<8x128xf32>
    tpu.vector_store %arg5[%c0_18, %c0_19], %12 {strides = array<i32>} : memref<8x2048xf32, #tpu.memory_space<vmem>>, vector<8x128xf32>,
    %c0_20 = arith.constant 0 : index
    %c0_21 = arith.constant 0 : index
    %14 = vector.load %arg8[%c0_20, %c0_21] : memref<8x128xf32, #tpu.memory_space<vmem>>, vector<8x128xf32>
    %15 = math.absf %12 : vector<8x128xf32>
    %16 = arith.addf %14, %15 : vector<8x128xf32>
    %c0_22 = arith.constant 0 : index
    %c0_23 = arith.constant 0 : index
    %17 = vector.load %arg8[%c0_22, %c0_23] : memref<8x128xf32, #tpu.memory_space<vmem>>, vector<8x128xf32>
    tpu.vector_store %arg8[%c0_22, %c0_23], %16 {strides = array<i32>} : memref<8x128xf32, #tpu.memory_space<vmem>>, vector<8x128xf32>,
    %c0_24 = arith.constant 0 : index
    %c0_25 = arith.constant 0 : index
    %18 = vector.load %arg7[%c0_24, %c0_25] : memref<8x128xf32, #tpu.memory_space<vmem>>, vector<8x128xf32>
    %c0_26 = arith.constant 0 : index
    %c0_27 = arith.constant 0 : index
    %19 = vector.load %arg2[%c0_26, %c0_27] : memref<8x2048xf32, #tpu.memory_space<vmem>>, vector<8x128xf32>
    %20 = math.absf %19 : vector<8x128xf32>
    %21 = arith.addf %18, %20 : vector<8x128xf32>
    %c0_28 = arith.constant 0 : index
    %c0_29 = arith.constant 0 : index
    %22 = vector.load %arg7[%c0_28, %c0_29] : memref<8x128xf32, #tpu.memory_space<vmem>>, vector<8x128xf32>
    tpu.vector_store %arg7[%c0_28, %c0_29], %21 {strides = array<i32>} : memref<8x128xf32, #tpu.memory_space<vmem>>, vector<8x128xf32>,
    %c0_30 = arith.constant 0 : index
    %c0_31 = arith.constant 0 : index
    %23 = vector.load %arg9[%c0_30, %c0_31] : memref<8x128xf32, #tpu.memory_space<vmem>>, vector<8x128xf32>
    %c0_32 = arith.constant 0 : index
    %c0_33 = arith.constant 0 : index
    %24 = vector.load %arg4[%c0_32, %c0_33] : memref<8x2048xf32, #tpu.memory_space<vmem>>, vector<8x128xf32>
    %25 = math.absf %24 : vector<8x128xf32>
    %26 = arith.addf %23, %25 : vector<8x128xf32>
    %c0_34 = arith.constant 0 : index
    %c0_35 = arith.constant 0 : index
    %27 = vector.load %arg9[%c0_34, %c0_35] : memref<8x128xf32, #tpu.memory_space<vmem>>, vector<8x128xf32>
    tpu.vector_store %arg9[%c0_34, %c0_35], %26 {strides = array<i32>} : memref<8x128xf32, #tpu.memory_space<vmem>>, vector<8x128xf32>,
    %c0_36 = arith.constant 0 : index
    %c0_37 = arith.constant 0 : index
    %28 = vector.load %arg2[%c0_36, %c0_37] : memref<8x2048xf32, #tpu.memory_space<vmem>>, vector<8x384xf32>
    %c0_38 = arith.constant 0 : index
    %c0_39 = arith.constant 0 : index
    %29 = vector.load %arg1[%c0_38, %c0_39] : memref<384x128xf32, #tpu.memory_space<vmem>>, vector<384x128xf32>
    %cst_40 = arith.constant dense<0.000000e+00> : vector<8x128xf32>
    %30 = tpu.matmul %28, %29, %cst_40 {dimension_numbers = #tpu.dot_dimension_numbers<[1], [0], [0], [1], [0, 0, 1, 1], [], []>} : vector<8x384xf32>, vector<384x128xf32>, vector<8x128xf32> -> vector<8x128xf32>
    %c0_41 = arith.constant 0 : index
    %c128_42 = arith.constant 128 : index
    %31 = vector.load %arg5[%c0_41, %c128_42] : memref<8x2048xf32, #tpu.memory_space<vmem>>, vector<8x128xf32>
    tpu.vector_store %arg5[%c0_41, %c128_42], %30 {strides = array<i32>} : memref<8x2048xf32, #tpu.memory_space<vmem>>, vector<8x128xf32>,
    %c0_43 = arith.constant 0 : index
    %c0_44 = arith.constant 0 : index
    %32 = vector.load %arg8[%c0_43, %c0_44] : memref<8x128xf32, #tpu.memory_space<vmem>>, vector<8x128xf32>
    %33 = math.absf %30 : vector<8x128xf32>
    %34 = arith.addf %32, %33 : vector<8x128xf32>
    %c0_45 = arith.constant 0 : index
    %c0_46 = arith.constant 0 : index
    %35 = vector.load %arg8[%c0_45, %c0_46] : memref<8x128xf32, #tpu.memory_space<vmem>>, vector<8x128xf32>
    tpu.vector_store %arg8[%c0_45, %c0_46], %34 {strides = array<i32>} : memref<8x128xf32, #tpu.memory_space<vmem>>, vector<8x128xf32>,
    %c0_47 = arith.constant 0 : index
    %c0_48 = arith.constant 0 : index
    %36 = vector.load %arg7[%c0_47, %c0_48] : memref<8x128xf32, #tpu.memory_space<vmem>>, vector<8x128xf32>
    %c0_49 = arith.constant 0 : index
    %c128_50 = arith.constant 128 : index
    %37 = vector.load %arg2[%c0_49, %c128_50] : memref<8x2048xf32, #tpu.memory_space<vmem>>, vector<8x128xf32>
    %38 = math.absf %37 : vector<8x128xf32>
    %39 = arith.addf %36, %38 : vector<8x128xf32>
    %c0_51 = arith.constant 0 : index
    %c0_52 = arith.constant 0 : index
    %40 = vector.load %arg7[%c0_51, %c0_52] : memref<8x128xf32, #tpu.memory_space<vmem>>, vector<8x128xf32>
    tpu.vector_store %arg7[%c0_51, %c0_52], %39 {strides = array<i32>} : memref<8x128xf32, #tpu.memory_space<vmem>>, vector<8x128xf32>,
    %c0_53 = arith.constant 0 : index
    %c0_54 = arith.constant 0 : index
    %41 = vector.load %arg9[%c0_53, %c0_54] : memref<8x128xf32, #tpu.memory_space<vmem>>, vector<8x128xf32>
    %c0_55 = arith.constant 0 : index
    %c128_56 = arith.constant 128 : index
    %42 = vector.load %arg4[%c0_55, %c128_56] : memref<8x2048xf32, #tpu.memory_space<vmem>>, vector<8x128xf32>
    %43 = math.absf %42 : vector<8x128xf32>
    %44 = arith.addf %41, %43 : vector<8x128xf32>
    %c0_57 = arith.constant 0 : index
    %c0_58 = arith.constant 0 : index
    %45 = vector.load %arg9[%c0_57, %c0_58] : memref<8x128xf32, #tpu.memory_space<vmem>>, vector<8x128xf32>
    tpu.vector_store %arg9[%c0_57, %c0_58], %44 {strides = array<i32>} : memref<8x128xf32, #tpu.memory_space<vmem>>, vector<8x128xf32>,
    %c0_59 = arith.constant 0 : index
    %c128_60 = arith.constant 128 : index
    %46 = vector.load %arg2[%c0_59, %c128_60] : memref<8x2048xf32, #tpu.memory_space<vmem>>, vector<8x384xf32>
    %c0_61 = arith.constant 0 : index
    %c0_62 = arith.constant 0 : index
    %47 = vector.load %arg1[%c0_61, %c0_62] : memref<384x128xf32, #tpu.memory_space<vmem>>, vector<384x128xf32>
    %cst_63 = arith.constant dense<0.000000e+00> : vector<8x128xf32>
    %48 = tpu.matmul %46, %47, %cst_63 {dimension_numbers = #tpu.dot_dimension_numbers<[1], [0], [0], [1], [0, 0, 1, 1], [], []>} : vector<8x384xf32>, vector<384x128xf32>, vector<8x128xf32> -> vector<8x128xf32>
    %c0_64 = arith.constant 0 : index
    %c256 = arith.constant 256 : index
    %49 = vector.load %arg5[%c0_64, %c256] : memref<8x2048xf32, #tpu.memory_space<vmem>>, vector<8x128xf32>
    tpu.vector_store %arg5[%c0_64, %c256], %48 {strides = array<i32>} : memref<8x2048xf32, #tpu.memory_space<vmem>>, vector<8x128xf32>,
    %c0_65 = arith.constant 0 : index
    %c0_66 = arith.constant 0 : index
    %50 = vector.load %arg8[%c0_65, %c0_66] : memref<8x128xf32, #tpu.memory_space<vmem>>, vector<8x128xf32>
    %51 = math.absf %48 : vector<8x128xf32>
    %52 = arith.addf %50, %51 : vector<8x128xf32>
    %c0_67 = arith.constant 0 : index
    %c0_68 = arith.constant 0 : index
    %53 = vector.load %arg8[%c0_67, %c0_68] : memref<8x128xf32, #tpu.memory_space<vmem>>, vector<8x128xf32>
    tpu.vector_store %arg8[%c0_67, %c0_68], %52 {strides = array<i32>} : memref<8x128xf32, #tpu.memory_space<vmem>>, vector<8x128xf32>,
    %c0_69 = arith.constant 0 : index
    %c0_70 = arith.constant 0 : index
    %54 = vector.load %arg7[%c0_69, %c0_70] : memref<8x128xf32, #tpu.memory_space<vmem>>, vector<8x128xf32>
    %c0_71 = arith.constant 0 : index
    %c256_72 = arith.constant 256 : index
    %55 = vector.load %arg2[%c0_71, %c256_72] : memref<8x2048xf32, #tpu.memory_space<vmem>>, vector<8x128xf32>
    %56 = math.absf %55 : vector<8x128xf32>
    %57 = arith.addf %54, %56 : vector<8x128xf32>
    %c0_73 = arith.constant 0 : index
    %c0_74 = arith.constant 0 : index
    %58 = vector.load %arg7[%c0_73, %c0_74] : memref<8x128xf32, #tpu.memory_space<vmem>>, vector<8x128xf32>
    tpu.vector_store %arg7[%c0_73, %c0_74], %57 {strides = array<i32>} : memref<8x128xf32, #tpu.memory_space<vmem>>, vector<8x128xf32>,
    %c0_75 = arith.constant 0 : index
    %c0_76 = arith.constant 0 : index
    %59 = vector.load %arg9[%c0_75, %c0_76] : memref<8x128xf32, #tpu.memory_space<vmem>>, vector<8x128xf32>
    %c0_77 = arith.constant 0 : index
    %c256_78 = arith.constant 256 : index
    %60 = vector.load %arg4[%c0_77, %c256_78] : memref<8x2048xf32, #tpu.memory_space<vmem>>, vector<8x128xf32>
    %61 = math.absf %60 : vector<8x128xf32>
    %62 = arith.addf %59, %61 : vector<8x128xf32>
    %c0_79 = arith.constant 0 : index
    %c0_80 = arith.constant 0 : index
    %63 = vector.load %arg9[%c0_79, %c0_80] : memref<8x128xf32, #tpu.memory_space<vmem>>, vector<8x128xf32>
    tpu.vector_store %arg9[%c0_79, %c0_80], %62 {strides = array<i32>} : memref<8x128xf32, #tpu.memory_space<vmem>>, vector<8x128xf32>,
    %c0_81 = arith.constant 0 : index
    %c256_82 = arith.constant 256 : index
    %64 = vector.load %arg2[%c0_81, %c256_82] : memref<8x2048xf32, #tpu.memory_space<vmem>>, vector<8x384xf32>
    %c0_83 = arith.constant 0 : index
    %c0_84 = arith.constant 0 : index
    %65 = vector.load %arg1[%c0_83, %c0_84] : memref<384x128xf32, #tpu.memory_space<vmem>>, vector<384x128xf32>
    %cst_85 = arith.constant dense<0.000000e+00> : vector<8x128xf32>
    %66 = tpu.matmul %64, %65, %cst_85 {dimension_numbers = #tpu.dot_dimension_numbers<[1], [0], [0], [1], [0, 0, 1, 1], [], []>} : vector<8x384xf32>, vector<384x128xf32>, vector<8x128xf32> -> vector<8x128xf32>
    %c0_86 = arith.constant 0 : index
    %c384 = arith.constant 384 : index
    %67 = vector.load %arg5[%c0_86, %c384] : memref<8x2048xf32, #tpu.memory_space<vmem>>, vector<8x128xf32>
    tpu.vector_store %arg5[%c0_86, %c384], %66 {strides = array<i32>} : memref<8x2048xf32, #tpu.memory_space<vmem>>, vector<8x128xf32>,
    %c0_87 = arith.constant 0 : index
    %c0_88 = arith.constant 0 : index
    %68 = vector.load %arg8[%c0_87, %c0_88] : memref<8x128xf32, #tpu.memory_space<vmem>>, vector<8x128xf32>
    %69 = math.absf %66 : vector<8x128xf32>
    %70 = arith.addf %68, %69 : vector<8x128xf32>
    %c0_89 = arith.constant 0 : index
    %c0_90 = arith.constant 0 : index
    %71 = vector.load %arg8[%c0_89, %c0_90] : memref<8x128xf32, #tpu.memory_space<vmem>>, vector<8x128xf32>
    tpu.vector_store %arg8[%c0_89, %c0_90], %70 {strides = array<i32>} : memref<8x128xf32, #tpu.memory_space<vmem>>, vector<8x128xf32>,
    %c0_91 = arith.constant 0 : index
    %c0_92 = arith.constant 0 : index
    %72 = vector.load %arg7[%c0_91, %c0_92] : memref<8x128xf32, #tpu.memory_space<vmem>>, vector<8x128xf32>
    %c0_93 = arith.constant 0 : index
    %c384_94 = arith.constant 384 : index
    %73 = vector.load %arg2[%c0_93, %c384_94] : memref<8x2048xf32, #tpu.memory_space<vmem>>, vector<8x128xf32>
    %74 = math.absf %73 : vector<8x128xf32>
    %75 = arith.addf %72, %74 : vector<8x128xf32>
    %c0_95 = arith.constant 0 : index
    %c0_96 = arith.constant 0 : index
    %76 = vector.load %arg7[%c0_95, %c0_96] : memref<8x128xf32, #tpu.memory_space<vmem>>, vector<8x128xf32>
    tpu.vector_store %arg7[%c0_95, %c0_96], %75 {strides = array<i32>} : memref<8x128xf32, #tpu.memory_space<vmem>>, vector<8x128xf32>,
    %c0_97 = arith.constant 0 : index
    %c0_98 = arith.constant 0 : index
    %77 = vector.load %arg9[%c0_97, %c0_98] : memref<8x128xf32, #tpu.memory_space<vmem>>, vector<8x128xf32>
    %c0_99 = arith.constant 0 : index
    %c384_100 = arith.constant 384 : index
    %78 = vector.load %arg4[%c0_99, %c384_100] : memref<8x2048xf32, #tpu.memory_space<vmem>>, vector<8x128xf32>
    %79 = math.absf %78 : vector<8x128xf32>
    %80 = arith.addf %77, %79 : vector<8x128xf32>
    %c0_101 = arith.constant 0 : index
    %c0_102 = arith.constant 0 : index
    %81 = vector.load %arg9[%c0_101, %c0_102] : memref<8x128xf32, #tpu.memory_space<vmem>>, vector<8x128xf32>
    tpu.vector_store %arg9[%c0_101, %c0_102], %80 {strides = array<i32>} : memref<8x128xf32, #tpu.memory_space<vmem>>, vector<8x128xf32>,
    %c0_103 = arith.constant 0 : index
    %c384_104 = arith.constant 384 : index
    %82 = vector.load %arg2[%c0_103, %c384_104] : memref<8x2048xf32, #tpu.memory_space<vmem>>, vector<8x384xf32>
    %c0_105 = arith.constant 0 : index
    %c0_106 = arith.constant 0 : index
    %83 = vector.load %arg1[%c0_105, %c0_106] : memref<384x128xf32, #tpu.memory_space<vmem>>, vector<384x128xf32>
    %cst_107 = arith.constant dense<0.000000e+00> : vector<8x128xf32>
    %84 = tpu.matmul %82, %83, %cst_107 {dimension_numbers = #tpu.dot_dimension_numbers<[1], [0], [0], [1], [0, 0, 1, 1], [], []>} : vector<8x384xf32>, vector<384x128xf32>, vector<8x128xf32> -> vector<8x128xf32>
    %c0_108 = arith.constant 0 : index
    %c512 = arith.constant 512 : index
    %85 = vector.load %arg5[%c0_108, %c512] : memref<8x2048xf32, #tpu.memory_space<vmem>>, vector<8x128xf32>
    tpu.vector_store %arg5[%c0_108, %c512], %84 {strides = array<i32>} : memref<8x2048xf32, #tpu.memory_space<vmem>>, vector<8x128xf32>,
    %c0_109 = arith.constant 0 : index
    %c0_110 = arith.constant 0 : index
    %86 = vector.load %arg8[%c0_109, %c0_110] : memref<8x128xf32, #tpu.memory_space<vmem>>, vector<8x128xf32>
    %87 = math.absf %84 : vector<8x128xf32>
    %88 = arith.addf %86, %87 : vector<8x128xf32>
    %c0_111 = arith.constant 0 : index
    %c0_112 = arith.constant 0 : index
    %89 = vector.load %arg8[%c0_111, %c0_112] : memref<8x128xf32, #tpu.memory_space<vmem>>, vector<8x128xf32>
    tpu.vector_store %arg8[%c0_111, %c0_112], %88 {strides = array<i32>} : memref<8x128xf32, #tpu.memory_space<vmem>>, vector<8x128xf32>,
    %c0_113 = arith.constant 0 : index
    %c0_114 = arith.constant 0 : index
    %90 = vector.load %arg7[%c0_113, %c0_114] : memref<8x128xf32, #tpu.memory_space<vmem>>, vector<8x128xf32>
    %c0_115 = arith.constant 0 : index
    %c512_116 = arith.constant 512 : index
    %91 = vector.load %arg2[%c0_115, %c512_116] : memref<8x2048xf32, #tpu.memory_space<vmem>>, vector<8x128xf32>
    %92 = math.absf %91 : vector<8x128xf32>
    %93 = arith.addf %90, %92 : vector<8x128xf32>
    %c0_117 = arith.constant 0 : index
    %c0_118 = arith.constant 0 : index
    %94 = vector.load %arg7[%c0_117, %c0_118] : memref<8x128xf32, #tpu.memory_space<vmem>>, vector<8x128xf32>
    tpu.vector_store %arg7[%c0_117, %c0_118], %93 {strides = array<i32>} : memref<8x128xf32, #tpu.memory_space<vmem>>, vector<8x128xf32>,
    %c0_119 = arith.constant 0 : index
    %c0_120 = arith.constant 0 : index
    %95 = vector.load %arg9[%c0_119, %c0_120] : memref<8x128xf32, #tpu.memory_space<vmem>>, vector<8x128xf32>
    %c0_121 = arith.constant 0 : index
    %c512_122 = arith.constant 512 : index
    %96 = vector.load %arg4[%c0_121, %c512_122] : memref<8x2048xf32, #tpu.memory_space<vmem>>, vector<8x128xf32>
    %97 = math.absf %96 : vector<8x128xf32>
    %98 = arith.addf %95, %97 : vector<8x128xf32>
    %c0_123 = arith.constant 0 : index
    %c0_124 = arith.constant 0 : index
    %99 = vector.load %arg9[%c0_123, %c0_124] : memref<8x128xf32, #tpu.memory_space<vmem>>, vector<8x128xf32>
    tpu.vector_store %arg9[%c0_123, %c0_124], %98 {strides = array<i32>} : memref<8x128xf32, #tpu.memory_space<vmem>>, vector<8x128xf32>,
    %c0_125 = arith.constant 0 : index
    %c512_126 = arith.constant 512 : index
    %100 = vector.load %arg2[%c0_125, %c512_126] : memref<8x2048xf32, #tpu.memory_space<vmem>>, vector<8x384xf32>
    %c0_127 = arith.constant 0 : index
    %c0_128 = arith.constant 0 : index
    %101 = vector.load %arg1[%c0_127, %c0_128] : memref<384x128xf32, #tpu.memory_space<vmem>>, vector<384x128xf32>
    %cst_129 = arith.constant dense<0.000000e+00> : vector<8x128xf32>
    %102 = tpu.matmul %100, %101, %cst_129 {dimension_numbers = #tpu.dot_dimension_numbers<[1], [0], [0], [1], [0, 0, 1, 1], [], []>} : vector<8x384xf32>, vector<384x128xf32>, vector<8x128xf32> -> vector<8x128xf32>
    %c0_130 = arith.constant 0 : index
    %c640 = arith.constant 640 : index
    %103 = vector.load %arg5[%c0_130, %c640] : memref<8x2048xf32, #tpu.memory_space<vmem>>, vector<8x128xf32>
    tpu.vector_store %arg5[%c0_130, %c640], %102 {strides = array<i32>} : memref<8x2048xf32, #tpu.memory_space<vmem>>, vector<8x128xf32>,
    %c0_131 = arith.constant 0 : index
    %c0_132 = arith.constant 0 : index
    %104 = vector.load %arg8[%c0_131, %c0_132] : memref<8x128xf32, #tpu.memory_space<vmem>>, vector<8x128xf32>
    %105 = math.absf %102 : vector<8x128xf32>
    %106 = arith.addf %104, %105 : vector<8x128xf32>
    %c0_133 = arith.constant 0 : index
    %c0_134 = arith.constant 0 : index
    %107 = vector.load %arg8[%c0_133, %c0_134] : memref<8x128xf32, #tpu.memory_space<vmem>>, vector<8x128xf32>
    tpu.vector_store %arg8[%c0_133, %c0_134], %106 {strides = array<i32>} : memref<8x128xf32, #tpu.memory_space<vmem>>, vector<8x128xf32>,
    %c0_135 = arith.constant 0 : index
    %c0_136 = arith.constant 0 : index
    %108 = vector.load %arg7[%c0_135, %c0_136] : memref<8x128xf32, #tpu.memory_space<vmem>>, vector<8x128xf32>
    %c0_137 = arith.constant 0 : index
    %c640_138 = arith.constant 640 : index
    %109 = vector.load %arg2[%c0_137, %c640_138] : memref<8x2048xf32, #tpu.memory_space<vmem>>, vector<8x128xf32>
    %110 = math.absf %109 : vector<8x128xf32>
    %111 = arith.addf %108, %110 : vector<8x128xf32>
    %c0_139 = arith.constant 0 : index
    %c0_140 = arith.constant 0 : index
    %112 = vector.load %arg7[%c0_139, %c0_140] : memref<8x128xf32, #tpu.memory_space<vmem>>, vector<8x128xf32>
    tpu.vector_store %arg7[%c0_139, %c0_140], %111 {strides = array<i32>} : memref<8x128xf32, #tpu.memory_space<vmem>>, vector<8x128xf32>,
    %c0_141 = arith.constant 0 : index
    %c0_142 = arith.constant 0 : index
    %113 = vector.load %arg9[%c0_141, %c0_142] : memref<8x128xf32, #tpu.memory_space<vmem>>, vector<8x128xf32>
    %c0_143 = arith.constant 0 : index
    %c640_144 = arith.constant 640 : index
    %114 = vector.load %arg4[%c0_143, %c640_144] : memref<8x2048xf32, #tpu.memory_space<vmem>>, vector<8x128xf32>
    %115 = math.absf %114 : vector<8x128xf32>
    %116 = arith.addf %113, %115 : vector<8x128xf32>
    %c0_145 = arith.constant 0 : index
    %c0_146 = arith.constant 0 : index
    %117 = vector.load %arg9[%c0_145, %c0_146] : memref<8x128xf32, #tpu.memory_space<vmem>>, vector<8x128xf32>
    tpu.vector_store %arg9[%c0_145, %c0_146], %116 {strides = array<i32>} : memref<8x128xf32, #tpu.memory_space<vmem>>, vector<8x128xf32>,
    %c0_147 = arith.constant 0 : index
    %c640_148 = arith.constant 640 : index
    %118 = vector.load %arg2[%c0_147, %c640_148] : memref<8x2048xf32, #tpu.memory_space<vmem>>, vector<8x384xf32>
    %c0_149 = arith.constant 0 : index
    %c0_150 = arith.constant 0 : index
    %119 = vector.load %arg1[%c0_149, %c0_150] : memref<384x128xf32, #tpu.memory_space<vmem>>, vector<384x128xf32>
    %cst_151 = arith.constant dense<0.000000e+00> : vector<8x128xf32>
    %120 = tpu.matmul %118, %119, %cst_151 {dimension_numbers = #tpu.dot_dimension_numbers<[1], [0], [0], [1], [0, 0, 1, 1], [], []>} : vector<8x384xf32>, vector<384x128xf32>, vector<8x128xf32> -> vector<8x128xf32>
    %c0_152 = arith.constant 0 : index
    %c768 = arith.constant 768 : index
    %121 = vector.load %arg5[%c0_152, %c768] : memref<8x2048xf32, #tpu.memory_space<vmem>>, vector<8x128xf32>
    tpu.vector_store %arg5[%c0_152, %c768], %120 {strides = array<i32>} : memref<8x2048xf32, #tpu.memory_space<vmem>>, vector<8x128xf32>,
    %c0_153 = arith.constant 0 : index
    %c0_154 = arith.constant 0 : index
    %122 = vector.load %arg8[%c0_153, %c0_154] : memref<8x128xf32, #tpu.memory_space<vmem>>, vector<8x128xf32>
    %123 = math.absf %120 : vector<8x128xf32>
    %124 = arith.addf %122, %123 : vector<8x128xf32>
    %c0_155 = arith.constant 0 : index
    %c0_156 = arith.constant 0 : index
    %125 = vector.load %arg8[%c0_155, %c0_156] : memref<8x128xf32, #tpu.memory_space<vmem>>, vector<8x128xf32>
    tpu.vector_store %arg8[%c0_155, %c0_156], %124 {strides = array<i32>} : memref<8x128xf32, #tpu.memory_space<vmem>>, vector<8x128xf32>,
    %c0_157 = arith.constant 0 : index
    %c0_158 = arith.constant 0 : index
    %126 = vector.load %arg7[%c0_157, %c0_158] : memref<8x128xf32, #tpu.memory_space<vmem>>, vector<8x128xf32>
    %c0_159 = arith.constant 0 : index
    %c768_160 = arith.constant 768 : index
    %127 = vector.load %arg2[%c0_159, %c768_160] : memref<8x2048xf32, #tpu.memory_space<vmem>>, vector<8x128xf32>
    %128 = math.absf %127 : vector<8x128xf32>
    %129 = arith.addf %126, %128 : vector<8x128xf32>
    %c0_161 = arith.constant 0 : index
    %c0_162 = arith.constant 0 : index
    %130 = vector.load %arg7[%c0_161, %c0_162] : memref<8x128xf32, #tpu.memory_space<vmem>>, vector<8x128xf32>
    tpu.vector_store %arg7[%c0_161, %c0_162], %129 {strides = array<i32>} : memref<8x128xf32, #tpu.memory_space<vmem>>, vector<8x128xf32>,
    %c0_163 = arith.constant 0 : index
    %c0_164 = arith.constant 0 : index
    %131 = vector.load %arg9[%c0_163, %c0_164] : memref<8x128xf32, #tpu.memory_space<vmem>>, vector<8x128xf32>
    %c0_165 = arith.constant 0 : index
    %c768_166 = arith.constant 768 : index
    %132 = vector.load %arg4[%c0_165, %c768_166] : memref<8x2048xf32, #tpu.memory_space<vmem>>, vector<8x128xf32>
    %133 = math.absf %132 : vector<8x128xf32>
    %134 = arith.addf %131, %133 : vector<8x128xf32>
    %c0_167 = arith.constant 0 : index
    %c0_168 = arith.constant 0 : index
    %135 = vector.load %arg9[%c0_167, %c0_168] : memref<8x128xf32, #tpu.memory_space<vmem>>, vector<8x128xf32>
    tpu.vector_store %arg9[%c0_167, %c0_168], %134 {strides = array<i32>} : memref<8x128xf32, #tpu.memory_space<vmem>>, vector<8x128xf32>,
    %c0_169 = arith.constant 0 : index
    %c768_170 = arith.constant 768 : index
    %136 = vector.load %arg2[%c0_169, %c768_170] : memref<8x2048xf32, #tpu.memory_space<vmem>>, vector<8x384xf32>
    %c0_171 = arith.constant 0 : index
    %c0_172 = arith.constant 0 : index
    %137 = vector.load %arg1[%c0_171, %c0_172] : memref<384x128xf32, #tpu.memory_space<vmem>>, vector<384x128xf32>
    %cst_173 = arith.constant dense<0.000000e+00> : vector<8x128xf32>
    %138 = tpu.matmul %136, %137, %cst_173 {dimension_numbers = #tpu.dot_dimension_numbers<[1], [0], [0], [1], [0, 0, 1, 1], [], []>} : vector<8x384xf32>, vector<384x128xf32>, vector<8x128xf32> -> vector<8x128xf32>
    %c0_174 = arith.constant 0 : index
    %c896 = arith.constant 896 : index
    %139 = vector.load %arg5[%c0_174, %c896] : memref<8x2048xf32, #tpu.memory_space<vmem>>, vector<8x128xf32>
    tpu.vector_store %arg5[%c0_174, %c896], %138 {strides = array<i32>} : memref<8x2048xf32, #tpu.memory_space<vmem>>, vector<8x128xf32>,
    %c0_175 = arith.constant 0 : index
    %c0_176 = arith.constant 0 : index
    %140 = vector.load %arg8[%c0_175, %c0_176] : memref<8x128xf32, #tpu.memory_space<vmem>>, vector<8x128xf32>
    %141 = math.absf %138 : vector<8x128xf32>
    %142 = arith.addf %140, %141 : vector<8x128xf32>
    %c0_177 = arith.constant 0 : index
    %c0_178 = arith.constant 0 : index
    %143 = vector.load %arg8[%c0_177, %c0_178] : memref<8x128xf32, #tpu.memory_space<vmem>>, vector<8x128xf32>
    tpu.vector_store %arg8[%c0_177, %c0_178], %142 {strides = array<i32>} : memref<8x128xf32, #tpu.memory_space<vmem>>, vector<8x128xf32>,
    %c0_179 = arith.constant 0 : index
    %c0_180 = arith.constant 0 : index
    %144 = vector.load %arg7[%c0_179, %c0_180] : memref<8x128xf32, #tpu.memory_space<vmem>>, vector<8x128xf32>
    %c0_181 = arith.constant 0 : index
    %c896_182 = arith.constant 896 : index
    %145 = vector.load %arg2[%c0_181, %c896_182] : memref<8x2048xf32, #tpu.memory_space<vmem>>, vector<8x128xf32>
    %146 = math.absf %145 : vector<8x128xf32>
    %147 = arith.addf %144, %146 : vector<8x128xf32>
    %c0_183 = arith.constant 0 : index
    %c0_184 = arith.constant 0 : index
    %148 = vector.load %arg7[%c0_183, %c0_184] : memref<8x128xf32, #tpu.memory_space<vmem>>, vector<8x128xf32>
    tpu.vector_store %arg7[%c0_183, %c0_184], %147 {strides = array<i32>} : memref<8x128xf32, #tpu.memory_space<vmem>>, vector<8x128xf32>,
    %c0_185 = arith.constant 0 : index
    %c0_186 = arith.constant 0 : index
    %149 = vector.load %arg9[%c0_185, %c0_186] : memref<8x128xf32, #tpu.memory_space<vmem>>, vector<8x128xf32>
    %c0_187 = arith.constant 0 : index
    %c896_188 = arith.constant 896 : index
    %150 = vector.load %arg4[%c0_187, %c896_188] : memref<8x2048xf32, #tpu.memory_space<vmem>>, vector<8x128xf32>
    %151 = math.absf %150 : vector<8x128xf32>
    %152 = arith.addf %149, %151 : vector<8x128xf32>
    %c0_189 = arith.constant 0 : index
    %c0_190 = arith.constant 0 : index
    %153 = vector.load %arg9[%c0_189, %c0_190] : memref<8x128xf32, #tpu.memory_space<vmem>>, vector<8x128xf32>
    tpu.vector_store %arg9[%c0_189, %c0_190], %152 {strides = array<i32>} : memref<8x128xf32, #tpu.memory_space<vmem>>, vector<8x128xf32>,
    %c0_191 = arith.constant 0 : index
    %c896_192 = arith.constant 896 : index
    %154 = vector.load %arg2[%c0_191, %c896_192] : memref<8x2048xf32, #tpu.memory_space<vmem>>, vector<8x384xf32>
    %c0_193 = arith.constant 0 : index
    %c0_194 = arith.constant 0 : index
    %155 = vector.load %arg1[%c0_193, %c0_194] : memref<384x128xf32, #tpu.memory_space<vmem>>, vector<384x128xf32>
    %cst_195 = arith.constant dense<0.000000e+00> : vector<8x128xf32>
    %156 = tpu.matmul %154, %155, %cst_195 {dimension_numbers = #tpu.dot_dimension_numbers<[1], [0], [0], [1], [0, 0, 1, 1], [], []>} : vector<8x384xf32>, vector<384x128xf32>, vector<8x128xf32> -> vector<8x128xf32>
    %c0_196 = arith.constant 0 : index
    %c1024 = arith.constant 1024 : index
    %157 = vector.load %arg5[%c0_196, %c1024] : memref<8x2048xf32, #tpu.memory_space<vmem>>, vector<8x128xf32>
    tpu.vector_store %arg5[%c0_196, %c1024], %156 {strides = array<i32>} : memref<8x2048xf32, #tpu.memory_space<vmem>>, vector<8x128xf32>,
    %c0_197 = arith.constant 0 : index
    %c0_198 = arith.constant 0 : index
    %158 = vector.load %arg8[%c0_197, %c0_198] : memref<8x128xf32, #tpu.memory_space<vmem>>, vector<8x128xf32>
    %159 = math.absf %156 : vector<8x128xf32>
    %160 = arith.addf %158, %159 : vector<8x128xf32>
    %c0_199 = arith.constant 0 : index
    %c0_200 = arith.constant 0 : index
    %161 = vector.load %arg8[%c0_199, %c0_200] : memref<8x128xf32, #tpu.memory_space<vmem>>, vector<8x128xf32>
    tpu.vector_store %arg8[%c0_199, %c0_200], %160 {strides = array<i32>} : memref<8x128xf32, #tpu.memory_space<vmem>>, vector<8x128xf32>,
    %c0_201 = arith.constant 0 : index
    %c0_202 = arith.constant 0 : index
    %162 = vector.load %arg7[%c0_201, %c0_202] : memref<8x128xf32, #tpu.memory_space<vmem>>, vector<8x128xf32>
    %c0_203 = arith.constant 0 : index
    %c1024_204 = arith.constant 1024 : index
    %163 = vector.load %arg2[%c0_203, %c1024_204] : memref<8x2048xf32, #tpu.memory_space<vmem>>, vector<8x128xf32>
    %164 = math.absf %163 : vector<8x128xf32>
    %165 = arith.addf %162, %164 : vector<8x128xf32>
    %c0_205 = arith.constant 0 : index
    %c0_206 = arith.constant 0 : index
    %166 = vector.load %arg7[%c0_205, %c0_206] : memref<8x128xf32, #tpu.memory_space<vmem>>, vector<8x128xf32>
    tpu.vector_store %arg7[%c0_205, %c0_206], %165 {strides = array<i32>} : memref<8x128xf32, #tpu.memory_space<vmem>>, vector<8x128xf32>,
    %c0_207 = arith.constant 0 : index
    %c0_208 = arith.constant 0 : index
    %167 = vector.load %arg9[%c0_207, %c0_208] : memref<8x128xf32, #tpu.memory_space<vmem>>, vector<8x128xf32>
    %c0_209 = arith.constant 0 : index
    %c1024_210 = arith.constant 1024 : index
    %168 = vector.load %arg4[%c0_209, %c1024_210] : memref<8x2048xf32, #tpu.memory_space<vmem>>, vector<8x128xf32>
    %169 = math.absf %168 : vector<8x128xf32>
    %170 = arith.addf %167, %169 : vector<8x128xf32>
    %c0_211 = arith.constant 0 : index
    %c0_212 = arith.constant 0 : index
    %171 = vector.load %arg9[%c0_211, %c0_212] : memref<8x128xf32, #tpu.memory_space<vmem>>, vector<8x128xf32>
    tpu.vector_store %arg9[%c0_211, %c0_212], %170 {strides = array<i32>} : memref<8x128xf32, #tpu.memory_space<vmem>>, vector<8x128xf32>,
    %c0_213 = arith.constant 0 : index
    %c1024_214 = arith.constant 1024 : index
    %172 = vector.load %arg2[%c0_213, %c1024_214] : memref<8x2048xf32, #tpu.memory_space<vmem>>, vector<8x384xf32>
    %c0_215 = arith.constant 0 : index
    %c0_216 = arith.constant 0 : index
    %173 = vector.load %arg1[%c0_215, %c0_216] : memref<384x128xf32, #tpu.memory_space<vmem>>, vector<384x128xf32>
    %cst_217 = arith.constant dense<0.000000e+00> : vector<8x128xf32>
    %174 = tpu.matmul %172, %173, %cst_217 {dimension_numbers = #tpu.dot_dimension_numbers<[1], [0], [0], [1], [0, 0, 1, 1], [], []>} : vector<8x384xf32>, vector<384x128xf32>, vector<8x128xf32> -> vector<8x128xf32>
    %c0_218 = arith.constant 0 : index
    %c1152 = arith.constant 1152 : index
    %175 = vector.load %arg5[%c0_218, %c1152] : memref<8x2048xf32, #tpu.memory_space<vmem>>, vector<8x128xf32>
    tpu.vector_store %arg5[%c0_218, %c1152], %174 {strides = array<i32>} : memref<8x2048xf32, #tpu.memory_space<vmem>>, vector<8x128xf32>,
    %c0_219 = arith.constant 0 : index
    %c0_220 = arith.constant 0 : index
    %176 = vector.load %arg8[%c0_219, %c0_220] : memref<8x128xf32, #tpu.memory_space<vmem>>, vector<8x128xf32>
    %177 = math.absf %174 : vector<8x128xf32>
    %178 = arith.addf %176, %177 : vector<8x128xf32>
    %c0_221 = arith.constant 0 : index
    %c0_222 = arith.constant 0 : index
    %179 = vector.load %arg8[%c0_221, %c0_222] : memref<8x128xf32, #tpu.memory_space<vmem>>, vector<8x128xf32>
    tpu.vector_store %arg8[%c0_221, %c0_222], %178 {strides = array<i32>} : memref<8x128xf32, #tpu.memory_space<vmem>>, vector<8x128xf32>,
    %c0_223 = arith.constant 0 : index
    %c0_224 = arith.constant 0 : index
    %180 = vector.load %arg7[%c0_223, %c0_224] : memref<8x128xf32, #tpu.memory_space<vmem>>, vector<8x128xf32>
    %c0_225 = arith.constant 0 : index
    %c1152_226 = arith.constant 1152 : index
    %181 = vector.load %arg2[%c0_225, %c1152_226] : memref<8x2048xf32, #tpu.memory_space<vmem>>, vector<8x128xf32>
    %182 = math.absf %181 : vector<8x128xf32>
    %183 = arith.addf %180, %182 : vector<8x128xf32>
    %c0_227 = arith.constant 0 : index
    %c0_228 = arith.constant 0 : index
    %184 = vector.load %arg7[%c0_227, %c0_228] : memref<8x128xf32, #tpu.memory_space<vmem>>, vector<8x128xf32>
    tpu.vector_store %arg7[%c0_227, %c0_228], %183 {strides = array<i32>} : memref<8x128xf32, #tpu.memory_space<vmem>>, vector<8x128xf32>,
    %c0_229 = arith.constant 0 : index
    %c0_230 = arith.constant 0 : index
    %185 = vector.load %arg9[%c0_229, %c0_230] : memref<8x128xf32, #tpu.memory_space<vmem>>, vector<8x128xf32>
    %c0_231 = arith.constant 0 : index
    %c1152_232 = arith.constant 1152 : index
    %186 = vector.load %arg4[%c0_231, %c1152_232] : memref<8x2048xf32, #tpu.memory_space<vmem>>, vector<8x128xf32>
    %187 = math.absf %186 : vector<8x128xf32>
    %188 = arith.addf %185, %187 : vector<8x128xf32>
    %c0_233 = arith.constant 0 : index
    %c0_234 = arith.constant 0 : index
    %189 = vector.load %arg9[%c0_233, %c0_234] : memref<8x128xf32, #tpu.memory_space<vmem>>, vector<8x128xf32>
    tpu.vector_store %arg9[%c0_233, %c0_234], %188 {strides = array<i32>} : memref<8x128xf32, #tpu.memory_space<vmem>>, vector<8x128xf32>,
    %c0_235 = arith.constant 0 : index
    %c1152_236 = arith.constant 1152 : index
    %190 = vector.load %arg2[%c0_235, %c1152_236] : memref<8x2048xf32, #tpu.memory_space<vmem>>, vector<8x384xf32>
    %c0_237 = arith.constant 0 : index
    %c0_238 = arith.constant 0 : index
    %191 = vector.load %arg1[%c0_237, %c0_238] : memref<384x128xf32, #tpu.memory_space<vmem>>, vector<384x128xf32>
    %cst_239 = arith.constant dense<0.000000e+00> : vector<8x128xf32>
    %192 = tpu.matmul %190, %191, %cst_239 {dimension_numbers = #tpu.dot_dimension_numbers<[1], [0], [0], [1], [0, 0, 1, 1], [], []>} : vector<8x384xf32>, vector<384x128xf32>, vector<8x128xf32> -> vector<8x128xf32>
    %c0_240 = arith.constant 0 : index
    %c1280 = arith.constant 1280 : index
    %193 = vector.load %arg5[%c0_240, %c1280] : memref<8x2048xf32, #tpu.memory_space<vmem>>, vector<8x128xf32>
    tpu.vector_store %arg5[%c0_240, %c1280], %192 {strides = array<i32>} : memref<8x2048xf32, #tpu.memory_space<vmem>>, vector<8x128xf32>,
    %c0_241 = arith.constant 0 : index
    %c0_242 = arith.constant 0 : index
    %194 = vector.load %arg8[%c0_241, %c0_242] : memref<8x128xf32, #tpu.memory_space<vmem>>, vector<8x128xf32>
    %195 = math.absf %192 : vector<8x128xf32>
    %196 = arith.addf %194, %195 : vector<8x128xf32>
    %c0_243 = arith.constant 0 : index
    %c0_244 = arith.constant 0 : index
    %197 = vector.load %arg8[%c0_243, %c0_244] : memref<8x128xf32, #tpu.memory_space<vmem>>, vector<8x128xf32>
    tpu.vector_store %arg8[%c0_243, %c0_244], %196 {strides = array<i32>} : memref<8x128xf32, #tpu.memory_space<vmem>>, vector<8x128xf32>,
    %c0_245 = arith.constant 0 : index
    %c0_246 = arith.constant 0 : index
    %198 = vector.load %arg7[%c0_245, %c0_246] : memref<8x128xf32, #tpu.memory_space<vmem>>, vector<8x128xf32>
    %c0_247 = arith.constant 0 : index
    %c1280_248 = arith.constant 1280 : index
    %199 = vector.load %arg2[%c0_247, %c1280_248] : memref<8x2048xf32, #tpu.memory_space<vmem>>, vector<8x128xf32>
    %200 = math.absf %199 : vector<8x128xf32>
    %201 = arith.addf %198, %200 : vector<8x128xf32>
    %c0_249 = arith.constant 0 : index
    %c0_250 = arith.constant 0 : index
    %202 = vector.load %arg7[%c0_249, %c0_250] : memref<8x128xf32, #tpu.memory_space<vmem>>, vector<8x128xf32>
    tpu.vector_store %arg7[%c0_249, %c0_250], %201 {strides = array<i32>} : memref<8x128xf32, #tpu.memory_space<vmem>>, vector<8x128xf32>,
    %c0_251 = arith.constant 0 : index
    %c0_252 = arith.constant 0 : index
    %203 = vector.load %arg9[%c0_251, %c0_252] : memref<8x128xf32, #tpu.memory_space<vmem>>, vector<8x128xf32>
    %c0_253 = arith.constant 0 : index
    %c1280_254 = arith.constant 1280 : index
    %204 = vector.load %arg4[%c0_253, %c1280_254] : memref<8x2048xf32, #tpu.memory_space<vmem>>, vector<8x128xf32>
    %205 = math.absf %204 : vector<8x128xf32>
    %206 = arith.addf %203, %205 : vector<8x128xf32>
    %c0_255 = arith.constant 0 : index
    %c0_256 = arith.constant 0 : index
    %207 = vector.load %arg9[%c0_255, %c0_256] : memref<8x128xf32, #tpu.memory_space<vmem>>, vector<8x128xf32>
    tpu.vector_store %arg9[%c0_255, %c0_256], %206 {strides = array<i32>} : memref<8x128xf32, #tpu.memory_space<vmem>>, vector<8x128xf32>,
    %c0_257 = arith.constant 0 : index
    %c1280_258 = arith.constant 1280 : index
    %208 = vector.load %arg2[%c0_257, %c1280_258] : memref<8x2048xf32, #tpu.memory_space<vmem>>, vector<8x384xf32>
    %c0_259 = arith.constant 0 : index
    %c0_260 = arith.constant 0 : index
    %209 = vector.load %arg1[%c0_259, %c0_260] : memref<384x128xf32, #tpu.memory_space<vmem>>, vector<384x128xf32>
    %cst_261 = arith.constant dense<0.000000e+00> : vector<8x128xf32>
    %210 = tpu.matmul %208, %209, %cst_261 {dimension_numbers = #tpu.dot_dimension_numbers<[1], [0], [0], [1], [0, 0, 1, 1], [], []>} : vector<8x384xf32>, vector<384x128xf32>, vector<8x128xf32> -> vector<8x128xf32>
    %c0_262 = arith.constant 0 : index
    %c1408 = arith.constant 1408 : index
    %211 = vector.load %arg5[%c0_262, %c1408] : memref<8x2048xf32, #tpu.memory_space<vmem>>, vector<8x128xf32>
    tpu.vector_store %arg5[%c0_262, %c1408], %210 {strides = array<i32>} : memref<8x2048xf32, #tpu.memory_space<vmem>>, vector<8x128xf32>,
    %c0_263 = arith.constant 0 : index
    %c0_264 = arith.constant 0 : index
    %212 = vector.load %arg8[%c0_263, %c0_264] : memref<8x128xf32, #tpu.memory_space<vmem>>, vector<8x128xf32>
    %213 = math.absf %210 : vector<8x128xf32>
    %214 = arith.addf %212, %213 : vector<8x128xf32>
    %c0_265 = arith.constant 0 : index
    %c0_266 = arith.constant 0 : index
    %215 = vector.load %arg8[%c0_265, %c0_266] : memref<8x128xf32, #tpu.memory_space<vmem>>, vector<8x128xf32>
    tpu.vector_store %arg8[%c0_265, %c0_266], %214 {strides = array<i32>} : memref<8x128xf32, #tpu.memory_space<vmem>>, vector<8x128xf32>,
    %c0_267 = arith.constant 0 : index
    %c0_268 = arith.constant 0 : index
    %216 = vector.load %arg7[%c0_267, %c0_268] : memref<8x128xf32, #tpu.memory_space<vmem>>, vector<8x128xf32>
    %c0_269 = arith.constant 0 : index
    %c1408_270 = arith.constant 1408 : index
    %217 = vector.load %arg2[%c0_269, %c1408_270] : memref<8x2048xf32, #tpu.memory_space<vmem>>, vector<8x128xf32>
    %218 = math.absf %217 : vector<8x128xf32>
    %219 = arith.addf %216, %218 : vector<8x128xf32>
    %c0_271 = arith.constant 0 : index
    %c0_272 = arith.constant 0 : index
    %220 = vector.load %arg7[%c0_271, %c0_272] : memref<8x128xf32, #tpu.memory_space<vmem>>, vector<8x128xf32>
    tpu.vector_store %arg7[%c0_271, %c0_272], %219 {strides = array<i32>} : memref<8x128xf32, #tpu.memory_space<vmem>>, vector<8x128xf32>,
    %c0_273 = arith.constant 0 : index
    %c0_274 = arith.constant 0 : index
    %221 = vector.load %arg9[%c0_273, %c0_274] : memref<8x128xf32, #tpu.memory_space<vmem>>, vector<8x128xf32>
    %c0_275 = arith.constant 0 : index
    %c1408_276 = arith.constant 1408 : index
    %222 = vector.load %arg4[%c0_275, %c1408_276] : memref<8x2048xf32, #tpu.memory_space<vmem>>, vector<8x128xf32>
    %223 = math.absf %222 : vector<8x128xf32>
    %224 = arith.addf %221, %223 : vector<8x128xf32>
    %c0_277 = arith.constant 0 : index
    %c0_278 = arith.constant 0 : index
    %225 = vector.load %arg9[%c0_277, %c0_278] : memref<8x128xf32, #tpu.memory_space<vmem>>, vector<8x128xf32>
    tpu.vector_store %arg9[%c0_277, %c0_278], %224 {strides = array<i32>} : memref<8x128xf32, #tpu.memory_space<vmem>>, vector<8x128xf32>,
    %c0_279 = arith.constant 0 : index
    %c1408_280 = arith.constant 1408 : index
    %226 = vector.load %arg2[%c0_279, %c1408_280] : memref<8x2048xf32, #tpu.memory_space<vmem>>, vector<8x384xf32>
    %c0_281 = arith.constant 0 : index
    %c0_282 = arith.constant 0 : index
    %227 = vector.load %arg1[%c0_281, %c0_282] : memref<384x128xf32, #tpu.memory_space<vmem>>, vector<384x128xf32>
    %cst_283 = arith.constant dense<0.000000e+00> : vector<8x128xf32>
    %228 = tpu.matmul %226, %227, %cst_283 {dimension_numbers = #tpu.dot_dimension_numbers<[1], [0], [0], [1], [0, 0, 1, 1], [], []>} : vector<8x384xf32>, vector<384x128xf32>, vector<8x128xf32> -> vector<8x128xf32>
    %c0_284 = arith.constant 0 : index
    %c1536 = arith.constant 1536 : index
    %229 = vector.load %arg5[%c0_284, %c1536] : memref<8x2048xf32, #tpu.memory_space<vmem>>, vector<8x128xf32>
    tpu.vector_store %arg5[%c0_284, %c1536], %228 {strides = array<i32>} : memref<8x2048xf32, #tpu.memory_space<vmem>>, vector<8x128xf32>,
    %c0_285 = arith.constant 0 : index
    %c0_286 = arith.constant 0 : index
    %230 = vector.load %arg8[%c0_285, %c0_286] : memref<8x128xf32, #tpu.memory_space<vmem>>, vector<8x128xf32>
    %231 = math.absf %228 : vector<8x128xf32>
    %232 = arith.addf %230, %231 : vector<8x128xf32>
    %c0_287 = arith.constant 0 : index
    %c0_288 = arith.constant 0 : index
    %233 = vector.load %arg8[%c0_287, %c0_288] : memref<8x128xf32, #tpu.memory_space<vmem>>, vector<8x128xf32>
    tpu.vector_store %arg8[%c0_287, %c0_288], %232 {strides = array<i32>} : memref<8x128xf32, #tpu.memory_space<vmem>>, vector<8x128xf32>,
    %c0_289 = arith.constant 0 : index
    %c0_290 = arith.constant 0 : index
    %234 = vector.load %arg7[%c0_289, %c0_290] : memref<8x128xf32, #tpu.memory_space<vmem>>, vector<8x128xf32>
    %c0_291 = arith.constant 0 : index
    %c1536_292 = arith.constant 1536 : index
    %235 = vector.load %arg2[%c0_291, %c1536_292] : memref<8x2048xf32, #tpu.memory_space<vmem>>, vector<8x128xf32>
    %236 = math.absf %235 : vector<8x128xf32>
    %237 = arith.addf %234, %236 : vector<8x128xf32>
    %c0_293 = arith.constant 0 : index
    %c0_294 = arith.constant 0 : index
    %238 = vector.load %arg7[%c0_293, %c0_294] : memref<8x128xf32, #tpu.memory_space<vmem>>, vector<8x128xf32>
    tpu.vector_store %arg7[%c0_293, %c0_294], %237 {strides = array<i32>} : memref<8x128xf32, #tpu.memory_space<vmem>>, vector<8x128xf32>,
    %c0_295 = arith.constant 0 : index
    %c0_296 = arith.constant 0 : index
    %239 = vector.load %arg9[%c0_295, %c0_296] : memref<8x128xf32, #tpu.memory_space<vmem>>, vector<8x128xf32>
    %c0_297 = arith.constant 0 : index
    %c1536_298 = arith.constant 1536 : index
    %240 = vector.load %arg4[%c0_297, %c1536_298] : memref<8x2048xf32, #tpu.memory_space<vmem>>, vector<8x128xf32>
    %241 = math.absf %240 : vector<8x128xf32>
    %242 = arith.addf %239, %241 : vector<8x128xf32>
    %c0_299 = arith.constant 0 : index
    %c0_300 = arith.constant 0 : index
    %243 = vector.load %arg9[%c0_299, %c0_300] : memref<8x128xf32, #tpu.memory_space<vmem>>, vector<8x128xf32>
    tpu.vector_store %arg9[%c0_299, %c0_300], %242 {strides = array<i32>} : memref<8x128xf32, #tpu.memory_space<vmem>>, vector<8x128xf32>,
    %c0_301 = arith.constant 0 : index
    %c1536_302 = arith.constant 1536 : index
    %244 = vector.load %arg2[%c0_301, %c1536_302] : memref<8x2048xf32, #tpu.memory_space<vmem>>, vector<8x384xf32>
    %c0_303 = arith.constant 0 : index
    %c0_304 = arith.constant 0 : index
    %245 = vector.load %arg1[%c0_303, %c0_304] : memref<384x128xf32, #tpu.memory_space<vmem>>, vector<384x128xf32>
    %cst_305 = arith.constant dense<0.000000e+00> : vector<8x128xf32>
    %246 = tpu.matmul %244, %245, %cst_305 {dimension_numbers = #tpu.dot_dimension_numbers<[1], [0], [0], [1], [0, 0, 1, 1], [], []>} : vector<8x384xf32>, vector<384x128xf32>, vector<8x128xf32> -> vector<8x128xf32>
    %c0_306 = arith.constant 0 : index
    %c1664 = arith.constant 1664 : index
    %247 = vector.load %arg5[%c0_306, %c1664] : memref<8x2048xf32, #tpu.memory_space<vmem>>, vector<8x128xf32>
    tpu.vector_store %arg5[%c0_306, %c1664], %246 {strides = array<i32>} : memref<8x2048xf32, #tpu.memory_space<vmem>>, vector<8x128xf32>,
    %c0_307 = arith.constant 0 : index
    %c0_308 = arith.constant 0 : index
    %248 = vector.load %arg8[%c0_307, %c0_308] : memref<8x128xf32, #tpu.memory_space<vmem>>, vector<8x128xf32>
    %249 = math.absf %246 : vector<8x128xf32>
    %250 = arith.addf %248, %249 : vector<8x128xf32>
    %c0_309 = arith.constant 0 : index
    %c0_310 = arith.constant 0 : index
    %251 = vector.load %arg8[%c0_309, %c0_310] : memref<8x128xf32, #tpu.memory_space<vmem>>, vector<8x128xf32>
    tpu.vector_store %arg8[%c0_309, %c0_310], %250 {strides = array<i32>} : memref<8x128xf32, #tpu.memory_space<vmem>>, vector<8x128xf32>,
    %c0_311 = arith.constant 0 : index
    %c0_312 = arith.constant 0 : index
    %252 = vector.load %arg7[%c0_311, %c0_312] : memref<8x128xf32, #tpu.memory_space<vmem>>, vector<8x128xf32>
    %c0_313 = arith.constant 0 : index
    %c1664_314 = arith.constant 1664 : index
    %253 = vector.load %arg2[%c0_313, %c1664_314] : memref<8x2048xf32, #tpu.memory_space<vmem>>, vector<8x128xf32>
    %254 = math.absf %253 : vector<8x128xf32>
    %255 = arith.addf %252, %254 : vector<8x128xf32>
    %c0_315 = arith.constant 0 : index
    %c0_316 = arith.constant 0 : index
    %256 = vector.load %arg7[%c0_315, %c0_316] : memref<8x128xf32, #tpu.memory_space<vmem>>, vector<8x128xf32>
    tpu.vector_store %arg7[%c0_315, %c0_316], %255 {strides = array<i32>} : memref<8x128xf32, #tpu.memory_space<vmem>>, vector<8x128xf32>,
    %c0_317 = arith.constant 0 : index
    %c0_318 = arith.constant 0 : index
    %257 = vector.load %arg9[%c0_317, %c0_318] : memref<8x128xf32, #tpu.memory_space<vmem>>, vector<8x128xf32>
    %c0_319 = arith.constant 0 : index
    %c1664_320 = arith.constant 1664 : index
    %258 = vector.load %arg4[%c0_319, %c1664_320] : memref<8x2048xf32, #tpu.memory_space<vmem>>, vector<8x128xf32>
    %259 = math.absf %258 : vector<8x128xf32>
    %260 = arith.addf %257, %259 : vector<8x128xf32>
    %c0_321 = arith.constant 0 : index
    %c0_322 = arith.constant 0 : index
    %261 = vector.load %arg9[%c0_321, %c0_322] : memref<8x128xf32, #tpu.memory_space<vmem>>, vector<8x128xf32>
    tpu.vector_store %arg9[%c0_321, %c0_322], %260 {strides = array<i32>} : memref<8x128xf32, #tpu.memory_space<vmem>>, vector<8x128xf32>,
    %c0_323 = arith.constant 0 : index
    %c1664_324 = arith.constant 1664 : index
    %262 = vector.load %arg2[%c0_323, %c1664_324] : memref<8x2048xf32, #tpu.memory_space<vmem>>, vector<8x384xf32>
    %c0_325 = arith.constant 0 : index
    %c0_326 = arith.constant 0 : index
    %263 = vector.load %arg1[%c0_325, %c0_326] : memref<384x128xf32, #tpu.memory_space<vmem>>, vector<384x128xf32>
    %cst_327 = arith.constant dense<0.000000e+00> : vector<8x128xf32>
    %264 = tpu.matmul %262, %263, %cst_327 {dimension_numbers = #tpu.dot_dimension_numbers<[1], [0], [0], [1], [0, 0, 1, 1], [], []>} : vector<8x384xf32>, vector<384x128xf32>, vector<8x128xf32> -> vector<8x128xf32>
    %c0_328 = arith.constant 0 : index
    %c1792 = arith.constant 1792 : index
    %265 = vector.load %arg5[%c0_328, %c1792] : memref<8x2048xf32, #tpu.memory_space<vmem>>, vector<8x128xf32>
    tpu.vector_store %arg5[%c0_328, %c1792], %264 {strides = array<i32>} : memref<8x2048xf32, #tpu.memory_space<vmem>>, vector<8x128xf32>,
    %c0_329 = arith.constant 0 : index
    %c0_330 = arith.constant 0 : index
    %266 = vector.load %arg8[%c0_329, %c0_330] : memref<8x128xf32, #tpu.memory_space<vmem>>, vector<8x128xf32>
    %267 = math.absf %264 : vector<8x128xf32>
    %268 = arith.addf %266, %267 : vector<8x128xf32>
    %c0_331 = arith.constant 0 : index
    %c0_332 = arith.constant 0 : index
    %269 = vector.load %arg8[%c0_331, %c0_332] : memref<8x128xf32, #tpu.memory_space<vmem>>, vector<8x128xf32>
    tpu.vector_store %arg8[%c0_331, %c0_332], %268 {strides = array<i32>} : memref<8x128xf32, #tpu.memory_space<vmem>>, vector<8x128xf32>,
    %c0_333 = arith.constant 0 : index
    %c0_334 = arith.constant 0 : index
    %270 = vector.load %arg7[%c0_333, %c0_334] : memref<8x128xf32, #tpu.memory_space<vmem>>, vector<8x128xf32>
    %c0_335 = arith.constant 0 : index
    %c1792_336 = arith.constant 1792 : index
    %271 = vector.load %arg2[%c0_335, %c1792_336] : memref<8x2048xf32, #tpu.memory_space<vmem>>, vector<8x128xf32>
    %272 = math.absf %271 : vector<8x128xf32>
    %273 = arith.addf %270, %272 : vector<8x128xf32>
    %c0_337 = arith.constant 0 : index
    %c0_338 = arith.constant 0 : index
    %274 = vector.load %arg7[%c0_337, %c0_338] : memref<8x128xf32, #tpu.memory_space<vmem>>, vector<8x128xf32>
    tpu.vector_store %arg7[%c0_337, %c0_338], %273 {strides = array<i32>} : memref<8x128xf32, #tpu.memory_space<vmem>>, vector<8x128xf32>,
    %c0_339 = arith.constant 0 : index
    %c0_340 = arith.constant 0 : index
    %275 = vector.load %arg9[%c0_339, %c0_340] : memref<8x128xf32, #tpu.memory_space<vmem>>, vector<8x128xf32>
    %c0_341 = arith.constant 0 : index
    %c1792_342 = arith.constant 1792 : index
    %276 = vector.load %arg4[%c0_341, %c1792_342] : memref<8x2048xf32, #tpu.memory_space<vmem>>, vector<8x128xf32>
    %277 = math.absf %276 : vector<8x128xf32>
    %278 = arith.addf %275, %277 : vector<8x128xf32>
    %c0_343 = arith.constant 0 : index
    %c0_344 = arith.constant 0 : index
    %279 = vector.load %arg9[%c0_343, %c0_344] : memref<8x128xf32, #tpu.memory_space<vmem>>, vector<8x128xf32>
    tpu.vector_store %arg9[%c0_343, %c0_344], %278 {strides = array<i32>} : memref<8x128xf32, #tpu.memory_space<vmem>>, vector<8x128xf32>,
    %c0_345 = arith.constant 0 : index
    %c1792_346 = arith.constant 1792 : index
    %280 = vector.load %arg2[%c0_345, %c1792_346] : memref<8x2048xf32, #tpu.memory_space<vmem>>, vector<8x256xf32>
    %c0_347 = arith.constant 0 : index
    %c0_348 = arith.constant 0 : index
    %281 = vector.load %arg6[%c0_347, %c0_348] : memref<8x384xf32, #tpu.memory_space<vmem>>, vector<8x256xf32>
    tpu.vector_store %arg6[%c0_347, %c0_348], %280 {strides = array<i32>} : memref<8x384xf32, #tpu.memory_space<vmem>>, vector<8x256xf32>,
    %c0_349 = arith.constant 0 : index
    %c0_350 = arith.constant 0 : index
    %282 = vector.load %arg2[%c0_349, %c0_350] : memref<8x2048xf32, #tpu.memory_space<vmem>>, vector<8x128xf32>
    %c0_351 = arith.constant 0 : index
    %c256_352 = arith.constant 256 : index
    %283 = vector.load %arg6[%c0_351, %c256_352] : memref<8x384xf32, #tpu.memory_space<vmem>>, vector<8x128xf32>
    tpu.vector_store %arg6[%c0_351, %c256_352], %282 {strides = array<i32>} : memref<8x384xf32, #tpu.memory_space<vmem>>, vector<8x128xf32>,
    %c0_353 = arith.constant 0 : index
    %c0_354 = arith.constant 0 : index
    %284 = vector.load %arg6[%c0_353, %c0_354] : memref<8x384xf32, #tpu.memory_space<vmem>>, vector<8x384xf32>
    %c0_355 = arith.constant 0 : index
    %c0_356 = arith.constant 0 : index
    %285 = vector.load %arg1[%c0_355, %c0_356] : memref<384x128xf32, #tpu.memory_space<vmem>>, vector<384x128xf32>
    %cst_357 = arith.constant dense<0.000000e+00> : vector<8x128xf32>
    %286 = tpu.matmul %284, %285, %cst_357 {dimension_numbers = #tpu.dot_dimension_numbers<[1], [0], [0], [1], [0, 0, 1, 1], [], []>} : vector<8x384xf32>, vector<384x128xf32>, vector<8x128xf32> -> vector<8x128xf32>
    %c0_358 = arith.constant 0 : index
    %c1920_359 = arith.constant 1920 : index
    %287 = vector.load %arg5[%c0_358, %c1920_359] : memref<8x2048xf32, #tpu.memory_space<vmem>>, vector<8x128xf32>
    tpu.vector_store %arg5[%c0_358, %c1920_359], %286 {strides = array<i32>} : memref<8x2048xf32, #tpu.memory_space<vmem>>, vector<8x128xf32>,
    %c0_360 = arith.constant 0 : index
    %c0_361 = arith.constant 0 : index
    %288 = vector.load %arg8[%c0_360, %c0_361] : memref<8x128xf32, #tpu.memory_space<vmem>>, vector<8x128xf32>
    %289 = math.absf %286 : vector<8x128xf32>
    %290 = arith.addf %288, %289 : vector<8x128xf32>
    %c0_362 = arith.constant 0 : index
    %c0_363 = arith.constant 0 : index
    %291 = vector.load %arg8[%c0_362, %c0_363] : memref<8x128xf32, #tpu.memory_space<vmem>>, vector<8x128xf32>
    tpu.vector_store %arg8[%c0_362, %c0_363], %290 {strides = array<i32>} : memref<8x128xf32, #tpu.memory_space<vmem>>, vector<8x128xf32>,
    %c0_364 = arith.constant 0 : index
    %c0_365 = arith.constant 0 : index
    %292 = vector.load %arg7[%c0_364, %c0_365] : memref<8x128xf32, #tpu.memory_space<vmem>>, vector<8x128xf32>
    %c0_366 = arith.constant 0 : index
    %c1920_367 = arith.constant 1920 : index
    %293 = vector.load %arg2[%c0_366, %c1920_367] : memref<8x2048xf32, #tpu.memory_space<vmem>>, vector<8x128xf32>
    %294 = math.absf %293 : vector<8x128xf32>
    %295 = arith.addf %292, %294 : vector<8x128xf32>
    %c0_368 = arith.constant 0 : index
    %c0_369 = arith.constant 0 : index
    %296 = vector.load %arg7[%c0_368, %c0_369] : memref<8x128xf32, #tpu.memory_space<vmem>>, vector<8x128xf32>
    tpu.vector_store %arg7[%c0_368, %c0_369], %295 {strides = array<i32>} : memref<8x128xf32, #tpu.memory_space<vmem>>, vector<8x128xf32>,
    %c0_370 = arith.constant 0 : index
    %c0_371 = arith.constant 0 : index
    %297 = vector.load %arg9[%c0_370, %c0_371] : memref<8x128xf32, #tpu.memory_space<vmem>>, vector<8x128xf32>
    %c0_372 = arith.constant 0 : index
    %c1920_373 = arith.constant 1920 : index
    %298 = vector.load %arg4[%c0_372, %c1920_373] : memref<8x2048xf32, #tpu.memory_space<vmem>>, vector<8x128xf32>
    %299 = math.absf %298 : vector<8x128xf32>
    %300 = arith.addf %297, %299 : vector<8x128xf32>
    %c0_374 = arith.constant 0 : index
    %c0_375 = arith.constant 0 : index
    %301 = vector.load %arg9[%c0_374, %c0_375] : memref<8x128xf32, #tpu.memory_space<vmem>>, vector<8x128xf32>
    tpu.vector_store %arg9[%c0_374, %c0_375], %300 {strides = array<i32>} : memref<8x128xf32, #tpu.memory_space<vmem>>, vector<8x128xf32>,
    %c0_376 = arith.constant 0 : index
    %c0_377 = arith.constant 0 : index
    %302 = vector.load %arg7[%c0_376, %c0_377] : memref<8x128xf32, #tpu.memory_space<vmem>>, vector<8x128xf32>
    %cst_378 = arith.constant dense<0.000000e+00> : vector<8xf32>
    %303 = vector.multi_reduction <add>, %302, %cst_378 [1] : vector<8x128xf32> to vector<8xf32>
    %304 = vector.shape_cast %303 : vector<8xf32> to vector<8x1xf32>
    %cst_379 = arith.constant 4.8828125E-4 : f32
    %305 = vector.broadcast %cst_379 : f32 to vector<8x1xf32>
    %306 = arith.mulf %304, %305 : vector<8x1xf32>
    %c0_380 = arith.constant 0 : index
    %c0_381 = arith.constant 0 : index
    %307 = vector.load %arg8[%c0_380, %c0_381] : memref<8x128xf32, #tpu.memory_space<vmem>>, vector<8x128xf32>
    %cst_382 = arith.constant dense<0.000000e+00> : vector<8xf32>
    %308 = vector.multi_reduction <add>, %307, %cst_382 [1] : vector<8x128xf32> to vector<8xf32>
    %309 = vector.shape_cast %308 : vector<8xf32> to vector<8x1xf32>
    %c0_383 = arith.constant 0 : index
    %c0_384 = arith.constant 0 : index
    %310 = vector.load %arg9[%c0_383, %c0_384] : memref<8x128xf32, #tpu.memory_space<vmem>>, vector<8x128xf32>
    %cst_385 = arith.constant dense<0.000000e+00> : vector<8xf32>
    %311 = vector.multi_reduction <add>, %310, %cst_385 [1] : vector<8x128xf32> to vector<8xf32>
    %312 = vector.shape_cast %311 : vector<8xf32> to vector<8x1xf32>
    %c0_386 = arith.constant 0 : index
    %c0_387 = arith.constant 0 : index
    %313 = vector.load %arg3[%c0_386, %c0_387] : memref<8x3xf32, #tpu.memory_space<vmem>>, vector<8x1xf32>
    %c0_388 = arith.constant 0 : index
    %c1 = arith.constant 1 : index
    %314 = vector.load %arg3[%c0_388, %c1] : memref<8x3xf32, #tpu.memory_space<vmem>>, vector<8x1xf32>
    %c0_389 = arith.constant 0 : index
    %c2 = arith.constant 2 : index
    %315 = vector.load %arg3[%c0_389, %c2] : memref<8x3xf32, #tpu.memory_space<vmem>>, vector<8x1xf32>
    %cst_390 = arith.constant 4.8828125E-4 : f32
    %316 = vector.broadcast %cst_390 : f32 to vector<8x1xf32>
    %317 = arith.mulf %309, %316 : vector<8x1xf32>
    %cst_391 = arith.constant 9.99999982E-15 : f32
    %318 = vector.broadcast %cst_391 : f32 to vector<8x1xf32>
    %319 = arith.addf %317, %318 : vector<8x1xf32>
    %320 = tpu.reciprocal %319 {approx = true} : vector<8x1xf32> -> vector<8x1xf32>
    %321 = arith.mulf %309, %306 : vector<8x1xf32>
    %322 = arith.mulf %321, %320 : vector<8x1xf32>
    %323 = arith.mulf %322, %314 : vector<8x1xf32>
    %324 = arith.mulf %312, %315 : vector<8x1xf32>
    %325 = arith.mulf %306, %320 : vector<8x1xf32>
    %cst_392 = arith.constant 1.000000e+00 : f32
    %326 = vector.broadcast %cst_392 : f32 to vector<8x1xf32>
    %327 = arith.subf %326, %313 : vector<8x1xf32>
    %328 = arith.mulf %325, %327 : vector<8x1xf32>
    %329 = arith.mulf %313, %323 : vector<8x1xf32>
    %cst_393 = arith.constant 9.99999982E-15 : f32
    %330 = vector.broadcast %cst_393 : f32 to vector<8x1xf32>
    %331 = arith.addf %324, %330 : vector<8x1xf32>
    %332 = tpu.reciprocal %331 {approx = true} : vector<8x1xf32> -> vector<8x1xf32>
    %333 = arith.mulf %329, %332 : vector<8x1xf32>
    %c0_394 = arith.constant 0 : index
    %c0_395 = arith.constant 0 : index
    %334 = vector.load %arg5[%c0_394, %c0_395] : memref<8x2048xf32, #tpu.memory_space<vmem>>, vector<8x2048xf32>
    %335 = vector.broadcast %328 : vector<8x1xf32> to vector<8x2048xf32>
    %336 = arith.mulf %334, %335 : vector<8x2048xf32>
    %c0_396 = arith.constant 0 : index
    %c0_397 = arith.constant 0 : index
    %337 = vector.load %arg4[%c0_396, %c0_397] : memref<8x2048xf32, #tpu.memory_space<vmem>>, vector<8x2048xf32>
    %338 = vector.broadcast %333 : vector<8x1xf32> to vector<8x2048xf32>
    %339 = arith.mulf %337, %338 : vector<8x2048xf32>
    %340 = arith.addf %336, %339 : vector<8x2048xf32>
    %c0_398 = arith.constant 0 : index
    %c0_399 = arith.constant 0 : index
    %341 = vector.load %arg5[%c0_398, %c0_399] : memref<8x2048xf32, #tpu.memory_space<vmem>>, vector<8x2048xf32>
    tpu.vector_store %arg5[%c0_398, %c0_399], %340 {strides = array<i32>} : memref<8x2048xf32, #tpu.memory_space<vmem>>, vector<8x2048xf32>,
    return
  }
  func.func @transform_0(%arg0: i32) -> (i32, i32) {
    %c0_i32 = arith.constant 0 : i32
    %c0_i32_0 = arith.constant 0 : i32
    %c0_i32_1 = arith.constant 0 : i32
    return %c0_i32, %c0_i32_0 : i32, i32
  }
  func.func @transform_1(%arg0: i32) -> (i32, i32) {
    %c0_i32 = arith.constant 0 : i32
    %c0_i32_0 = arith.constant 0 : i32
    return %arg0, %c0_i32 : i32, i32
  }
  func.func @transform_2(%arg0: i32) -> (i32, i32) {
    %c0_i32 = arith.constant 0 : i32
    %c0_i32_0 = arith.constant 0 : i32
    return %arg0, %c0_i32 : i32, i32
  }
  func.func @transform_3(%arg0: i32) -> (i32, i32) {
    %c0_i32 = arith.constant 0 : i32
    %c0_i32_0 = arith.constant 0 : i32
    return %arg0, %c0_i32 : i32, i32
  }
  func.func @transform_4(%arg0: i32) -> (i32, i32) {
    %c0_i32 = arith.constant 0 : i32
    %c0_i32_0 = arith.constant 0 : i32
    return %arg0, %c0_i32 : i32, i32
  }
}

</mosaic_0001>

<llo_original>
// kernel: tpu_custom_call.1
$region0: #{tpu_custom_call.1}
  #allocation0 [shape = 'u32[]', space=smem, size = 0x4, offset = 0x4, fixed_abs, tag = 'smem constant byte address 0x4 - core index']
  #allocation1 [shape = 'u32[72,128]{1,0:T(1,128)}', space=vmem, size = 0x9000, scoped, tag = 'internal scratch']
  #allocation2 [shape = 'f32[8,384]{1,0:T(8,128)}', space=vmem, size = 0x3000, scoped, tag = 'scratch operand']
  #allocation3 [shape = 'f32[8,128]{1,0:T(8,128)}', space=vmem, size = 0x1000, scoped, tag = 'scratch operand']
  #allocation4 [shape = 'f32[8,128]{1,0:T(8,128)}', space=vmem, size = 0x1000, scoped, tag = 'scratch operand']
  #allocation5 [shape = 'f32[8,128]{1,0:T(8,128)}', space=vmem, size = 0x1000, scoped, tag = 'scratch operand']
  %s0 = inlined_call_operand.hbm [shape: f32[384,128], index: 0, kind: input, shape index: {}]
  %s1 = inlined_call_operand.hbm [shape: f32[16,2048], index: 1, kind: input, shape index: {}]
  %s2 = inlined_call_operand.vmem [shape: f32[16,3], index: 2, kind: input, shape index: {}]
  %s3 = inlined_call_operand.hbm [shape: f32[16,2048], index: 3, kind: input, shape index: {}]
  %s4 = inlined_call_operand.hbm [shape: f32[16,2048], index: 4, kind: output, shape index: {}]
  %s5 = sld [smem:[#allocation0]]
  $region61: #{tpu_custom_call.1} parent=0
    _
  %s7 = ssub.s32 1, %s5
  %s8 = scalar_select 0, %s7, %s5
  $region1: #{tpu_custom_call.1} parent=0
    #allocation6 [shape = 'u8[196608]{0}', space=vmem, size = 0x30000, scoped, tag = 'input window, operand 0, single buffered']
    #allocation7 [shape = 's32[2]{0}', space=sflag, size = 0x8, scoped, tag = 'scoped memory for tpu_custom_call.1']
    #allocation8 [shape = 's32[2]{0}', space=sflag, size = 0x8, scoped, tag = 'scoped memory for tpu_custom_call.1']
    #allocation9 [shape = 'u8[131072]{0}', space=vmem, size = 0x20000, scoped, tag = 'input window, operand 1']
    #allocation10 [shape = 's32[2]{0}', space=sflag, size = 0x8, scoped, tag = 'scoped memory for tpu_custom_call.1']
    #allocation11 [shape = 'u8[131072]{0}', space=vmem, size = 0x20000, scoped, tag = 'input window, operand 3']
    #allocation12 [shape = 'u8[131072]{0}', space=vmem, size = 0x20000, scoped, tag = 'output window, operand 0']
    %9 = vsyncpa [#allocation7], 0
    %10 = vsyncpa [#allocation10], 0
    %s11 = scalar_lea.sflag [#allocation10], 1
    %12 = vsyncpa %s11, 0
    %13 = vsyncpa [#allocation8], 0
    %s14 = scalar_lea.sflag [#allocation8], 1
    %15 = vsyncpa %s14, 0
    loop: start=0, step=1, limit=4
    $region2: #{tpu_custom_call.1} parent=1 // loop_pre_header
      _
    $region3: #{tpu_custom_call.1} parent=1 // loop_header
      %s17 = sphi 0, %s21
      %p18 = scmp.ge.s32.totalorder %s17, 4
      %s25 = sphi 0, %s25
      %s27 = sphi 0, %s25
      %s28 = sphi 0, %s27
      %s42 = sphi 0, %s28
      %s48 = sphi 0, %s50
      %s51 = sphi 0, %s48
      %s52 = sphi 0, %s51
      %s68 = sphi 0, %s52
      %s74 = sphi 0, %s76
      %s77 = sphi 0, %s74
      %s78 = sphi 0, %s77
      %s94 = sphi 0, %s78
      %s100 = sphi 0, %s102
      %s103 = sphi 0, %s100
      %s104 = sphi 0, %s103
      %s120 = sphi 0, %s104
      %s126 = sphi 0, %s128
      %s129 = sphi 0, %s126
      %s130 = sphi 0, %s129
      %s146 = sphi 0, %s130
    $region4: #{tpu_custom_call.1} parent=1 // loop_header_branch
      %20 = sbr.rel (%p18) target = $region8
    $region5: #{tpu_custom_call.1} parent=1 // loop_body
      %s22 = ssub.s32 %s17, 1
      %s23 = ssub.s32 %s17, 2
      %s24 = sadd.s32 %s17, 1
      %s26 = sadd.s32 %s25, 1
      %p29 = scmp.eq.s32.totalorder %s17, 1
      %p30 = scmp.ne.s32.totalorder %s25, %s27
      %p31 = scmp.eq.s32.totalorder %s17, 0
      %p32 = por %p30, %p31
      %p33 = scmp.ne.s32.totalorder %s25, %s27
      %p34 = scmp.eq.s32.totalorder %s22, 1
      %p35 = por %p33, %p34
      %p36 = scmp.ne.s32.totalorder %s27, %s28
      %p37 = scmp.eq.s32.totalorder %s22, 0
      %p38 = por %p36, %p37
      %p39 = scmp.ne.s32.totalorder %s27, %s28
      %p40 = scmp.eq.s32.totalorder %s23, 1
      %p41 = por %p39, %p40
      %p43 = scmp.ne.s32.totalorder %s28, %s42
      %p44 = scmp.eq.s32.totalorder %s23, 0
      %p45 = por %p43, %p44
      %s46 = ssub.s32 %s17, %s24
      %p47 = scmp.eq.s32.totalorder %s46, 0
      %s49 = sadd.s32 %s48, 1
      %s50 = scalar_select %p47, %s48, %s49
      %p53 = pneg %p47
      %p54 = scmp.eq.s32.totalorder %s17, 1
      %p55 = por %p53, %p54
      %p56 = scmp.ne.s32.totalorder %s48, %s51
      %p57 = scmp.eq.s32.totalorder %s17, 0
      %p58 = por %p56, %p57
      %p59 = scmp.ne.s32.totalorder %s48, %s51
      %p60 = scmp.eq.s32.totalorder %s22, 1
      %p61 = por %p59, %p60
      %p62 = scmp.ne.s32.totalorder %s51, %s52
      %p63 = scmp.eq.s32.totalorder %s22, 0
      %p64 = por %p62, %p63
      %p65 = scmp.ne.s32.totalorder %s51, %s52
      %p66 = scmp.eq.s32.totalorder %s23, 1
      %p67 = por %p65, %p66
      %p69 = scmp.ne.s32.totalorder %s52, %s68
      %p70 = scmp.eq.s32.totalorder %s23, 0
      %p71 = por %p69, %p70
      %s72 = ssub.s32 %s17, %s24
      %p73 = scmp.eq.s32.totalorder %s72, 0
      %s75 = sadd.s32 %s74, 1
      %s76 = scalar_select %p73, %s74, %s75
      %p79 = pneg %p73
      %p80 = scmp.eq.s32.totalorder %s17, 1
      %p81 = por %p79, %p80
      %p82 = scmp.ne.s32.totalorder %s74, %s77
      %p83 = scmp.eq.s32.totalorder %s17, 0
      %p84 = por %p82, %p83
      %p85 = scmp.ne.s32.totalorder %s74, %s77
      %p86 = scmp.eq.s32.totalorder %s22, 1
      %p87 = por %p85, %p86
      %p88 = scmp.ne.s32.totalorder %s77, %s78
      %p89 = scmp.eq.s32.totalorder %s22, 0
      %p90 = por %p88, %p89
      %p91 = scmp.ne.s32.totalorder %s77, %s78
      %p92 = scmp.eq.s32.totalorder %s23, 1
      %p93 = por %p91, %p92
      %p95 = scmp.ne.s32.totalorder %s78, %s94
      %p96 = scmp.eq.s32.totalorder %s23, 0
      %p97 = por %p95, %p96
      %s98 = ssub.s32 %s17, %s24
      %p99 = scmp.eq.s32.totalorder %s98, 0
      %s101 = sadd.s32 %s100, 1
      %s102 = scalar_select %p99, %s100, %s101
      %p105 = pneg %p99
      %p106 = scmp.eq.s32.totalorder %s17, 1
      %p107 = por %p105, %p106
      %p108 = scmp.ne.s32.totalorder %s100, %s103
      %p109 = scmp.eq.s32.totalorder %s17, 0
      %p110 = por %p108, %p109
      %p111 = scmp.ne.s32.totalorder %s100, %s103
      %p112 = scmp.eq.s32.totalorder %s22, 1
      %p113 = por %p111, %p112
      %p114 = scmp.ne.s32.totalorder %s103, %s104
      %p115 = scmp.eq.s32.totalorder %s22, 0
      %p116 = por %p114, %p115
      %p117 = scmp.ne.s32.totalorder %s103, %s104
      %p118 = scmp.eq.s32.totalorder %s23, 1
      %p119 = por %p117, %p118
      %p121 = scmp.ne.s32.totalorder %s104, %s120
      %p122 = scmp.eq.s32.totalorder %s23, 0
      %p123 = por %p121, %p122
      %s124 = ssub.s32 %s17, %s24
      %p125 = scmp.eq.s32.totalorder %s124, 0
      %s127 = sadd.s32 %s126, 1
      %s128 = scalar_select %p125, %s126, %s127
      %p131 = pneg %p125
      %p132 = scmp.eq.s32.totalorder %s17, 1
      %p133 = por %p131, %p132
      %p134 = scmp.ne.s32.totalorder %s126, %s129
      %p135 = scmp.eq.s32.totalorder %s17, 0
      %p136 = por %p134, %p135
      %p137 = scmp.ne.s32.totalorder %s126, %s129
      %p138 = scmp.eq.s32.totalorder %s22, 1
      %p139 = por %p137, %p138
      %p140 = scmp.ne.s32.totalorder %s129, %s130
      %p141 = scmp.eq.s32.totalorder %s22, 0
      %p142 = por %p140, %p141
      %p143 = scmp.ne.s32.totalorder %s129, %s130
      %p144 = scmp.eq.s32.totalorder %s23, 1
      %p145 = por %p143, %p144
      %p147 = scmp.ne.s32.totalorder %s130, %s146
      %p148 = scmp.eq.s32.totalorder %s23, 0
      %p149 = por %p147, %p148
      %p150 = scmp.le.s32.totalorder 1, %s17
      %p151 = scmp.lt.s32.totalorder %s17, 3
      %p152 = pnand %p150, %p151
      %p153 = pneg %p152
      // Predicated region
      $region9: #{tpu_custom_call.1} parent=5 // pred_check
        _
      $region10: #{tpu_custom_call.1} parent=5 // pred_check_branch
        %155 = sbr.rel (%p152) target = $region12
      $region11: #{tpu_custom_call.1} parent=5 // pred_region
        %s156 = ssub.s32 %s17, 1
        // Predicated region
        $region13: #{tpu_custom_call.1} parent=11 // pred_check
          %p157 = pneg %p38
        $region14: #{tpu_custom_call.1} parent=11 // pred_check_branch
          %159 = sbr.rel (%p157) target = $region16
        $region15: #{tpu_custom_call.1} parent=11 // pred_region
          %161 = vsyncadd [#allocation7], 0
          %s162 = sshll.u32 %s0, 4
          %s163 = int_to_ptr.hbm [resolvable:$true] %s162
          %s164 = sshll.u32 [#allocation6], 4
          %s165 = int_to_ptr.vmem [resolvable:$true] %s164
          %170 = dma.hbm_to_vmem [thread:$0]  %s163, 6144, %s165, [#allocation7], 128, 128, 8
        $region16: #{tpu_custom_call.1} parent=11 // pred_fallthru
          _
      $region12: #{tpu_custom_call.1} parent=5 // pred_fallthru
        _
      %p171 = scmp.lt.s32.totalorder %s17, 2
      // Predicated region
      $region17: #{tpu_custom_call.1} parent=5 // pred_check
        %p172 = pneg %p171
      $region18: #{tpu_custom_call.1} parent=5 // pred_check_branch
        %174 = sbr.rel (%p172) target = $region20
      $region19: #{tpu_custom_call.1} parent=5 // pred_region
        // Predicated region
        $region21: #{tpu_custom_call.1} parent=19 // pred_check
          %p175 = pneg %p58
        $region22: #{tpu_custom_call.1} parent=19 // pred_check_branch
          %177 = sbr.rel (%p175) target = $region24
        $region23: #{tpu_custom_call.1} parent=19 // pred_region
          %s178 = sand.u32 %s17, 1
          %s179 = scalar_lea.sflag [#allocation10], %s178
          %s180 = sand.u32 %s48, 1
          %s181 = smul.addr %s180, 128
          %s182 = scalar_lea.vmem [#allocation9], %s181
          %184 = vsyncadd %s179, 0
          %s185 = smul.addr %s17, 16
          %s186 = smul.addr %s185, 8
          %s187 = scalar_lea.hbm %s1, %s186
          %s189 = sshll.u32 %s187, 4
          %s190 = int_to_ptr.hbm [resolvable:$true] %s189
          %s191 = sshll.u32 %s182, 4
          %s192 = int_to_ptr.vmem [resolvable:$true] %s191
          %194 = dma.hbm_to_vmem [thread:$0]  %s190, 2048, %s192, %s179
        $region24: #{tpu_custom_call.1} parent=19 // pred_fallthru
          _
        // Predicated region
        $region25: #{tpu_custom_call.1} parent=19 // pred_check
          %p195 = pneg %p84
        $region26: #{tpu_custom_call.1} parent=19 // pred_check_branch
          %197 = sbr.rel (%p195) target = $region28
        $region27: #{tpu_custom_call.1} parent=19 // pred_region
          %p198 = scmp.lt.s32.totalorder %s17, 1
          %s199 = scalar_select %p198, %s17, 1
          %s200 = smul.addr %s199, 8
          %s201 = scalar_lea.vmem %s2, %s200
        $region28: #{tpu_custom_call.1} parent=19 // pred_fallthru
          _
        // Predicated region
        $region29: #{tpu_custom_call.1} parent=19 // pred_check
          %p202 = pneg %p110
        $region30: #{tpu_custom_call.1} parent=19 // pred_check_branch
          %204 = sbr.rel (%p202) target = $region32
        $region31: #{tpu_custom_call.1} parent=19 // pred_region
          %s205 = sand.u32 %s17, 1
          %s206 = scalar_lea.sflag [#allocation10], %s205
          %s207 = sand.u32 %s100, 1
          %s208 = smul.addr %s207, 128
          %s209 = scalar_lea.vmem [#allocation11], %s208
          %211 = vsyncadd %s206, 0
          %s212 = smul.addr %s17, 16
          %s213 = smul.addr %s212, 8
          %s214 = scalar_lea.hbm %s3, %s213
          %s216 = sshll.u32 %s214, 4
          %s217 = int_to_ptr.hbm [resolvable:$true] %s216
          %s218 = sshll.u32 %s209, 4
          %s219 = int_to_ptr.vmem [resolvable:$true] %s218
          %221 = dma.hbm_to_vmem [thread:$0]  %s217, 2048, %s219, %s206
        $region32: #{tpu_custom_call.1} parent=19 // pred_fallthru
          _
      $region20: #{tpu_custom_call.1} parent=5 // pred_fallthru
        _
      %p222 = scmp.le.s32.totalorder 1, %s17
      %p223 = scmp.lt.s32.totalorder %s17, 3
      %p224 = pnand %p222, %p223
      %p225 = pneg %p224
      // Predicated region
      $region33: #{tpu_custom_call.1} parent=5 // pred_check
        _
      $region34: #{tpu_custom_call.1} parent=5 // pred_check_branch
        %227 = sbr.rel (%p224) target = $region36
      $region35: #{tpu_custom_call.1} parent=5 // pred_region
        %s228 = ssub.s32 %s17, 1
        // Predicated region
        $region37: #{tpu_custom_call.1} parent=35 // pred_check
          %p229 = pneg %p38
        $region38: #{tpu_custom_call.1} parent=35 // pred_check_branch
          %231 = sbr.rel (%p229) target = $region40
        $region39: #{tpu_custom_call.1} parent=35 // pred_region
          %233 = dma.done [#allocation7], 6144
        $region40: #{tpu_custom_call.1} parent=35 // pred_fallthru
          _
        %s234 = sand.u32 %s22, 1
        %s235 = scalar_lea.sflag [#allocation10], %s234
        %s236 = sand.u32 %s51, 1
        %s237 = smul.addr %s236, 128
        %s238 = scalar_lea.vmem [#allocation9], %s237
        // Predicated region
        $region41: #{tpu_custom_call.1} parent=35 // pred_check
          %p239 = pneg %p64
        $region42: #{tpu_custom_call.1} parent=35 // pred_check_branch
          %241 = sbr.rel (%p239) target = $region44
        $region43: #{tpu_custom_call.1} parent=35 // pred_region
          %243 = dma.done %s235, 2048
        $region44: #{tpu_custom_call.1} parent=35 // pred_fallthru
          _
        %s244 = sand.u32 %s22, 1
        %s245 = scalar_lea.sflag [#allocation10], %s244
        %s246 = sand.u32 %s103, 1
        %s247 = smul.addr %s246, 128
        %s248 = scalar_lea.vmem [#allocation11], %s247
        // Predicated region
        $region45: #{tpu_custom_call.1} parent=35 // pred_check
          %p249 = pneg %p116
        $region46: #{tpu_custom_call.1} parent=35 // pred_check_branch
          %251 = sbr.rel (%p249) target = $region48
        $region47: #{tpu_custom_call.1} parent=35 // pred_region
          %253 = dma.done %s245, 2048
        $region48: #{tpu_custom_call.1} parent=35 // pred_fallthru
          _
        %p254 = pneg %p38
        %p255 = pneg %p35
        %s256 = sand.u32 %s22, 1
        %s257 = scalar_lea.sflag [#allocation10], %s256
        %s258 = sand.u32 %s51, 1
        %s259 = smul.addr %s258, 128
        %s260 = scalar_lea.vmem [#allocation9], %s259
        %p261 = pneg %p64
        %p262 = pneg %p61
        %p263 = scmp.lt.s32.totalorder %s22, 1
        %s264 = scalar_select %p263, %s22, 1
        %s265 = smul.addr %s264, 8
        %s266 = scalar_lea.vmem %s2, %s265
        %p267 = pneg %p90
        %p268 = pneg %p87
        %s269 = sand.u32 %s22, 1
        %s270 = scalar_lea.sflag [#allocation10], %s269
        %s271 = sand.u32 %s103, 1
        %s272 = smul.addr %s271, 128
        %s273 = scalar_lea.vmem [#allocation11], %s272
        %p274 = pneg %p116
        %p275 = pneg %p113
        %p276 = pneg %p142
        %p277 = pneg %p139
        %s278 = sand.u32 %s129, 1
        %s279 = scalar_lea.sflag [#allocation8], %s278
        %s280 = sand.u32 %s129, 1
        %s281 = smul.addr %s280, 128
        %s282 = scalar_lea.vmem [#allocation12], %s281
        %p283 = scmp.lt.s32.totalorder %s22, 1
        %s284 = scalar_select %p283, %s22, 1
        %s285 = smul.addr %s284, 8
        %s286 = scalar_lea.vmem %s2, %s285
        %287 = vst [vmem:[#allocation3] sm:$0xff] 0.0
        %288 = vst [vmem:[#allocation4] sm:$0xff] 0.0
        %289 = vst [vmem:[#allocation5] sm:$0xff] 0.0
        %v290 = vld [vmem:[%s238 + $0x78] sm:$0xff]
        %291 = vst [vmem:[#allocation2] sm:$0xff] %v290
        %v292 = vld [vmem:[%s238] sm:$0xff]
        %v293 = vld [vmem:[%s238 + $0x8] sm:$0xff]
        %294 = vst [vmem:[#allocation2 + $0x8] sm:$0xff] %v292
        %295 = vst [vmem:[#allocation2 + $0x10] sm:$0xff] %v293
        %v296 = vld [vmem:[#allocation2] sm:$0xff]
        %v297 = vld [vmem:[#allocation2 + $0x8] sm:$0xff]
        %v298 = vld [vmem:[#allocation2 + $0x10] sm:$0xff]
        %v299 = vld [vmem:[#allocation6] sm:$0xff]
        %v300 = vld [vmem:[#allocation6 + $0x8] sm:$0xff]
        %v301 = vld [vmem:[#allocation6 + $0x10] sm:$0xff]
        %v302 = vld [vmem:[#allocation6 + $0x18] sm:$0xff]
        %v303 = vld [vmem:[#allocation6 + $0x20] sm:$0xff]
        %v304 = vld [vmem:[#allocation6 + $0x28] sm:$0xff]
        %v305 = vld [vmem:[#allocation6 + $0x30] sm:$0xff]
        %v306 = vld [vmem:[#allocation6 + $0x38] sm:$0xff]
        %v307 = vld [vmem:[#allocation6 + $0x40] sm:$0xff]
        %v308 = vld [vmem:[#allocation6 + $0x48] sm:$0xff]
        %v309 = vld [vmem:[#allocation6 + $0x50] sm:$0xff]
        %v310 = vld [vmem:[#allocation6 + $0x58] sm:$0xff]
        %v311 = vld [vmem:[#allocation6 + $0x60] sm:$0xff]
        %v312 = vld [vmem:[#allocation6 + $0x68] sm:$0xff]
        %v313 = vld [vmem:[#allocation6 + $0x70] sm:$0xff]
        %v314 = vld [vmem:[#allocation6 + $0x78] sm:$0xff]
        %v315 = vld [vmem:[#allocation6 + $0x80] sm:$0xff]
        %v316 = vld [vmem:[#allocation6 + $0x88] sm:$0xff]
        %v317 = vld [vmem:[#allocation6 + $0x90] sm:$0xff]
        %v318 = vld [vmem:[#allocation6 + $0x98] sm:$0xff]
        %v319 = vld [vmem:[#allocation6 + $0xa0] sm:$0xff]
        %v320 = vld [vmem:[#allocation6 + $0xa8] sm:$0xff]
        %v321 = vld [vmem:[#allocation6 + $0xb0] sm:$0xff]
        %v322 = vld [vmem:[#allocation6 + $0xb8] sm:$0xff]
        %v323 = vld [vmem:[#allocation6 + $0xc0] sm:$0xff]
        %v324 = vld [vmem:[#allocation6 + $0xc8] sm:$0xff]
        %v325 = vld [vmem:[#allocation6 + $0xd0] sm:$0xff]
        %v326 = vld [vmem:[#allocation6 + $0xd8] sm:$0xff]
        %v327 = vld [vmem:[#allocation6 + $0xe0] sm:$0xff]
        %v328 = vld [vmem:[#allocation6 + $0xe8] sm:$0xff]
        %v329 = vld [vmem:[#allocation6 + $0xf0] sm:$0xff]
        %v330 = vld [vmem:[#allocation6 + $0xf8] sm:$0xff]
        %v331 = vld [vmem:[#allocation6 + $0x100] sm:$0xff]
        %v332 = vld [vmem:[#allocation6 + $0x108] sm:$0xff]
        %v333 = vld [vmem:[#allocation6 + $0x110] sm:$0xff]
        %v334 = vld [vmem:[#allocation6 + $0x118] sm:$0xff]
        %v335 = vld [vmem:[#allocation6 + $0x120] sm:$0xff]
        %v336 = vld [vmem:[#allocation6 + $0x128] sm:$0xff]
        %v337 = vld [vmem:[#allocation6 + $0x130] sm:$0xff]
        %v338 = vld [vmem:[#allocation6 + $0x138] sm:$0xff]
        %v339 = vld [vmem:[#allocation6 + $0x140] sm:$0xff]
        %v340 = vld [vmem:[#allocation6 + $0x148] sm:$0xff]
        %v341 = vld [vmem:[#allocation6 + $0x150] sm:$0xff]
        %v342 = vld [vmem:[#allocation6 + $0x158] sm:$0xff]
        %v343 = vld [vmem:[#allocation6 + $0x160] sm:$0xff]
        %v344 = vld [vmem:[#allocation6 + $0x168] sm:$0xff]
        %v345 = vld [vmem:[#allocation6 + $0x170] sm:$0xff]
        %v346 = vld [vmem:[#allocation6 + $0x178] sm:$0xff]
        %347 = vmatpush.msra.mxu0 %v314
        %348 = vmatpush.msra.mxu0 %v313
        %349 = vmatpush.msra.mxu0 %v312
        %350 = vmatpush.msra.mxu0 %v311
        %351 = vmatpush.msra.mxu0 %v310
        %352 = vmatpush.msra.mxu0 %v309
        %353 = vmatpush.msra.mxu0 %v308
        %354 = vmatpush.msra.mxu0 %v307
        %355 = vmatpush.msra.mxu0 %v306
        %356 = vmatpush.msra.mxu0 %v305
        %357 = vmatpush.msra.mxu0 %v304
        %358 = vmatpush.msra.mxu0 %v303
        %359 = vmatpush.msra.mxu0 %v302
        %360 = vmatpush.msra.mxu0 %v301
        %361 = vmatpush.msra.mxu0 %v300
        %362 = vmatpush.msra.mxu0 %v299
        %363 = vmatmul.f32.gmra.mxu0 %v296
        %v364 = vpop.f32.mrf.mxu0
        %v365 = vadd.f32 0.0, %v364
        %366 = vdwg.mxu0
        %367 = vmatpush.msra.mxu0 %v330
        %368 = vmatpush.msra.mxu0 %v329
        %369 = vmatpush.msra.mxu0 %v328
        %370 = vmatpush.msra.mxu0 %v327
        %371 = vmatpush.msra.mxu0 %v326
        %372 = vmatpush.msra.mxu0 %v325
        %373 = vmatpush.msra.mxu0 %v324
        %374 = vmatpush.msra.mxu0 %v323
        %375 = vmatpush.msra.mxu0 %v322
        %376 = vmatpush.msra.mxu0 %v321
        %377 = vmatpush.msra.mxu0 %v320
        %378 = vmatpush.msra.mxu0 %v319
        %379 = vmatpush.msra.mxu0 %v318
        %380 = vmatpush.msra.mxu0 %v317
        %381 = vmatpush.msra.mxu0 %v316
        %382 = vmatpush.msra.mxu0 %v315
        %383 = vmatmul.f32.gmra.mxu0 %v297
        %v384 = vpop.f32.mrf.mxu0
        %v385 = vadd.f32 %v365, %v384
        %386 = vdwg.mxu0
        %387 = vmatpush.msra.mxu0 %v346
        %388 = vmatpush.msra.mxu0 %v345
        %389 = vmatpush.msra.mxu0 %v344
        %390 = vmatpush.msra.mxu0 %v343
        %391 = vmatpush.msra.mxu0 %v342
        %392 = vmatpush.msra.mxu0 %v341
        %393 = vmatpush.msra.mxu0 %v340
        %394 = vmatpush.msra.mxu0 %v339
        %395 = vmatpush.msra.mxu0 %v338
        %396 = vmatpush.msra.mxu0 %v337
        %397 = vmatpush.msra.mxu0 %v336
        %398 = vmatpush.msra.mxu0 %v335
        %399 = vmatpush.msra.mxu0 %v334
        %400 = vmatpush.msra.mxu0 %v333
        %401 = vmatpush.msra.mxu0 %v332
        %402 = vmatpush.msra.mxu0 %v331
        %403 = vmatmul.f32.gmra.mxu0 %v298
        %v404 = vpop.f32.mrf.mxu0
        %v405 = vadd.f32 %v385, %v404
        %406 = vdwg.mxu0
        %407 = vst [vmem:[%s282] sm:$0xff] %v405
        %v408 = vld [vmem:[#allocation4] sm:$0xff]
        %v409 = vand.u32 2147483647, %v405
        %v410 = vadd.f32 %v408, %v409
        %411 = vst [vmem:[#allocation4] sm:$0xff] %v410
        %v412 = vld [vmem:[#allocation3] sm:$0xff]
        %v413 = vld [vmem:[%s238] sm:$0xff]
        %v414 = vand.u32 2147483647, %v413
        %v415 = vadd.f32 %v412, %v414
        %416 = vst [vmem:[#allocation3] sm:$0xff] %v415
        %v417 = vld [vmem:[#allocation5] sm:$0xff]
        %v418 = vld [vmem:[%s248] sm:$0xff]
        %v419 = vand.u32 2147483647, %v418
        %v420 = vadd.f32 %v417, %v419
        %421 = vst [vmem:[#allocation5] sm:$0xff] %v420
        %v422 = vld [vmem:[%s238] sm:$0xff]
        %v423 = vld [vmem:[%s238 + $0x8] sm:$0xff]
        %v424 = vld [vmem:[%s238 + $0x10] sm:$0xff]
        %v425 = vld [vmem:[#allocation6] sm:$0xff]
        %v426 = vld [vmem:[#allocation6 + $0x8] sm:$0xff]
        %v427 = vld [vmem:[#allocation6 + $0x10] sm:$0xff]
        %v428 = vld [vmem:[#allocation6 + $0x18] sm:$0xff]
        %v429 = vld [vmem:[#allocation6 + $0x20] sm:$0xff]
        %v430 = vld [vmem:[#allocation6 + $0x28] sm:$0xff]
        %v431 = vld [vmem:[#allocation6 + $0x30] sm:$0xff]
        %v432 = vld [vmem:[#allocation6 + $0x38] sm:$0xff]
        %v433 = vld [vmem:[#allocation6 + $0x40] sm:$0xff]
        %v434 = vld [vmem:[#allocation6 + $0x48] sm:$0xff]
        %v435 = vld [vmem:[#allocation6 + $0x50] sm:$0xff]
        %v436 = vld [vmem:[#allocation6 + $0x58] sm:$0xff]
        %v437 = vld [vmem:[#allocation6 + $0x60] sm:$0xff]
        %v438 = vld [vmem:[#allocation6 + $0x68] sm:$0xff]
        %v439 = vld [vmem:[#allocation6 + $0x70] sm:$0xff]
        %v440 = vld [vmem:[#allocation6 + $0x78] sm:$0xff]
        %v441 = vld [vmem:[#allocation6 + $0x80] sm:$0xff]
        %v442 = vld [vmem:[#allocation6 + $0x88] sm:$0xff]
        %v443 = vld [vmem:[#allocation6 + $0x90] sm:$0xff]
        %v444 = vld [vmem:[#allocation6 + $0x98] sm:$0xff]
        %v445 = vld [vmem:[#allocation6 + $0xa0] sm:$0xff]
        %v446 = vld [vmem:[#allocation6 + $0xa8] sm:$0xff]
        %v447 = vld [vmem:[#allocation6 + $0xb0] sm:$0xff]
        %v448 = vld [vmem:[#allocation6 + $0xb8] sm:$0xff]
        %v449 = vld [vmem:[#allocation6 + $0xc0] sm:$0xff]
        %v450 = vld [vmem:[#allocation6 + $0xc8] sm:$0xff]
        %v451 = vld [vmem:[#allocation6 + $0xd0] sm:$0xff]
        %v452 = vld [vmem:[#allocation6 + $0xd8] sm:$0xff]
        %v453 = vld [vmem:[#allocation6 + $0xe0] sm:$0xff]
        %v454 = vld [vmem:[#allocation6 + $0xe8] sm:$0xff]
        %v455 = vld [vmem:[#allocation6 + $0xf0] sm:$0xff]
        %v456 = vld [vmem:[#allocation6 + $0xf8] sm:$0xff]
        %v457 = vld [vmem:[#allocation6 + $0x100] sm:$0xff]
        %v458 = vld [vmem:[#allocation6 + $0x108] sm:$0xff]
        %v459 = vld [vmem:[#allocation6 + $0x110] sm:$0xff]
        %v460 = vld [vmem:[#allocation6 + $0x118] sm:$0xff]
        %v461 = vld [vmem:[#allocation6 + $0x120] sm:$0xff]
        %v462 = vld [vmem:[#allocation6 + $0x128] sm:$0xff]
        %v463 = vld [vmem:[#allocation6 + $0x130] sm:$0xff]
        %v464 = vld [vmem:[#allocation6 + $0x138] sm:$0xff]
        %v465 = vld [vmem:[#allocation6 + $0x140] sm:$0xff]
        %v466 = vld [vmem:[#allocation6 + $0x148] sm:$0xff]
        %v467 = vld [vmem:[#allocation6 + $0x150] sm:$0xff]
        %v468 = vld [vmem:[#allocation6 + $0x158] sm:$0xff]
        %v469 = vld [vmem:[#allocation6 + $0x160] sm:$0xff]
        %v470 = vld [vmem:[#allocation6 + $0x168] sm:$0xff]
        %v471 = vld [vmem:[#allocation6 + $0x170] sm:$0xff]
        %v472 = vld [vmem:[#allocation6 + $0x178] sm:$0xff]
        %473 = vmatpush.msra.mxu0 %v440
        %474 = vmatpush.msra.mxu0 %v439
        %475 = vmatpush.msra.mxu0 %v438
        %476 = vmatpush.msra.mxu0 %v437
        %477 = vmatpush.msra.mxu0 %v436
        %478 = vmatpush.msra.mxu0 %v435
        %479 = vmatpush.msra.mxu0 %v434
        %480 = vmatpush.msra.mxu0 %v433
        %481 = vmatpush.msra.mxu0 %v432
        %482 = vmatpush.msra.mxu0 %v431
        %483 = vmatpush.msra.mxu0 %v430
        %484 = vmatpush.msra.mxu0 %v429
        %485 = vmatpush.msra.mxu0 %v428
        %486 = vmatpush.msra.mxu0 %v427
        %487 = vmatpush.msra.mxu0 %v426
        %488 = vmatpush.msra.mxu0 %v425
        %489 = vmatmul.f32.gmra.mxu0 %v422
        %v490 = vpop.f32.mrf.mxu0
        %v491 = vadd.f32 0.0, %v490
        %492 = vdwg.mxu0
        %493 = vmatpush.msra.mxu0 %v456
        %494 = vmatpush.msra.mxu0 %v455
        %495 = vmatpush.msra.mxu0 %v454
        %496 = vmatpush.msra.mxu0 %v453
        %497 = vmatpush.msra.mxu0 %v452
        %498 = vmatpush.msra.mxu0 %v451
        %499 = vmatpush.msra.mxu0 %v450
        %500 = vmatpush.msra.mxu0 %v449
        %501 = vmatpush.msra.mxu0 %v448
        %502 = vmatpush.msra.mxu0 %v447
        %503 = vmatpush.msra.mxu0 %v446
        %504 = vmatpush.msra.mxu0 %v445
        %505 = vmatpush.msra.mxu0 %v444
        %506 = vmatpush.msra.mxu0 %v443
        %507 = vmatpush.msra.mxu0 %v442
        %508 = vmatpush.msra.mxu0 %v441
        %509 = vmatmul.f32.gmra.mxu0 %v423
        %v510 = vpop.f32.mrf.mxu0
        %v511 = vadd.f32 %v491, %v510
        %512 = vdwg.mxu0
        %513 = vmatpush.msra.mxu0 %v472
        %514 = vmatpush.msra.mxu0 %v471
        %515 = vmatpush.msra.mxu0 %v470
        %516 = vmatpush.msra.mxu0 %v469
        %517 = vmatpush.msra.mxu0 %v468
        %518 = vmatpush.msra.mxu0 %v467
        %519 = vmatpush.msra.mxu0 %v466
        %520 = vmatpush.msra.mxu0 %v465
        %521 = vmatpush.msra.mxu0 %v464
        %522 = vmatpush.msra.mxu0 %v463
        %523 = vmatpush.msra.mxu0 %v462
        %524 = vmatpush.msra.mxu0 %v461
        %525 = vmatpush.msra.mxu0 %v460
        %526 = vmatpush.msra.mxu0 %v459
        %527 = vmatpush.msra.mxu0 %v458
        %528 = vmatpush.msra.mxu0 %v457
        %529 = vmatmul.f32.gmra.mxu0 %v424
        %v530 = vpop.f32.mrf.mxu0
        %v531 = vadd.f32 %v511, %v530
        %532 = vdwg.mxu0
        %533 = vst [vmem:[%s282 + $0x8] sm:$0xff] %v531
        %v534 = vld [vmem:[#allocation4] sm:$0xff]
        %v535 = vand.u32 2147483647, %v531
        %v536 = vadd.f32 %v534, %v535
        %537 = vst [vmem:[#allocation4] sm:$0xff] %v536
        %v538 = vld [vmem:[#allocation3] sm:$0xff]
        %v539 = vld [vmem:[%s238 + $0x8] sm:$0xff]
        %v540 = vand.u32 2147483647, %v539
        %v541 = vadd.f32 %v538, %v540
        %542 = vst [vmem:[#allocation3] sm:$0xff] %v541
        %v543 = vld [vmem:[#allocation5] sm:$0xff]
        %v544 = vld [vmem:[%s248 + $0x8] sm:$0xff]
        %v545 = vand.u32 2147483647, %v544
        %v546 = vadd.f32 %v543, %v545
        %547 = vst [vmem:[#allocation5] sm:$0xff] %v546
        %v548 = vld [vmem:[%s238 + $0x8] sm:$0xff]
        %v549 = vld [vmem:[%s238 + $0x10] sm:$0xff]
        %v550 = vld [vmem:[%s238 + $0x18] sm:$0xff]
        %v551 = vld [vmem:[#allocation6] sm:$0xff]
        %v552 = vld [vmem:[#allocation6 + $0x8] sm:$0xff]
        %v553 = vld [vmem:[#allocation6 + $0x10] sm:$0xff]
        %v554 = vld [vmem:[#allocation6 + $0x18] sm:$0xff]
        %v555 = vld [vmem:[#allocation6 + $0x20] sm:$0xff]
        %v556 = vld [vmem:[#allocation6 + $0x28] sm:$0xff]
        %v557 = vld [vmem:[#allocation6 + $0x30] sm:$0xff]
        %v558 = vld [vmem:[#allocation6 + $0x38] sm:$0xff]
        %v559 = vld [vmem:[#allocation6 + $0x40] sm:$0xff]
        %v560 = vld [vmem:[#allocation6 + $0x48] sm:$0xff]
        %v561 = vld [vmem:[#allocation6 + $0x50] sm:$0xff]
        %v562 = vld [vmem:[#allocation6 + $0x58] sm:$0xff]
        %v563 = vld [vmem:[#allocation6 + $0x60] sm:$0xff]
        %v564 = vld [vmem:[#allocation6 + $0x68] sm:$0xff]
        %v565 = vld [vmem:[#allocation6 + $0x70] sm:$0xff]
        %v566 = vld [vmem:[#allocation6 + $0x78] sm:$0xff]
        %v567 = vld [vmem:[#allocation6 + $0x80] sm:$0xff]
        %v568 = vld [vmem:[#allocation6 + $0x88] sm:$0xff]
        %v569 = vld [vmem:[#allocation6 + $0x90] sm:$0xff]
        %v570 = vld [vmem:[#allocation6 + $0x98] sm:$0xff]
        %v571 = vld [vmem:[#allocation6 + $0xa0] sm:$0xff]
        %v572 = vld [vmem:[#allocation6 + $0xa8] sm:$0xff]
        %v573 = vld [vmem:[#allocation6 + $0xb0] sm:$0xff]
        %v574 = vld [vmem:[#allocation6 + $0xb8] sm:$0xff]
        %v575 = vld [vmem:[#allocation6 + $0xc0] sm:$0xff]
        %v576 = vld [vmem:[#allocation6 + $0xc8] sm:$0xff]
        %v577 = vld [vmem:[#allocation6 + $0xd0] sm:$0xff]
        %v578 = vld [vmem:[#allocation6 + $0xd8] sm:$0xff]
        %v579 = vld [vmem:[#allocation6 + $0xe0] sm:$0xff]
        %v580 = vld [vmem:[#allocation6 + $0xe8] sm:$0xff]
        %v581 = vld [vmem:[#allocation6 + $0xf0] sm:$0xff]
        %v582 = vld [vmem:[#allocation6 + $0xf8] sm:$0xff]
        %v583 = vld [vmem:[#allocation6 + $0x100] sm:$0xff]
        %v584 = vld [vmem:[#allocation6 + $0x108] sm:$0xff]
        %v585 = vld [vmem:[#allocation6 + $0x110] sm:$0xff]
        %v586 = vld [vmem:[#allocation6 + $0x118] sm:$0xff]
        %v587 = vld [vmem:[#allocation6 + $0x120] sm:$0xff]
        %v588 = vld [vmem:[#allocation6 + $0x128] sm:$0xff]
        %v589 = vld [vmem:[#allocation6 + $0x130] sm:$0xff]
        %v590 = vld [vmem:[#allocation6 + $0x138] sm:$0xff]
        %v591 = vld [vmem:[#allocation6 + $0x140] sm:$0xff]
        %v592 = vld [vmem:[#allocation6 + $0x148] sm:$0xff]
        %v593 = vld [vmem:[#allocation6 + $0x150] sm:$0xff]
        %v594 = vld [vmem:[#allocation6 + $0x158] sm:$0xff]
        %v595 = vld [vmem:[#allocation6 + $0x160] sm:$0xff]
        %v596 = vld [vmem:[#allocation6 + $0x168] sm:$0xff]
        %v597 = vld [vmem:[#allocation6 + $0x170] sm:$0xff]
        %v598 = vld [vmem:[#allocation6 + $0x178] sm:$0xff]
        %599 = vmatpush.msra.mxu0 %v566
        %600 = vmatpush.msra.mxu0 %v565
        %601 = vmatpush.msra.mxu0 %v564
        %602 = vmatpush.msra.mxu0 %v563
        %603 = vmatpush.msra.mxu0 %v562
        %604 = vmatpush.msra.mxu0 %v561
        %605 = vmatpush.msra.mxu0 %v560
        %606 = vmatpush.msra.mxu0 %v559
        %607 = vmatpush.msra.mxu0 %v558
        %608 = vmatpush.msra.mxu0 %v557
        %609 = vmatpush.msra.mxu0 %v556
        %610 = vmatpush.msra.mxu0 %v555
        %611 = vmatpush.msra.mxu0 %v554
        %612 = vmatpush.msra.mxu0 %v553
        %613 = vmatpush.msra.mxu0 %v552
        %614 = vmatpush.msra.mxu0 %v551
        %615 = vmatmul.f32.gmra.mxu0 %v548
        %v616 = vpop.f32.mrf.mxu0
        %v617 = vadd.f32 0.0, %v616
        %618 = vdwg.mxu0
        %619 = vmatpush.msra.mxu0 %v582
        %620 = vmatpush.msra.mxu0 %v581
        %621 = vmatpush.msra.mxu0 %v580
        %622 = vmatpush.msra.mxu0 %v579
        %623 = vmatpush.msra.mxu0 %v578
        %624 = vmatpush.msra.mxu0 %v577
        %625 = vmatpush.msra.mxu0 %v576
        %626 = vmatpush.msra.mxu0 %v575
        %627 = vmatpush.msra.mxu0 %v574
        %628 = vmatpush.msra.mxu0 %v573
        %629 = vmatpush.msra.mxu0 %v572
        %630 = vmatpush.msra.mxu0 %v571
        %631 = vmatpush.msra.mxu0 %v570
        %632 = vmatpush.msra.mxu0 %v569
        %633 = vmatpush.msra.mxu0 %v568
        %634 = vmatpush.msra.mxu0 %v567
        %635 = vmatmul.f32.gmra.mxu0 %v549
        %v636 = vpop.f32.mrf.mxu0
        %v637 = vadd.f32 %v617, %v636
        %638 = vdwg.mxu0
        %639 = vmatpush.msra.mxu0 %v598
        %640 = vmatpush.msra.mxu0 %v597
        %641 = vmatpush.msra.mxu0 %v596
        %642 = vmatpush.msra.mxu0 %v595
        %643 = vmatpush.msra.mxu0 %v594
        %644 = vmatpush.msra.mxu0 %v593
        %645 = vmatpush.msra.mxu0 %v592
        %646 = vmatpush.msra.mxu0 %v591
        %647 = vmatpush.msra.mxu0 %v590
        %648 = vmatpush.msra.mxu0 %v589
        %649 = vmatpush.msra.mxu0 %v588
        %650 = vmatpush.msra.mxu0 %v587
        %651 = vmatpush.msra.mxu0 %v586
        %652 = vmatpush.msra.mxu0 %v585
        %653 = vmatpush.msra.mxu0 %v584
        %654 = vmatpush.msra.mxu0 %v583
        %655 = vmatmul.f32.gmra.mxu0 %v550
        %v656 = vpop.f32.mrf.mxu0
        %v657 = vadd.f32 %v637, %v656
        %658 = vdwg.mxu0
        %659 = vst [vmem:[%s282 + $0x10] sm:$0xff] %v657
        %v660 = vld [vmem:[#allocation4] sm:$0xff]
        %v661 = vand.u32 2147483647, %v657
        %v662 = vadd.f32 %v660, %v661
        %663 = vst [vmem:[#allocation4] sm:$0xff] %v662
        %v664 = vld [vmem:[#allocation3] sm:$0xff]
        %v665 = vld [vmem:[%s238 + $0x10] sm:$0xff]
        %v666 = vand.u32 2147483647, %v665
        %v667 = vadd.f32 %v664, %v666
        %668 = vst [vmem:[#allocation3] sm:$0xff] %v667
        %v669 = vld [vmem:[#allocation5] sm:$0xff]
        %v670 = vld [vmem:[%s248 + $0x10] sm:$0xff]
        %v671 = vand.u32 2147483647, %v670
        %v672 = vadd.f32 %v669, %v671
        %673 = vst [vmem:[#allocation5] sm:$0xff] %v672
        %v674 = vld [vmem:[%s238 + $0x10] sm:$0xff]
        %v675 = vld [vmem:[%s238 + $0x18] sm:$0xff]
        %v676 = vld [vmem:[%s238 + $0x20] sm:$0xff]
        %v677 = vld [vmem:[#allocation6] sm:$0xff]
        %v678 = vld [vmem:[#allocation6 + $0x8] sm:$0xff]
        %v679 = vld [vmem:[#allocation6 + $0x10] sm:$0xff]
        %v680 = vld [vmem:[#allocation6 + $0x18] sm:$0xff]
        %v681 = vld [vmem:[#allocation6 + $0x20] sm:$0xff]
        %v682 = vld [vmem:[#allocation6 + $0x28] sm:$0xff]
        %v683 = vld [vmem:[#allocation6 + $0x30] sm:$0xff]
        %v684 = vld [vmem:[#allocation6 + $0x38] sm:$0xff]
        %v685 = vld [vmem:[#allocation6 + $0x40] sm:$0xff]
        %v686 = vld [vmem:[#allocation6 + $0x48] sm:$0xff]
        %v687 = vld [vmem:[#allocation6 + $0x50] sm:$0xff]
        %v688 = vld [vmem:[#allocation6 + $0x58] sm:$0xff]
        %v689 = vld [vmem:[#allocation6 + $0x60] sm:$0xff]
        %v690 = vld [vmem:[#allocation6 + $0x68] sm:$0xff]
        %v691 = vld [vmem:[#allocation6 + $0x70] sm:$0xff]
        %v692 = vld [vmem:[#allocation6 + $0x78] sm:$0xff]
        %v693 = vld [vmem:[#allocation6 + $0x80] sm:$0xff]
        %v694 = vld [vmem:[#allocation6 + $0x88] sm:$0xff]
        %v695 = vld [vmem:[#allocation6 + $0x90] sm:$0xff]
        %v696 = vld [vmem:[#allocation6 + $0x98] sm:$0xff]
        %v697 = vld [vmem:[#allocation6 + $0xa0] sm:$0xff]
        %v698 = vld [vmem:[#allocation6 + $0xa8] sm:$0xff]
        %v699 = vld [vmem:[#allocation6 + $0xb0] sm:$0xff]
        %v700 = vld [vmem:[#allocation6 + $0xb8] sm:$0xff]
        %v701 = vld [vmem:[#allocation6 + $0xc0] sm:$0xff]
        %v702 = vld [vmem:[#allocation6 + $0xc8] sm:$0xff]
        %v703 = vld [vmem:[#allocation6 + $0xd0] sm:$0xff]
        %v704 = vld [vmem:[#allocation6 + $0xd8] sm:$0xff]
        %v705 = vld [vmem:[#allocation6 + $0xe0] sm:$0xff]
        %v706 = vld [vmem:[#allocation6 + $0xe8] sm:$0xff]
        %v707 = vld [vmem:[#allocation6 + $0xf0] sm:$0xff]
        %v708 = vld [vmem:[#allocation6 + $0xf8] sm:$0xff]
        %v709 = vld [vmem:[#allocation6 + $0x100] sm:$0xff]
        %v710 = vld [vmem:[#allocation6 + $0x108] sm:$0xff]
        %v711 = vld [vmem:[#allocation6 + $0x110] sm:$0xff]
        %v712 = vld [vmem:[#allocation6 + $0x118] sm:$0xff]
        %v713 = vld [vmem:[#allocation6 + $0x120] sm:$0xff]
        %v714 = vld [vmem:[#allocation6 + $0x128] sm:$0xff]
        %v715 = vld [vmem:[#allocation6 + $0x130] sm:$0xff]
        %v716 = vld [vmem:[#allocation6 + $0x138] sm:$0xff]
        %v717 = vld [vmem:[#allocation6 + $0x140] sm:$0xff]
        %v718 = vld [vmem:[#allocation6 + $0x148] sm:$0xff]
        %v719 = vld [vmem:[#allocation6 + $0x150] sm:$0xff]
        %v720 = vld [vmem:[#allocation6 + $0x158] sm:$0xff]
        %v721 = vld [vmem:[#allocation6 + $0x160] sm:$0xff]
        %v722 = vld [vmem:[#allocation6 + $0x168] sm:$0xff]
        %v723 = vld [vmem:[#allocation6 + $0x170] sm:$0xff]
        %v724 = vld [vmem:[#allocation6 + $0x178] sm:$0xff]
        %725 = vmatpush.msra.mxu0 %v692
        %726 = vmatpush.msra.mxu0 %v691
        %727 = vmatpush.msra.mxu0 %v690
        %728 = vmatpush.msra.mxu0 %v689
        %729 = vmatpush.msra.mxu0 %v688
        %730 = vmatpush.msra.mxu0 %v687
        %731 = vmatpush.msra.mxu0 %v686
        %732 = vmatpush.msra.mxu0 %v685
        %733 = vmatpush.msra.mxu0 %v684
        %734 = vmatpush.msra.mxu0 %v683
        %735 = vmatpush.msra.mxu0 %v682
        %736 = vmatpush.msra.mxu0 %v681
        %737 = vmatpush.msra.mxu0 %v680
        %738 = vmatpush.msra.mxu0 %v679
        %739 = vmatpush.msra.mxu0 %v678
        %740 = vmatpush.msra.mxu0 %v677
        %741 = vmatmul.f32.gmra.mxu0 %v674
        %v742 = vpop.f32.mrf.mxu0
        %v743 = vadd.f32 0.0, %v742
        %744 = vdwg.mxu0
        %745 = vmatpush.msra.mxu0 %v708
        %746 = vmatpush.msra.mxu0 %v707
        %747 = vmatpush.msra.mxu0 %v706
        %748 = vmatpush.msra.mxu0 %v705
        %749 = vmatpush.msra.mxu0 %v704
        %750 = vmatpush.msra.mxu0 %v703
        %751 = vmatpush.msra.mxu0 %v702
        %752 = vmatpush.msra.mxu0 %v701
        %753 = vmatpush.msra.mxu0 %v700
        %754 = vmatpush.msra.mxu0 %v699
        %755 = vmatpush.msra.mxu0 %v698
        %756 = vmatpush.msra.mxu0 %v697
        %757 = vmatpush.msra.mxu0 %v696
        %758 = vmatpush.msra.mxu0 %v695
        %759 = vmatpush.msra.mxu0 %v694
        %760 = vmatpush.msra.mxu0 %v693
        %761 = vmatmul.f32.gmra.mxu0 %v675
        %v762 = vpop.f32.mrf.mxu0
        %v763 = vadd.f32 %v743, %v762
        %764 = vdwg.mxu0
        %765 = vmatpush.msra.mxu0 %v724
        %766 = vmatpush.msra.mxu0 %v723
        %767 = vmatpush.msra.mxu0 %v722
        %768 = vmatpush.msra.mxu0 %v721
        %769 = vmatpush.msra.mxu0 %v720
        %770 = vmatpush.msra.mxu0 %v719
        %771 = vmatpush.msra.mxu0 %v718
        %772 = vmatpush.msra.mxu0 %v717
        %773 = vmatpush.msra.mxu0 %v716
        %774 = vmatpush.msra.mxu0 %v715
        %775 = vmatpush.msra.mxu0 %v714
        %776 = vmatpush.msra.mxu0 %v713
        %777 = vmatpush.msra.mxu0 %v712
        %778 = vmatpush.msra.mxu0 %v711
        %779 = vmatpush.msra.mxu0 %v710
        %780 = vmatpush.msra.mxu0 %v709
        %781 = vmatmul.f32.gmra.mxu0 %v676
        %v782 = vpop.f32.mrf.mxu0
        %v783 = vadd.f32 %v763, %v782
        %784 = vdwg.mxu0
        %785 = vst [vmem:[%s282 + $0x18] sm:$0xff] %v783
        %v786 = vld [vmem:[#allocation4] sm:$0xff]
        %v787 = vand.u32 2147483647, %v783
        %v788 = vadd.f32 %v786, %v787
        %789 = vst [vmem:[#allocation4] sm:$0xff] %v788
        %v790 = vld [vmem:[#allocation3] sm:$0xff]
        %v791 = vld [vmem:[%s238 + $0x18] sm:$0xff]
        %v792 = vand.u32 2147483647, %v791
        %v793 = vadd.f32 %v790, %v792
        %794 = vst [vmem:[#allocation3] sm:$0xff] %v793
        %v795 = vld [vmem:[#allocation5] sm:$0xff]
        %v796 = vld [vmem:[%s248 + $0x18] sm:$0xff]
        %v797 = vand.u32 2147483647, %v796
        %v798 = vadd.f32 %v795, %v797
        %799 = vst [vmem:[#allocation5] sm:$0xff] %v798
        %v800 = vld [vmem:[%s238 + $0x18] sm:$0xff]
        %v801 = vld [vmem:[%s238 + $0x20] sm:$0xff]
        %v802 = vld [vmem:[%s238 + $0x28] sm:$0xff]
        %v803 = vld [vmem:[#allocation6] sm:$0xff]
        %v804 = vld [vmem:[#allocation6 + $0x8] sm:$0xff]
        %v805 = vld [vmem:[#allocation6 + $0x10] sm:$0xff]
        %v806 = vld [vmem:[#allocation6 + $0x18] sm:$0xff]
        %v807 = vld [vmem:[#allocation6 + $0x20] sm:$0xff]
        %v808 = vld [vmem:[#allocation6 + $0x28] sm:$0xff]
        %v809 = vld [vmem:[#allocation6 + $0x30] sm:$0xff]
        %v810 = vld [vmem:[#allocation6 + $0x38] sm:$0xff]
        %v811 = vld [vmem:[#allocation6 + $0x40] sm:$0xff]
        %v812 = vld [vmem:[#allocation6 + $0x48] sm:$0xff]
        %v813 = vld [vmem:[#allocation6 + $0x50] sm:$0xff]
        %v814 = vld [vmem:[#allocation6 + $0x58] sm:$0xff]
        %v815 = vld [vmem:[#allocation6 + $0x60] sm:$0xff]
        %v816 = vld [vmem:[#allocation6 + $0x68] sm:$0xff]
        %v817 = vld [vmem:[#allocation6 + $0x70] sm:$0xff]
        %v818 = vld [vmem:[#allocation6 + $0x78] sm:$0xff]
        %v819 = vld [vmem:[#allocation6 + $0x80] sm:$0xff]
        %v820 = vld [vmem:[#allocation6 + $0x88] sm:$0xff]
        %v821 = vld [vmem:[#allocation6 + $0x90] sm:$0xff]
        %v822 = vld [vmem:[#allocation6 + $0x98] sm:$0xff]
        %v823 = vld [vmem:[#allocation6 + $0xa0] sm:$0xff]
        %v824 = vld [vmem:[#allocation6 + $0xa8] sm:$0xff]
        %v825 = vld [vmem:[#allocation6 + $0xb0] sm:$0xff]
        %v826 = vld [vmem:[#allocation6 + $0xb8] sm:$0xff]
        %v827 = vld [vmem:[#allocation6 + $0xc0] sm:$0xff]
        %v828 = vld [vmem:[#allocation6 + $0xc8] sm:$0xff]
        %v829 = vld [vmem:[#allocation6 + $0xd0] sm:$0xff]
        %v830 = vld [vmem:[#allocation6 + $0xd8] sm:$0xff]
        %v831 = vld [vmem:[#allocation6 + $0xe0] sm:$0xff]
        %v832 = vld [vmem:[#allocation6 + $0xe8] sm:$0xff]
        %v833 = vld [vmem:[#allocation6 + $0xf0] sm:$0xff]
        %v834 = vld [vmem:[#allocation6 + $0xf8] sm:$0xff]
        %v835 = vld [vmem:[#allocation6 + $0x100] sm:$0xff]
        %v836 = vld [vmem:[#allocation6 + $0x108] sm:$0xff]
        %v837 = vld [vmem:[#allocation6 + $0x110] sm:$0xff]
        %v838 = vld [vmem:[#allocation6 + $0x118] sm:$0xff]
        %v839 = vld [vmem:[#allocation6 + $0x120] sm:$0xff]
        %v840 = vld [vmem:[#allocation6 + $0x128] sm:$0xff]
        %v841 = vld [vmem:[#allocation6 + $0x130] sm:$0xff]
        %v842 = vld [vmem:[#allocation6 + $0x138] sm:$0xff]
        %v843 = vld [vmem:[#allocation6 + $0x140] sm:$0xff]
        %v844 = vld [vmem:[#allocation6 + $0x148] sm:$0xff]
        %v845 = vld [vmem:[#allocation6 + $0x150] sm:$0xff]
        %v846 = vld [vmem:[#allocation6 + $0x158] sm:$0xff]
        %v847 = vld [vmem:[#allocation6 + $0x160] sm:$0xff]
        %v848 = vld [vmem:[#allocation6 + $0x168] sm:$0xff]
        %v849 = vld [vmem:[#allocation6 + $0x170] sm:$0xff]
        %v850 = vld [vmem:[#allocation6 + $0x178] sm:$0xff]
        %851 = vmatpush.msra.mxu0 %v818
        %852 = vmatpush.msra.mxu0 %v817
        %853 = vmatpush.msra.mxu0 %v816
        %854 = vmatpush.msra.mxu0 %v815
        %855 = vmatpush.msra.mxu0 %v814
        %856 = vmatpush.msra.mxu0 %v813
        %857 = vmatpush.msra.mxu0 %v812
        %858 = vmatpush.msra.mxu0 %v811
        %859 = vmatpush.msra.mxu0 %v810
        %860 = vmatpush.msra.mxu0 %v809
        %861 = vmatpush.msra.mxu0 %v808
        %862 = vmatpush.msra.mxu0 %v807
        %863 = vmatpush.msra.mxu0 %v806
        %864 = vmatpush.msra.mxu0 %v805
        %865 = vmatpush.msra.mxu0 %v804
        %866 = vmatpush.msra.mxu0 %v803
        %867 = vmatmul.f32.gmra.mxu0 %v800
        %v868 = vpop.f32.mrf.mxu0
        %v869 = vadd.f32 0.0, %v868
        %870 = vdwg.mxu0
        %871 = vmatpush.msra.mxu0 %v834
        %872 = vmatpush.msra.mxu0 %v833
        %873 = vmatpush.msra.mxu0 %v832
        %874 = vmatpush.msra.mxu0 %v831
        %875 = vmatpush.msra.mxu0 %v830
        %876 = vmatpush.msra.mxu0 %v829
        %877 = vmatpush.msra.mxu0 %v828
        %878 = vmatpush.msra.mxu0 %v827
        %879 = vmatpush.msra.mxu0 %v826
        %880 = vmatpush.msra.mxu0 %v825
        %881 = vmatpush.msra.mxu0 %v824
        %882 = vmatpush.msra.mxu0 %v823
        %883 = vmatpush.msra.mxu0 %v822
        %884 = vmatpush.msra.mxu0 %v821
        %885 = vmatpush.msra.mxu0 %v820
        %886 = vmatpush.msra.mxu0 %v819
        %887 = vmatmul.f32.gmra.mxu0 %v801
        %v888 = vpop.f32.mrf.mxu0
        %v889 = vadd.f32 %v869, %v888
        %890 = vdwg.mxu0
        %891 = vmatpush.msra.mxu0 %v850
        %892 = vmatpush.msra.mxu0 %v849
        %893 = vmatpush.msra.mxu0 %v848
        %894 = vmatpush.msra.mxu0 %v847
        %895 = vmatpush.msra.mxu0 %v846
        %896 = vmatpush.msra.mxu0 %v845
        %897 = vmatpush.msra.mxu0 %v844
        %898 = vmatpush.msra.mxu0 %v843
        %899 = vmatpush.msra.mxu0 %v842
        %900 = vmatpush.msra.mxu0 %v841
        %901 = vmatpush.msra.mxu0 %v840
        %902 = vmatpush.msra.mxu0 %v839
        %903 = vmatpush.msra.mxu0 %v838
        %904 = vmatpush.msra.mxu0 %v837
        %905 = vmatpush.msra.mxu0 %v836
        %906 = vmatpush.msra.mxu0 %v835
        %907 = vmatmul.f32.gmra.mxu0 %v802
        %v908 = vpop.f32.mrf.mxu0
        %v909 = vadd.f32 %v889, %v908
        %910 = vdwg.mxu0
        %911 = vst [vmem:[%s282 + $0x20] sm:$0xff] %v909
        %v912 = vld [vmem:[#allocation4] sm:$0xff]
        %v913 = vand.u32 2147483647, %v909
        %v914 = vadd.f32 %v912, %v913
        %915 = vst [vmem:[#allocation4] sm:$0xff] %v914
        %v916 = vld [vmem:[#allocation3] sm:$0xff]
        %v917 = vld [vmem:[%s238 + $0x20] sm:$0xff]
        %v918 = vand.u32 2147483647, %v917
        %v919 = vadd.f32 %v916, %v918
        %920 = vst [vmem:[#allocation3] sm:$0xff] %v919
        %v921 = vld [vmem:[#allocation5] sm:$0xff]
        %v922 = vld [vmem:[%s248 + $0x20] sm:$0xff]
        %v923 = vand.u32 2147483647, %v922
        %v924 = vadd.f32 %v921, %v923
        %925 = vst [vmem:[#allocation5] sm:$0xff] %v924
        %v926 = vld [vmem:[%s238 + $0x20] sm:$0xff]
        %v927 = vld [vmem:[%s238 + $0x28] sm:$0xff]
        %v928 = vld [vmem:[%s238 + $0x30] sm:$0xff]
        %v929 = vld [vmem:[#allocation6] sm:$0xff]
        %v930 = vld [vmem:[#allocation6 + $0x8] sm:$0xff]
        %v931 = vld [vmem:[#allocation6 + $0x10] sm:$0xff]
        %v932 = vld [vmem:[#allocation6 + $0x18] sm:$0xff]
        %v933 = vld [vmem:[#allocation6 + $0x20] sm:$0xff]
        %v934 = vld [vmem:[#allocation6 + $0x28] sm:$0xff]
        %v935 = vld [vmem:[#allocation6 + $0x30] sm:$0xff]
        %v936 = vld [vmem:[#allocation6 + $0x38] sm:$0xff]
        %v937 = vld [vmem:[#allocation6 + $0x40] sm:$0xff]
        %v938 = vld [vmem:[#allocation6 + $0x48] sm:$0xff]
        %v939 = vld [vmem:[#allocation6 + $0x50] sm:$0xff]
        %v940 = vld [vmem:[#allocation6 + $0x58] sm:$0xff]
        %v941 = vld [vmem:[#allocation6 + $0x60] sm:$0xff]
        %v942 = vld [vmem:[#allocation6 + $0x68] sm:$0xff]
        %v943 = vld [vmem:[#allocation6 + $0x70] sm:$0xff]
        %v944 = vld [vmem:[#allocation6 + $0x78] sm:$0xff]
        %v945 = vld [vmem:[#allocation6 + $0x80] sm:$0xff]
        %v946 = vld [vmem:[#allocation6 + $0x88] sm:$0xff]
        %v947 = vld [vmem:[#allocation6 + $0x90] sm:$0xff]
        %v948 = vld [vmem:[#allocation6 + $0x98] sm:$0xff]
        %v949 = vld [vmem:[#allocation6 + $0xa0] sm:$0xff]
        %v950 = vld [vmem:[#allocation6 + $0xa8] sm:$0xff]
        %v951 = vld [vmem:[#allocation6 + $0xb0] sm:$0xff]
        %v952 = vld [vmem:[#allocation6 + $0xb8] sm:$0xff]
        %v953 = vld [vmem:[#allocation6 + $0xc0] sm:$0xff]
        %v954 = vld [vmem:[#allocation6 + $0xc8] sm:$0xff]
        %v955 = vld [vmem:[#allocation6 + $0xd0] sm:$0xff]
        %v956 = vld [vmem:[#allocation6 + $0xd8] sm:$0xff]
        %v957 = vld [vmem:[#allocation6 + $0xe0] sm:$0xff]
        %v958 = vld [vmem:[#allocation6 + $0xe8] sm:$0xff]
        %v959 = vld [vmem:[#allocation6 + $0xf0] sm:$0xff]
        %v960 = vld [vmem:[#allocation6 + $0xf8] sm:$0xff]
        %v961 = vld [vmem:[#allocation6 + $0x100] sm:$0xff]
        %v962 = vld [vmem:[#allocation6 + $0x108] sm:$0xff]
        %v963 = vld [vmem:[#allocation6 + $0x110] sm:$0xff]
        %v964 = vld [vmem:[#allocation6 + $0x118] sm:$0xff]
        %v965 = vld [vmem:[#allocation6 + $0x120] sm:$0xff]
        %v966 = vld [vmem:[#allocation6 + $0x128] sm:$0xff]
        %v967 = vld [vmem:[#allocation6 + $0x130] sm:$0xff]
        %v968 = vld [vmem:[#allocation6 + $0x138] sm:$0xff]
        %v969 = vld [vmem:[#allocation6 + $0x140] sm:$0xff]
        %v970 = vld [vmem:[#allocation6 + $0x148] sm:$0xff]
        %v971 = vld [vmem:[#allocation6 + $0x150] sm:$0xff]
        %v972 = vld [vmem:[#allocation6 + $0x158] sm:$0xff]
        %v973 = vld [vmem:[#allocation6 + $0x160] sm:$0xff]
        %v974 = vld [vmem:[#allocation6 + $0x168] sm:$0xff]
        %v975 = vld [vmem:[#allocation6 + $0x170] sm:$0xff]
        %v976 = vld [vmem:[#allocation6 + $0x178] sm:$0xff]
        %977 = vmatpush.msra.mxu0 %v944
        %978 = vmatpush.msra.mxu0 %v943
        %979 = vmatpush.msra.mxu0 %v942
        %980 = vmatpush.msra.mxu0 %v941
        %981 = vmatpush.msra.mxu0 %v940
        %982 = vmatpush.msra.mxu0 %v939
        %983 = vmatpush.msra.mxu0 %v938
        %984 = vmatpush.msra.mxu0 %v937
        %985 = vmatpush.msra.mxu0 %v936
        %986 = vmatpush.msra.mxu0 %v935
        %987 = vmatpush.msra.mxu0 %v934
        %988 = vmatpush.msra.mxu0 %v933
        %989 = vmatpush.msra.mxu0 %v932
        %990 = vmatpush.msra.mxu0 %v931
        %991 = vmatpush.msra.mxu0 %v930
        %992 = vmatpush.msra.mxu0 %v929
        %993 = vmatmul.f32.gmra.mxu0 %v926
        %v994 = vpop.f32.mrf.mxu0
        %v995 = vadd.f32 0.0, %v994
        %996 = vdwg.mxu0
        %997 = vmatpush.msra.mxu0 %v960
        %998 = vmatpush.msra.mxu0 %v959
        %999 = vmatpush.msra.mxu0 %v958
        %1000 = vmatpush.msra.mxu0 %v957
        %1001 = vmatpush.msra.mxu0 %v956
        %1002 = vmatpush.msra.mxu0 %v955
        %1003 = vmatpush.msra.mxu0 %v954
        %1004 = vmatpush.msra.mxu0 %v953
        %1005 = vmatpush.msra.mxu0 %v952
        %1006 = vmatpush.msra.mxu0 %v951
        %1007 = vmatpush.msra.mxu0 %v950
        %1008 = vmatpush.msra.mxu0 %v949
        %1009 = vmatpush.msra.mxu0 %v948
        %1010 = vmatpush.msra.mxu0 %v947
        %1011 = vmatpush.msra.mxu0 %v946
        %1012 = vmatpush.msra.mxu0 %v945
        %1013 = vmatmul.f32.gmra.mxu0 %v927
        %v1014 = vpop.f32.mrf.mxu0
        %v1015 = vadd.f32 %v995, %v1014
        %1016 = vdwg.mxu0
        %1017 = vmatpush.msra.mxu0 %v976
        %1018 = vmatpush.msra.mxu0 %v975
        %1019 = vmatpush.msra.mxu0 %v974
        %1020 = vmatpush.msra.mxu0 %v973
        %1021 = vmatpush.msra.mxu0 %v972
        %1022 = vmatpush.msra.mxu0 %v971
        %1023 = vmatpush.msra.mxu0 %v970
        %1024 = vmatpush.msra.mxu0 %v969
        %1025 = vmatpush.msra.mxu0 %v968
        %1026 = vmatpush.msra.mxu0 %v967
        %1027 = vmatpush.msra.mxu0 %v966
        %1028 = vmatpush.msra.mxu0 %v965
        %1029 = vmatpush.msra.mxu0 %v964
        %1030 = vmatpush.msra.mxu0 %v963
        %1031 = vmatpush.msra.mxu0 %v962
        %1032 = vmatpush.msra.mxu0 %v961
        %1033 = vmatmul.f32.gmra.mxu0 %v928
        %v1034 = vpop.f32.mrf.mxu0
        %v1035 = vadd.f32 %v1015, %v1034
        %1036 = vdwg.mxu0
        %1037 = vst [vmem:[%s282 + $0x28] sm:$0xff] %v1035
        %v1038 = vld [vmem:[#allocation4] sm:$0xff]
        %v1039 = vand.u32 2147483647, %v1035
        %v1040 = vadd.f32 %v1038, %v1039
        %1041 = vst [vmem:[#allocation4] sm:$0xff] %v1040
        %v1042 = vld [vmem:[#allocation3] sm:$0xff]
        %v1043 = vld [vmem:[%s238 + $0x28] sm:$0xff]
        %v1044 = vand.u32 2147483647, %v1043
        %v1045 = vadd.f32 %v1042, %v1044
        %1046 = vst [vmem:[#allocation3] sm:$0xff] %v1045
        %v1047 = vld [vmem:[#allocation5] sm:$0xff]
        %v1048 = vld [vmem:[%s248 + $0x28] sm:$0xff]
        %v1049 = vand.u32 2147483647, %v1048
        %v1050 = vadd.f32 %v1047, %v1049
        %1051 = vst [vmem:[#allocation5] sm:$0xff] %v1050
        %v1052 = vld [vmem:[%s238 + $0x28] sm:$0xff]
        %v1053 = vld [vmem:[%s238 + $0x30] sm:$0xff]
        %v1054 = vld [vmem:[%s238 + $0x38] sm:$0xff]
        %v1055 = vld [vmem:[#allocation6] sm:$0xff]
        %v1056 = vld [vmem:[#allocation6 + $0x8] sm:$0xff]
        %v1057 = vld [vmem:[#allocation6 + $0x10] sm:$0xff]
        %v1058 = vld [vmem:[#allocation6 + $0x18] sm:$0xff]
        %v1059 = vld [vmem:[#allocation6 + $0x20] sm:$0xff]
        %v1060 = vld [vmem:[#allocation6 + $0x28] sm:$0xff]
        %v1061 = vld [vmem:[#allocation6 + $0x30] sm:$0xff]
        %v1062 = vld [vmem:[#allocation6 + $0x38] sm:$0xff]
        %v1063 = vld [vmem:[#allocation6 + $0x40] sm:$0xff]
        %v1064 = vld [vmem:[#allocation6 + $0x48] sm:$0xff]
        %v1065 = vld [vmem:[#allocation6 + $0x50] sm:$0xff]
        %v1066 = vld [vmem:[#allocation6 + $0x58] sm:$0xff]
        %v1067 = vld [vmem:[#allocation6 + $0x60] sm:$0xff]
        %v1068 = vld [vmem:[#allocation6 + $0x68] sm:$0xff]
        %v1069 = vld [vmem:[#allocation6 + $0x70] sm:$0xff]
        %v1070 = vld [vmem:[#allocation6 + $0x78] sm:$0xff]
        %v1071 = vld [vmem:[#allocation6 + $0x80] sm:$0xff]
        %v1072 = vld [vmem:[#allocation6 + $0x88] sm:$0xff]
        %v1073 = vld [vmem:[#allocation6 + $0x90] sm:$0xff]
        %v1074 = vld [vmem:[#allocation6 + $0x98] sm:$0xff]
        %v1075 = vld [vmem:[#allocation6 + $0xa0] sm:$0xff]
        %v1076 = vld [vmem:[#allocation6 + $0xa8] sm:$0xff]
        %v1077 = vld [vmem:[#allocation6 + $0xb0] sm:$0xff]
        %v1078 = vld [vmem:[#allocation6 + $0xb8] sm:$0xff]
        %v1079 = vld [vmem:[#allocation6 + $0xc0] sm:$0xff]
        %v1080 = vld [vmem:[#allocation6 + $0xc8] sm:$0xff]
        %v1081 = vld [vmem:[#allocation6 + $0xd0] sm:$0xff]
        %v1082 = vld [vmem:[#allocation6 + $0xd8] sm:$0xff]
        %v1083 = vld [vmem:[#allocation6 + $0xe0] sm:$0xff]
        %v1084 = vld [vmem:[#allocation6 + $0xe8] sm:$0xff]
        %v1085 = vld [vmem:[#allocation6 + $0xf0] sm:$0xff]
        %v1086 = vld [vmem:[#allocation6 + $0xf8] sm:$0xff]
        %v1087 = vld [vmem:[#allocation6 + $0x100] sm:$0xff]
        %v1088 = vld [vmem:[#allocation6 + $0x108] sm:$0xff]
        %v1089 = vld [vmem:[#allocation6 + $0x110] sm:$0xff]
        %v1090 = vld [vmem:[#allocation6 + $0x118] sm:$0xff]
        %v1091 = vld [vmem:[#allocation6 + $0x120] sm:$0xff]
        %v1092 = vld [vmem:[#allocation6 + $0x128] sm:$0xff]
        %v1093 = vld [vmem:[#allocation6 + $0x130] sm:$0xff]
        %v1094 = vld [vmem:[#allocation6 + $0x138] sm:$0xff]
        %v1095 = vld [vmem:[#allocation6 + $0x140] sm:$0xff]
        %v1096 = vld [vmem:[#allocation6 + $0x148] sm:$0xff]
        %v1097 = vld [vmem:[#allocation6 + $0x150] sm:$0xff]
        %v1098 = vld [vmem:[#allocation6 + $0x158] sm:$0xff]
        %v1099 = vld [vmem:[#allocation6 + $0x160] sm:$0xff]
        %v1100 = vld [vmem:[#allocation6 + $0x168] sm:$0xff]
        %v1101 = vld [vmem:[#allocation6 + $0x170] sm:$0xff]
        %v1102 = vld [vmem:[#allocation6 + $0x178] sm:$0xff]
        %1103 = vmatpush.msra.mxu0 %v1070
        %1104 = vmatpush.msra.mxu0 %v1069
        %1105 = vmatpush.msra.mxu0 %v1068
        %1106 = vmatpush.msra.mxu0 %v1067
        %1107 = vmatpush.msra.mxu0 %v1066
        %1108 = vmatpush.msra.mxu0 %v1065
        %1109 = vmatpush.msra.mxu0 %v1064
        %1110 = vmatpush.msra.mxu0 %v1063
        %1111 = vmatpush.msra.mxu0 %v1062
        %1112 = vmatpush.msra.mxu0 %v1061
        %1113 = vmatpush.msra.mxu0 %v1060
        %1114 = vmatpush.msra.mxu0 %v1059
        %1115 = vmatpush.msra.mxu0 %v1058
        %1116 = vmatpush.msra.mxu0 %v1057
        %1117 = vmatpush.msra.mxu0 %v1056
        %1118 = vmatpush.msra.mxu0 %v1055
        %1119 = vmatmul.f32.gmra.mxu0 %v1052
        %v1120 = vpop.f32.mrf.mxu0
        %v1121 = vadd.f32 0.0, %v1120
        %1122 = vdwg.mxu0
        %1123 = vmatpush.msra.mxu0 %v1086
        %1124 = vmatpush.msra.mxu0 %v1085
        %1125 = vmatpush.msra.mxu0 %v1084
        %1126 = vmatpush.msra.mxu0 %v1083
        %1127 = vmatpush.msra.mxu0 %v1082
        %1128 = vmatpush.msra.mxu0 %v1081
        %1129 = vmatpush.msra.mxu0 %v1080
        %1130 = vmatpush.msra.mxu0 %v1079
        %1131 = vmatpush.msra.mxu0 %v1078
        %1132 = vmatpush.msra.mxu0 %v1077
        %1133 = vmatpush.msra.mxu0 %v1076
        %1134 = vmatpush.msra.mxu0 %v1075
        %1135 = vmatpush.msra.mxu0 %v1074
        %1136 = vmatpush.msra.mxu0 %v1073
        %1137 = vmatpush.msra.mxu0 %v1072
        %1138 = vmatpush.msra.mxu0 %v1071
        %1139 = vmatmul.f32.gmra.mxu0 %v1053
        %v1140 = vpop.f32.mrf.mxu0
        %v1141 = vadd.f32 %v1121, %v1140
        %1142 = vdwg.mxu0
        %1143 = vmatpush.msra.mxu0 %v1102
        %1144 = vmatpush.msra.mxu0 %v1101
        %1145 = vmatpush.msra.mxu0 %v1100
        %1146 = vmatpush.msra.mxu0 %v1099
        %1147 = vmatpush.msra.mxu0 %v1098
        %1148 = vmatpush.msra.mxu0 %v1097
        %1149 = vmatpush.msra.mxu0 %v1096
        %1150 = vmatpush.msra.mxu0 %v1095
        %1151 = vmatpush.msra.mxu0 %v1094
        %1152 = vmatpush.msra.mxu0 %v1093
        %1153 = vmatpush.msra.mxu0 %v1092
        %1154 = vmatpush.msra.mxu0 %v1091
        %1155 = vmatpush.msra.mxu0 %v1090
        %1156 = vmatpush.msra.mxu0 %v1089
        %1157 = vmatpush.msra.mxu0 %v1088
        %1158 = vmatpush.msra.mxu0 %v1087
        %1159 = vmatmul.f32.gmra.mxu0 %v1054
        %v1160 = vpop.f32.mrf.mxu0
        %v1161 = vadd.f32 %v1141, %v1160
        %1162 = vdwg.mxu0
        %1163 = vst [vmem:[%s282 + $0x30] sm:$0xff] %v1161
        %v1164 = vld [vmem:[#allocation4] sm:$0xff]
        %v1165 = vand.u32 2147483647, %v1161
        %v1166 = vadd.f32 %v1164, %v1165
        %1167 = vst [vmem:[#allocation4] sm:$0xff] %v1166
        %v1168 = vld [vmem:[#allocation3] sm:$0xff]
        %v1169 = vld [vmem:[%s238 + $0x30] sm:$0xff]
        %v1170 = vand.u32 2147483647, %v1169
        %v1171 = vadd.f32 %v1168, %v1170
        %1172 = vst [vmem:[#allocation3] sm:$0xff] %v1171
        %v1173 = vld [vmem:[#allocation5] sm:$0xff]
        %v1174 = vld [vmem:[%s248 + $0x30] sm:$0xff]
        %v1175 = vand.u32 2147483647, %v1174
        %v1176 = vadd.f32 %v1173, %v1175
        %1177 = vst [vmem:[#allocation5] sm:$0xff] %v1176
        %v1178 = vld [vmem:[%s238 + $0x30] sm:$0xff]
        %v1179 = vld [vmem:[%s238 + $0x38] sm:$0xff]
        %v1180 = vld [vmem:[%s238 + $0x40] sm:$0xff]
        %v1181 = vld [vmem:[#allocation6] sm:$0xff]
        %v1182 = vld [vmem:[#allocation6 + $0x8] sm:$0xff]
        %v1183 = vld [vmem:[#allocation6 + $0x10] sm:$0xff]
        %v1184 = vld [vmem:[#allocation6 + $0x18] sm:$0xff]
        %v1185 = vld [vmem:[#allocation6 + $0x20] sm:$0xff]
        %v1186 = vld [vmem:[#allocation6 + $0x28] sm:$0xff]
        %v1187 = vld [vmem:[#allocation6 + $0x30] sm:$0xff]
        %v1188 = vld [vmem:[#allocation6 + $0x38] sm:$0xff]
        %v1189 = vld [vmem:[#allocation6 + $0x40] sm:$0xff]
        %v1190 = vld [vmem:[#allocation6 + $0x48] sm:$0xff]
        %v1191 = vld [vmem:[#allocation6 + $0x50] sm:$0xff]
        %v1192 = vld [vmem:[#allocation6 + $0x58] sm:$0xff]
        %v1193 = vld [vmem:[#allocation6 + $0x60] sm:$0xff]
        %v1194 = vld [vmem:[#allocation6 + $0x68] sm:$0xff]
        %v1195 = vld [vmem:[#allocation6 + $0x70] sm:$0xff]
        %v1196 = vld [vmem:[#allocation6 + $0x78] sm:$0xff]
        %v1197 = vld [vmem:[#allocation6 + $0x80] sm:$0xff]
        %v1198 = vld [vmem:[#allocation6 + $0x88] sm:$0xff]
        %v1199 = vld [vmem:[#allocation6 + $0x90] sm:$0xff]
        %v1200 = vld [vmem:[#allocation6 + $0x98] sm:$0xff]
        %v1201 = vld [vmem:[#allocation6 + $0xa0] sm:$0xff]
        %v1202 = vld [vmem:[#allocation6 + $0xa8] sm:$0xff]
        %v1203 = vld [vmem:[#allocation6 + $0xb0] sm:$0xff]
        %v1204 = vld [vmem:[#allocation6 + $0xb8] sm:$0xff]
        %v1205 = vld [vmem:[#allocation6 + $0xc0] sm:$0xff]
        %v1206 = vld [vmem:[#allocation6 + $0xc8] sm:$0xff]
        %v1207 = vld [vmem:[#allocation6 + $0xd0] sm:$0xff]
        %v1208 = vld [vmem:[#allocation6 + $0xd8] sm:$0xff]
        %v1209 = vld [vmem:[#allocation6 + $0xe0] sm:$0xff]
        %v1210 = vld [vmem:[#allocation6 + $0xe8] sm:$0xff]
        %v1211 = vld [vmem:[#allocation6 + $0xf0] sm:$0xff]
        %v1212 = vld [vmem:[#allocation6 + $0xf8] sm:$0xff]
        %v1213 = vld [vmem:[#allocation6 + $0x100] sm:$0xff]
        %v1214 = vld [vmem:[#allocation6 + $0x108] sm:$0xff]
        %v1215 = vld [vmem:[#allocation6 + $0x110] sm:$0xff]
        %v1216 = vld [vmem:[#allocation6 + $0x118] sm:$0xff]
        %v1217 = vld [vmem:[#allocation6 + $0x120] sm:$0xff]
        %v1218 = vld [vmem:[#allocation6 + $0x128] sm:$0xff]
        %v1219 = vld [vmem:[#allocation6 + $0x130] sm:$0xff]
        %v1220 = vld [vmem:[#allocation6 + $0x138] sm:$0xff]
        %v1221 = vld [vmem:[#allocation6 + $0x140] sm:$0xff]
        %v1222 = vld [vmem:[#allocation6 + $0x148] sm:$0xff]
        %v1223 = vld [vmem:[#allocation6 + $0x150] sm:$0xff]
        %v1224 = vld [vmem:[#allocation6 + $0x158] sm:$0xff]
        %v1225 = vld [vmem:[#allocation6 + $0x160] sm:$0xff]
        %v1226 = vld [vmem:[#allocation6 + $0x168] sm:$0xff]
        %v1227 = vld [vmem:[#allocation6 + $0x170] sm:$0xff]
        %v1228 = vld [vmem:[#allocation6 + $0x178] sm:$0xff]
        %1229 = vmatpush.msra.mxu0 %v1196
        %1230 = vmatpush.msra.mxu0 %v1195
        %1231 = vmatpush.msra.mxu0 %v1194
        %1232 = vmatpush.msra.mxu0 %v1193
        %1233 = vmatpush.msra.mxu0 %v1192
        %1234 = vmatpush.msra.mxu0 %v1191
        %1235 = vmatpush.msra.mxu0 %v1190
        %1236 = vmatpush.msra.mxu0 %v1189
        %1237 = vmatpush.msra.mxu0 %v1188
        %1238 = vmatpush.msra.mxu0 %v1187
        %1239 = vmatpush.msra.mxu0 %v1186
        %1240 = vmatpush.msra.mxu0 %v1185
        %1241 = vmatpush.msra.mxu0 %v1184
        %1242 = vmatpush.msra.mxu0 %v1183
        %1243 = vmatpush.msra.mxu0 %v1182
        %1244 = vmatpush.msra.mxu0 %v1181
        %1245 = vmatmul.f32.gmra.mxu0 %v1178
        %v1246 = vpop.f32.mrf.mxu0
        %v1247 = vadd.f32 0.0, %v1246
        %1248 = vdwg.mxu0
        %1249 = vmatpush.msra.mxu0 %v1212
        %1250 = vmatpush.msra.mxu0 %v1211
        %1251 = vmatpush.msra.mxu0 %v1210
        %1252 = vmatpush.msra.mxu0 %v1209
        %1253 = vmatpush.msra.mxu0 %v1208
        %1254 = vmatpush.msra.mxu0 %v1207
        %1255 = vmatpush.msra.mxu0 %v1206
        %1256 = vmatpush.msra.mxu0 %v1205
        %1257 = vmatpush.msra.mxu0 %v1204
        %1258 = vmatpush.msra.mxu0 %v1203
        %1259 = vmatpush.msra.mxu0 %v1202
        %1260 = vmatpush.msra.mxu0 %v1201
        %1261 = vmatpush.msra.mxu0 %v1200
        %1262 = vmatpush.msra.mxu0 %v1199
        %1263 = vmatpush.msra.mxu0 %v1198
        %1264 = vmatpush.msra.mxu0 %v1197
        %1265 = vmatmul.f32.gmra.mxu0 %v1179
        %v1266 = vpop.f32.mrf.mxu0
        %v1267 = vadd.f32 %v1247, %v1266
        %1268 = vdwg.mxu0
        %1269 = vmatpush.msra.mxu0 %v1228
        %1270 = vmatpush.msra.mxu0 %v1227
        %1271 = vmatpush.msra.mxu0 %v1226
        %1272 = vmatpush.msra.mxu0 %v1225
        %1273 = vmatpush.msra.mxu0 %v1224
        %1274 = vmatpush.msra.mxu0 %v1223
        %1275 = vmatpush.msra.mxu0 %v1222
        %1276 = vmatpush.msra.mxu0 %v1221
        %1277 = vmatpush.msra.mxu0 %v1220
        %1278 = vmatpush.msra.mxu0 %v1219
        %1279 = vmatpush.msra.mxu0 %v1218
        %1280 = vmatpush.msra.mxu0 %v1217
        %1281 = vmatpush.msra.mxu0 %v1216
        %1282 = vmatpush.msra.mxu0 %v1215
        %1283 = vmatpush.msra.mxu0 %v1214
        %1284 = vmatpush.msra.mxu0 %v1213
        %1285 = vmatmul.f32.gmra.mxu0 %v1180
        %v1286 = vpop.f32.mrf.mxu0
        %v1287 = vadd.f32 %v1267, %v1286
        %1288 = vdwg.mxu0
        %1289 = vst [vmem:[%s282 + $0x38] sm:$0xff] %v1287
        %v1290 = vld [vmem:[#allocation4] sm:$0xff]
        %v1291 = vand.u32 2147483647, %v1287
        %v1292 = vadd.f32 %v1290, %v1291
        %1293 = vst [vmem:[#allocation4] sm:$0xff] %v1292
        %v1294 = vld [vmem:[#allocation3] sm:$0xff]
        %v1295 = vld [vmem:[%s238 + $0x38] sm:$0xff]
        %v1296 = vand.u32 2147483647, %v1295
        %v1297 = vadd.f32 %v1294, %v1296
        %1298 = vst [vmem:[#allocation3] sm:$0xff] %v1297
        %v1299 = vld [vmem:[#allocation5] sm:$0xff]
        %v1300 = vld [vmem:[%s248 + $0x38] sm:$0xff]
        %v1301 = vand.u32 2147483647, %v1300
        %v1302 = vadd.f32 %v1299, %v1301
        %1303 = vst [vmem:[#allocation5] sm:$0xff] %v1302
        %v1304 = vld [vmem:[%s238 + $0x38] sm:$0xff]
        %v1305 = vld [vmem:[%s238 + $0x40] sm:$0xff]
        %v1306 = vld [vmem:[%s238 + $0x48] sm:$0xff]
        %v1307 = vld [vmem:[#allocation6] sm:$0xff]
        %v1308 = vld [vmem:[#allocation6 + $0x8] sm:$0xff]
        %v1309 = vld [vmem:[#allocation6 + $0x10] sm:$0xff]
        %v1310 = vld [vmem:[#allocation6 + $0x18] sm:$0xff]
        %v1311 = vld [vmem:[#allocation6 + $0x20] sm:$0xff]
        %v1312 = vld [vmem:[#allocation6 + $0x28] sm:$0xff]
        %v1313 = vld [vmem:[#allocation6 + $0x30] sm:$0xff]
        %v1314 = vld [vmem:[#allocation6 + $0x38] sm:$0xff]
        %v1315 = vld [vmem:[#allocation6 + $0x40] sm:$0xff]
        %v1316 = vld [vmem:[#allocation6 + $0x48] sm:$0xff]
        %v1317 = vld [vmem:[#allocation6 + $0x50] sm:$0xff]
        %v1318 = vld [vmem:[#allocation6 + $0x58] sm:$0xff]
        %v1319 = vld [vmem:[#allocation6 + $0x60] sm:$0xff]
        %v1320 = vld [vmem:[#allocation6 + $0x68] sm:$0xff]
        %v1321 = vld [vmem:[#allocation6 + $0x70] sm:$0xff]
        %v1322 = vld [vmem:[#allocation6 + $0x78] sm:$0xff]
        %v1323 = vld [vmem:[#allocation6 + $0x80] sm:$0xff]
        %v1324 = vld [vmem:[#allocation6 + $0x88] sm:$0xff]
        %v1325 = vld [vmem:[#allocation6 + $0x90] sm:$0xff]
        %v1326 = vld [vmem:[#allocation6 + $0x98] sm:$0xff]
        %v1327 = vld [vmem:[#allocation6 + $0xa0] sm:$0xff]
        %v1328 = vld [vmem:[#allocation6 + $0xa8] sm:$0xff]
        %v1329 = vld [vmem:[#allocation6 + $0xb0] sm:$0xff]
        %v1330 = vld [vmem:[#allocation6 + $0xb8] sm:$0xff]
        %v1331 = vld [vmem:[#allocation6 + $0xc0] sm:$0xff]
        %v1332 = vld [vmem:[#allocation6 + $0xc8] sm:$0xff]
        %v1333 = vld [vmem:[#allocation6 + $0xd0] sm:$0xff]
        %v1334 = vld [vmem:[#allocation6 + $0xd8] sm:$0xff]
        %v1335 = vld [vmem:[#allocation6 + $0xe0] sm:$0xff]
        %v1336 = vld [vmem:[#allocation6 + $0xe8] sm:$0xff]
        %v1337 = vld [vmem:[#allocation6 + $0xf0] sm:$0xff]
        %v1338 = vld [vmem:[#allocation6 + $0xf8] sm:$0xff]
        %v1339 = vld [vmem:[#allocation6 + $0x100] sm:$0xff]
        %v1340 = vld [vmem:[#allocation6 + $0x108] sm:$0xff]
        %v1341 = vld [vmem:[#allocation6 + $0x110] sm:$0xff]
        %v1342 = vld [vmem:[#allocation6 + $0x118] sm:$0xff]
        %v1343 = vld [vmem:[#allocation6 + $0x120] sm:$0xff]
        %v1344 = vld [vmem:[#allocation6 + $0x128] sm:$0xff]
        %v1345 = vld [vmem:[#allocation6 + $0x130] sm:$0xff]
        %v1346 = vld [vmem:[#allocation6 + $0x138] sm:$0xff]
        %v1347 = vld [vmem:[#allocation6 + $0x140] sm:$0xff]
        %v1348 = vld [vmem:[#allocation6 + $0x148] sm:$0xff]
        %v1349 = vld [vmem:[#allocation6 + $0x150] sm:$0xff]
        %v1350 = vld [vmem:[#allocation6 + $0x158] sm:$0xff]
        %v1351 = vld [vmem:[#allocation6 + $0x160] sm:$0xff]
        %v1352 = vld [vmem:[#allocation6 + $0x168] sm:$0xff]
        %v1353 = vld [vmem:[#allocation6 + $0x170] sm:$0xff]
        %v1354 = vld [vmem:[#allocation6 + $0x178] sm:$0xff]
        %1355 = vmatpush.msra.mxu0 %v1322
        %1356 = vmatpush.msra.mxu0 %v1321
        %1357 = vmatpush.msra.mxu0 %v1320
        %1358 = vmatpush.msra.mxu0 %v1319
        %1359 = vmatpush.msra.mxu0 %v1318
        %1360 = vmatpush.msra.mxu0 %v1317
        %1361 = vmatpush.msra.mxu0 %v1316
        %1362 = vmatpush.msra.mxu0 %v1315
        %1363 = vmatpush.msra.mxu0 %v1314
        %1364 = vmatpush.msra.mxu0 %v1313
        %1365 = vmatpush.msra.mxu0 %v1312
        %1366 = vmatpush.msra.mxu0 %v1311
        %1367 = vmatpush.msra.mxu0 %v1310
        %1368 = vmatpush.msra.mxu0 %v1309
        %1369 = vmatpush.msra.mxu0 %v1308
        %1370 = vmatpush.msra.mxu0 %v1307
        %1371 = vmatmul.f32.gmra.mxu0 %v1304
        %v1372 = vpop.f32.mrf.mxu0
        %v1373 = vadd.f32 0.0, %v1372
        %1374 = vdwg.mxu0
        %1375 = vmatpush.msra.mxu0 %v1338
        %1376 = vmatpush.msra.mxu0 %v1337
        %1377 = vmatpush.msra.mxu0 %v1336
        %1378 = vmatpush.msra.mxu0 %v1335
        %1379 = vmatpush.msra.mxu0 %v1334
        %1380 = vmatpush.msra.mxu0 %v1333
        %1381 = vmatpush.msra.mxu0 %v1332
        %1382 = vmatpush.msra.mxu0 %v1331
        %1383 = vmatpush.msra.mxu0 %v1330
        %1384 = vmatpush.msra.mxu0 %v1329
        %1385 = vmatpush.msra.mxu0 %v1328
        %1386 = vmatpush.msra.mxu0 %v1327
        %1387 = vmatpush.msra.mxu0 %v1326
        %1388 = vmatpush.msra.mxu0 %v1325
        %1389 = vmatpush.msra.mxu0 %v1324
        %1390 = vmatpush.msra.mxu0 %v1323
        %1391 = vmatmul.f32.gmra.mxu0 %v1305
        %v1392 = vpop.f32.mrf.mxu0
        %v1393 = vadd.f32 %v1373, %v1392
        %1394 = vdwg.mxu0
        %1395 = vmatpush.msra.mxu0 %v1354
        %1396 = vmatpush.msra.mxu0 %v1353
        %1397 = vmatpush.msra.mxu0 %v1352
        %1398 = vmatpush.msra.mxu0 %v1351
        %1399 = vmatpush.msra.mxu0 %v1350
        %1400 = vmatpush.msra.mxu0 %v1349
        %1401 = vmatpush.msra.mxu0 %v1348
        %1402 = vmatpush.msra.mxu0 %v1347
        %1403 = vmatpush.msra.mxu0 %v1346
        %1404 = vmatpush.msra.mxu0 %v1345
        %1405 = vmatpush.msra.mxu0 %v1344
        %1406 = vmatpush.msra.mxu0 %v1343
        %1407 = vmatpush.msra.mxu0 %v1342
        %1408 = vmatpush.msra.mxu0 %v1341
        %1409 = vmatpush.msra.mxu0 %v1340
        %1410 = vmatpush.msra.mxu0 %v1339
        %1411 = vmatmul.f32.gmra.mxu0 %v1306
        %v1412 = vpop.f32.mrf.mxu0
        %v1413 = vadd.f32 %v1393, %v1412
        %1414 = vdwg.mxu0
        %1415 = vst [vmem:[%s282 + $0x40] sm:$0xff] %v1413
        %v1416 = vld [vmem:[#allocation4] sm:$0xff]
        %v1417 = vand.u32 2147483647, %v1413
        %v1418 = vadd.f32 %v1416, %v1417
        %1419 = vst [vmem:[#allocation4] sm:$0xff] %v1418
        %v1420 = vld [vmem:[#allocation3] sm:$0xff]
        %v1421 = vld [vmem:[%s238 + $0x40] sm:$0xff]
        %v1422 = vand.u32 2147483647, %v1421
        %v1423 = vadd.f32 %v1420, %v1422
        %1424 = vst [vmem:[#allocation3] sm:$0xff] %v1423
        %v1425 = vld [vmem:[#allocation5] sm:$0xff]
        %v1426 = vld [vmem:[%s248 + $0x40] sm:$0xff]
        %v1427 = vand.u32 2147483647, %v1426
        %v1428 = vadd.f32 %v1425, %v1427
        %1429 = vst [vmem:[#allocation5] sm:$0xff] %v1428
        %v1430 = vld [vmem:[%s238 + $0x40] sm:$0xff]
        %v1431 = vld [vmem:[%s238 + $0x48] sm:$0xff]
        %v1432 = vld [vmem:[%s238 + $0x50] sm:$0xff]
        %v1433 = vld [vmem:[#allocation6] sm:$0xff]
        %v1434 = vld [vmem:[#allocation6 + $0x8] sm:$0xff]
        %v1435 = vld [vmem:[#allocation6 + $0x10] sm:$0xff]
        %v1436 = vld [vmem:[#allocation6 + $0x18] sm:$0xff]
        %v1437 = vld [vmem:[#allocation6 + $0x20] sm:$0xff]
        %v1438 = vld [vmem:[#allocation6 + $0x28] sm:$0xff]
        %v1439 = vld [vmem:[#allocation6 + $0x30] sm:$0xff]
        %v1440 = vld [vmem:[#allocation6 + $0x38] sm:$0xff]
        %v1441 = vld [vmem:[#allocation6 + $0x40] sm:$0xff]
        %v1442 = vld [vmem:[#allocation6 + $0x48] sm:$0xff]
        %v1443 = vld [vmem:[#allocation6 + $0x50] sm:$0xff]
        %v1444 = vld [vmem:[#allocation6 + $0x58] sm:$0xff]
        %v1445 = vld [vmem:[#allocation6 + $0x60] sm:$0xff]
        %v1446 = vld [vmem:[#allocation6 + $0x68] sm:$0xff]
        %v1447 = vld [vmem:[#allocation6 + $0x70] sm:$0xff]
        %v1448 = vld [vmem:[#allocation6 + $0x78] sm:$0xff]
        %v1449 = vld [vmem:[#allocation6 + $0x80] sm:$0xff]
        %v1450 = vld [vmem:[#allocation6 + $0x88] sm:$0xff]
        %v1451 = vld [vmem:[#allocation6 + $0x90] sm:$0xff]
        %v1452 = vld [vmem:[#allocation6 + $0x98] sm:$0xff]
        %v1453 = vld [vmem:[#allocation6 + $0xa0] sm:$0xff]
        %v1454 = vld [vmem:[#allocation6 + $0xa8] sm:$0xff]
        %v1455 = vld [vmem:[#allocation6 + $0xb0] sm:$0xff]
        %v1456 = vld [vmem:[#allocation6 + $0xb8] sm:$0xff]
        %v1457 = vld [vmem:[#allocation6 + $0xc0] sm:$0xff]
        %v1458 = vld [vmem:[#allocation6 + $0xc8] sm:$0xff]
        %v1459 = vld [vmem:[#allocation6 + $0xd0] sm:$0xff]
        %v1460 = vld [vmem:[#allocation6 + $0xd8] sm:$0xff]
        %v1461 = vld [vmem:[#allocation6 + $0xe0] sm:$0xff]
        %v1462 = vld [vmem:[#allocation6 + $0xe8] sm:$0xff]
        %v1463 = vld [vmem:[#allocation6 + $0xf0] sm:$0xff]
        %v1464 = vld [vmem:[#allocation6 + $0xf8] sm:$0xff]
        %v1465 = vld [vmem:[#allocation6 + $0x100] sm:$0xff]
        %v1466 = vld [vmem:[#allocation6 + $0x108] sm:$0xff]
        %v1467 = vld [vmem:[#allocation6 + $0x110] sm:$0xff]
        %v1468 = vld [vmem:[#allocation6 + $0x118] sm:$0xff]
        %v1469 = vld [vmem:[#allocation6 + $0x120] sm:$0xff]
        %v1470 = vld [vmem:[#allocation6 + $0x128] sm:$0xff]
        %v1471 = vld [vmem:[#allocation6 + $0x130] sm:$0xff]
        %v1472 = vld [vmem:[#allocation6 + $0x138] sm:$0xff]
        %v1473 = vld [vmem:[#allocation6 + $0x140] sm:$0xff]
        %v1474 = vld [vmem:[#allocation6 + $0x148] sm:$0xff]
        %v1475 = vld [vmem:[#allocation6 + $0x150] sm:$0xff]
        %v1476 = vld [vmem:[#allocation6 + $0x158] sm:$0xff]
        %v1477 = vld [vmem:[#allocation6 + $0x160] sm:$0xff]
        %v1478 = vld [vmem:[#allocation6 + $0x168] sm:$0xff]
        %v1479 = vld [vmem:[#allocation6 + $0x170] sm:$0xff]
        %v1480 = vld [vmem:[#allocation6 + $0x178] sm:$0xff]
        %1481 = vmatpush.msra.mxu0 %v1448
        %1482 = vmatpush.msra.mxu0 %v1447
        %1483 = vmatpush.msra.mxu0 %v1446
        %1484 = vmatpush.msra.mxu0 %v1445
        %1485 = vmatpush.msra.mxu0 %v1444
        %1486 = vmatpush.msra.mxu0 %v1443
        %1487 = vmatpush.msra.mxu0 %v1442
        %1488 = vmatpush.msra.mxu0 %v1441
        %1489 = vmatpush.msra.mxu0 %v1440
        %1490 = vmatpush.msra.mxu0 %v1439
        %1491 = vmatpush.msra.mxu0 %v1438
        %1492 = vmatpush.msra.mxu0 %v1437
        %1493 = vmatpush.msra.mxu0 %v1436
        %1494 = vmatpush.msra.mxu0 %v1435
        %1495 = vmatpush.msra.mxu0 %v1434
        %1496 = vmatpush.msra.mxu0 %v1433
        %1497 = vmatmul.f32.gmra.mxu0 %v1430
        %v1498 = vpop.f32.mrf.mxu0
        %v1499 = vadd.f32 0.0, %v1498
        %1500 = vdwg.mxu0
        %1501 = vmatpush.msra.mxu0 %v1464
        %1502 = vmatpush.msra.mxu0 %v1463
        %1503 = vmatpush.msra.mxu0 %v1462
        %1504 = vmatpush.msra.mxu0 %v1461
        %1505 = vmatpush.msra.mxu0 %v1460
        %1506 = vmatpush.msra.mxu0 %v1459
        %1507 = vmatpush.msra.mxu0 %v1458
        %1508 = vmatpush.msra.mxu0 %v1457
        %1509 = vmatpush.msra.mxu0 %v1456
        %1510 = vmatpush.msra.mxu0 %v1455
        %1511 = vmatpush.msra.mxu0 %v1454
        %1512 = vmatpush.msra.mxu0 %v1453
        %1513 = vmatpush.msra.mxu0 %v1452
        %1514 = vmatpush.msra.mxu0 %v1451
        %1515 = vmatpush.msra.mxu0 %v1450
        %1516 = vmatpush.msra.mxu0 %v1449
        %1517 = vmatmul.f32.gmra.mxu0 %v1431
        %v1518 = vpop.f32.mrf.mxu0
        %v1519 = vadd.f32 %v1499, %v1518
        %1520 = vdwg.mxu0
        %1521 = vmatpush.msra.mxu0 %v1480
        %1522 = vmatpush.msra.mxu0 %v1479
        %1523 = vmatpush.msra.mxu0 %v1478
        %1524 = vmatpush.msra.mxu0 %v1477
        %1525 = vmatpush.msra.mxu0 %v1476
        %1526 = vmatpush.msra.mxu0 %v1475
        %1527 = vmatpush.msra.mxu0 %v1474
        %1528 = vmatpush.msra.mxu0 %v1473
        %1529 = vmatpush.msra.mxu0 %v1472
        %1530 = vmatpush.msra.mxu0 %v1471
        %1531 = vmatpush.msra.mxu0 %v1470
        %1532 = vmatpush.msra.mxu0 %v1469
        %1533 = vmatpush.msra.mxu0 %v1468
        %1534 = vmatpush.msra.mxu0 %v1467
        %1535 = vmatpush.msra.mxu0 %v1466
        %1536 = vmatpush.msra.mxu0 %v1465
        %1537 = vmatmul.f32.gmra.mxu0 %v1432
        %v1538 = vpop.f32.mrf.mxu0
        %v1539 = vadd.f32 %v1519, %v1538
        %1540 = vdwg.mxu0
        %1541 = vst [vmem:[%s282 + $0x48] sm:$0xff] %v1539
        %v1542 = vld [vmem:[#allocation4] sm:$0xff]
        %v1543 = vand.u32 2147483647, %v1539
        %v1544 = vadd.f32 %v1542, %v1543
        %1545 = vst [vmem:[#allocation4] sm:$0xff] %v1544
        %v1546 = vld [vmem:[#allocation3] sm:$0xff]
        %v1547 = vld [vmem:[%s238 + $0x48] sm:$0xff]
        %v1548 = vand.u32 2147483647, %v1547
        %v1549 = vadd.f32 %v1546, %v1548
        %1550 = vst [vmem:[#allocation3] sm:$0xff] %v1549
        %v1551 = vld [vmem:[#allocation5] sm:$0xff]
        %v1552 = vld [vmem:[%s248 + $0x48] sm:$0xff]
        %v1553 = vand.u32 2147483647, %v1552
        %v1554 = vadd.f32 %v1551, %v1553
        %1555 = vst [vmem:[#allocation5] sm:$0xff] %v1554
        %v1556 = vld [vmem:[%s238 + $0x48] sm:$0xff]
        %v1557 = vld [vmem:[%s238 + $0x50] sm:$0xff]
        %v1558 = vld [vmem:[%s238 + $0x58] sm:$0xff]
        %v1559 = vld [vmem:[#allocation6] sm:$0xff]
        %v1560 = vld [vmem:[#allocation6 + $0x8] sm:$0xff]
        %v1561 = vld [vmem:[#allocation6 + $0x10] sm:$0xff]
        %v1562 = vld [vmem:[#allocation6 + $0x18] sm:$0xff]
        %v1563 = vld [vmem:[#allocation6 + $0x20] sm:$0xff]
        %v1564 = vld [vmem:[#allocation6 + $0x28] sm:$0xff]
        %v1565 = vld [vmem:[#allocation6 + $0x30] sm:$0xff]
        %v1566 = vld [vmem:[#allocation6 + $0x38] sm:$0xff]
        %v1567 = vld [vmem:[#allocation6 + $0x40] sm:$0xff]
        %v1568 = vld [vmem:[#allocation6 + $0x48] sm:$0xff]
        %v1569 = vld [vmem:[#allocation6 + $0x50] sm:$0xff]
        %v1570 = vld [vmem:[#allocation6 + $0x58] sm:$0xff]
        %v1571 = vld [vmem:[#allocation6 + $0x60] sm:$0xff]
        %v1572 = vld [vmem:[#allocation6 + $0x68] sm:$0xff]
        %v1573 = vld [vmem:[#allocation6 + $0x70] sm:$0xff]
        %v1574 = vld [vmem:[#allocation6 + $0x78] sm:$0xff]
        %v1575 = vld [vmem:[#allocation6 + $0x80] sm:$0xff]
        %v1576 = vld [vmem:[#allocation6 + $0x88] sm:$0xff]
        %v1577 = vld [vmem:[#allocation6 + $0x90] sm:$0xff]
        %v1578 = vld [vmem:[#allocation6 + $0x98] sm:$0xff]
        %v1579 = vld [vmem:[#allocation6 + $0xa0] sm:$0xff]
        %v1580 = vld [vmem:[#allocation6 + $0xa8] sm:$0xff]
        %v1581 = vld [vmem:[#allocation6 + $0xb0] sm:$0xff]
        %v1582 = vld [vmem:[#allocation6 + $0xb8] sm:$0xff]
        %v1583 = vld [vmem:[#allocation6 + $0xc0] sm:$0xff]
        %v1584 = vld [vmem:[#allocation6 + $0xc8] sm:$0xff]
        %v1585 = vld [vmem:[#allocation6 + $0xd0] sm:$0xff]
        %v1586 = vld [vmem:[#allocation6 + $0xd8] sm:$0xff]
        %v1587 = vld [vmem:[#allocation6 + $0xe0] sm:$0xff]
        %v1588 = vld [vmem:[#allocation6 + $0xe8] sm:$0xff]
        %v1589 = vld [vmem:[#allocation6 + $0xf0] sm:$0xff]
        %v1590 = vld [vmem:[#allocation6 + $0xf8] sm:$0xff]
        %v1591 = vld [vmem:[#allocation6 + $0x100] sm:$0xff]
        %v1592 = vld [vmem:[#allocation6 + $0x108] sm:$0xff]
        %v1593 = vld [vmem:[#allocation6 + $0x110] sm:$0xff]
        %v1594 = vld [vmem:[#allocation6 + $0x118] sm:$0xff]
        %v1595 = vld [vmem:[#allocation6 + $0x120] sm:$0xff]
        %v1596 = vld [vmem:[#allocation6 + $0x128] sm:$0xff]
        %v1597 = vld [vmem:[#allocation6 + $0x130] sm:$0xff]
        %v1598 = vld [vmem:[#allocation6 + $0x138] sm:$0xff]
        %v1599 = vld [vmem:[#allocation6 + $0x140] sm:$0xff]
        %v1600 = vld [vmem:[#allocation6 + $0x148] sm:$0xff]
        %v1601 = vld [vmem:[#allocation6 + $0x150] sm:$0xff]
        %v1602 = vld [vmem:[#allocation6 + $0x158] sm:$0xff]
        %v1603 = vld [vmem:[#allocation6 + $0x160] sm:$0xff]
        %v1604 = vld [vmem:[#allocation6 + $0x168] sm:$0xff]
        %v1605 = vld [vmem:[#allocation6 + $0x170] sm:$0xff]
        %v1606 = vld [vmem:[#allocation6 + $0x178] sm:$0xff]
        %1607 = vmatpush.msra.mxu0 %v1574
        %1608 = vmatpush.msra.mxu0 %v1573
        %1609 = vmatpush.msra.mxu0 %v1572
        %1610 = vmatpush.msra.mxu0 %v1571
        %1611 = vmatpush.msra.mxu0 %v1570
        %1612 = vmatpush.msra.mxu0 %v1569
        %1613 = vmatpush.msra.mxu0 %v1568
        %1614 = vmatpush.msra.mxu0 %v1567
        %1615 = vmatpush.msra.mxu0 %v1566
        %1616 = vmatpush.msra.mxu0 %v1565
        %1617 = vmatpush.msra.mxu0 %v1564
        %1618 = vmatpush.msra.mxu0 %v1563
        %1619 = vmatpush.msra.mxu0 %v1562
        %1620 = vmatpush.msra.mxu0 %v1561
        %1621 = vmatpush.msra.mxu0 %v1560
        %1622 = vmatpush.msra.mxu0 %v1559
        %1623 = vmatmul.f32.gmra.mxu0 %v1556
        %v1624 = vpop.f32.mrf.mxu0
        %v1625 = vadd.f32 0.0, %v1624
        %1626 = vdwg.mxu0
        %1627 = vmatpush.msra.mxu0 %v1590
        %1628 = vmatpush.msra.mxu0 %v1589
        %1629 = vmatpush.msra.mxu0 %v1588
        %1630 = vmatpush.msra.mxu0 %v1587
        %1631 = vmatpush.msra.mxu0 %v1586
        %1632 = vmatpush.msra.mxu0 %v1585
        %1633 = vmatpush.msra.mxu0 %v1584
        %1634 = vmatpush.msra.mxu0 %v1583
        %1635 = vmatpush.msra.mxu0 %v1582
        %1636 = vmatpush.msra.mxu0 %v1581
        %1637 = vmatpush.msra.mxu0 %v1580
        %1638 = vmatpush.msra.mxu0 %v1579
        %1639 = vmatpush.msra.mxu0 %v1578
        %1640 = vmatpush.msra.mxu0 %v1577
        %1641 = vmatpush.msra.mxu0 %v1576
        %1642 = vmatpush.msra.mxu0 %v1575
        %1643 = vmatmul.f32.gmra.mxu0 %v1557
        %v1644 = vpop.f32.mrf.mxu0
        %v1645 = vadd.f32 %v1625, %v1644
        %1646 = vdwg.mxu0
        %1647 = vmatpush.msra.mxu0 %v1606
        %1648 = vmatpush.msra.mxu0 %v1605
        %1649 = vmatpush.msra.mxu0 %v1604
        %1650 = vmatpush.msra.mxu0 %v1603
        %1651 = vmatpush.msra.mxu0 %v1602
        %1652 = vmatpush.msra.mxu0 %v1601
        %1653 = vmatpush.msra.mxu0 %v1600
        %1654 = vmatpush.msra.mxu0 %v1599
        %1655 = vmatpush.msra.mxu0 %v1598
        %1656 = vmatpush.msra.mxu0 %v1597
        %1657 = vmatpush.msra.mxu0 %v1596
        %1658 = vmatpush.msra.mxu0 %v1595
        %1659 = vmatpush.msra.mxu0 %v1594
        %1660 = vmatpush.msra.mxu0 %v1593
        %1661 = vmatpush.msra.mxu0 %v1592
        %1662 = vmatpush.msra.mxu0 %v1591
        %1663 = vmatmul.f32.gmra.mxu0 %v1558
        %v1664 = vpop.f32.mrf.mxu0
        %v1665 = vadd.f32 %v1645, %v1664
        %1666 = vdwg.mxu0
        %1667 = vst [vmem:[%s282 + $0x50] sm:$0xff] %v1665
        %v1668 = vld [vmem:[#allocation4] sm:$0xff]
        %v1669 = vand.u32 2147483647, %v1665
        %v1670 = vadd.f32 %v1668, %v1669
        %1671 = vst [vmem:[#allocation4] sm:$0xff] %v1670
        %v1672 = vld [vmem:[#allocation3] sm:$0xff]
        %v1673 = vld [vmem:[%s238 + $0x50] sm:$0xff]
        %v1674 = vand.u32 2147483647, %v1673
        %v1675 = vadd.f32 %v1672, %v1674
        %1676 = vst [vmem:[#allocation3] sm:$0xff] %v1675
        %v1677 = vld [vmem:[#allocation5] sm:$0xff]
        %v1678 = vld [vmem:[%s248 + $0x50] sm:$0xff]
        %v1679 = vand.u32 2147483647, %v1678
        %v1680 = vadd.f32 %v1677, %v1679
        %1681 = vst [vmem:[#allocation5] sm:$0xff] %v1680
        %v1682 = vld [vmem:[%s238 + $0x50] sm:$0xff]
        %v1683 = vld [vmem:[%s238 + $0x58] sm:$0xff]
        %v1684 = vld [vmem:[%s238 + $0x60] sm:$0xff]
        %v1685 = vld [vmem:[#allocation6] sm:$0xff]
        %v1686 = vld [vmem:[#allocation6 + $0x8] sm:$0xff]
        %v1687 = vld [vmem:[#allocation6 + $0x10] sm:$0xff]
        %v1688 = vld [vmem:[#allocation6 + $0x18] sm:$0xff]
        %v1689 = vld [vmem:[#allocation6 + $0x20] sm:$0xff]
        %v1690 = vld [vmem:[#allocation6 + $0x28] sm:$0xff]
        %v1691 = vld [vmem:[#allocation6 + $0x30] sm:$0xff]
        %v1692 = vld [vmem:[#allocation6 + $0x38] sm:$0xff]
        %v1693 = vld [vmem:[#allocation6 + $0x40] sm:$0xff]
        %v1694 = vld [vmem:[#allocation6 + $0x48] sm:$0xff]
        %v1695 = vld [vmem:[#allocation6 + $0x50] sm:$0xff]
        %v1696 = vld [vmem:[#allocation6 + $0x58] sm:$0xff]
        %v1697 = vld [vmem:[#allocation6 + $0x60] sm:$0xff]
        %v1698 = vld [vmem:[#allocation6 + $0x68] sm:$0xff]
        %v1699 = vld [vmem:[#allocation6 + $0x70] sm:$0xff]
        %v1700 = vld [vmem:[#allocation6 + $0x78] sm:$0xff]
        %v1701 = vld [vmem:[#allocation6 + $0x80] sm:$0xff]
        %v1702 = vld [vmem:[#allocation6 + $0x88] sm:$0xff]
        %v1703 = vld [vmem:[#allocation6 + $0x90] sm:$0xff]
        %v1704 = vld [vmem:[#allocation6 + $0x98] sm:$0xff]
        %v1705 = vld [vmem:[#allocation6 + $0xa0] sm:$0xff]
        %v1706 = vld [vmem:[#allocation6 + $0xa8] sm:$0xff]
        %v1707 = vld [vmem:[#allocation6 + $0xb0] sm:$0xff]
        %v1708 = vld [vmem:[#allocation6 + $0xb8] sm:$0xff]
        %v1709 = vld [vmem:[#allocation6 + $0xc0] sm:$0xff]
        %v1710 = vld [vmem:[#allocation6 + $0xc8] sm:$0xff]
        %v1711 = vld [vmem:[#allocation6 + $0xd0] sm:$0xff]
        %v1712 = vld [vmem:[#allocation6 + $0xd8] sm:$0xff]
        %v1713 = vld [vmem:[#allocation6 + $0xe0] sm:$0xff]
        %v1714 = vld [vmem:[#allocation6 + $0xe8] sm:$0xff]
        %v1715 = vld [vmem:[#allocation6 + $0xf0] sm:$0xff]
        %v1716 = vld [vmem:[#allocation6 + $0xf8] sm:$0xff]
        %v1717 = vld [vmem:[#allocation6 + $0x100] sm:$0xff]
        %v1718 = vld [vmem:[#allocation6 + $0x108] sm:$0xff]
        %v1719 = vld [vmem:[#allocation6 + $0x110] sm:$0xff]
        %v1720 = vld [vmem:[#allocation6 + $0x118] sm:$0xff]
        %v1721 = vld [vmem:[#allocation6 + $0x120] sm:$0xff]
        %v1722 = vld [vmem:[#allocation6 + $0x128] sm:$0xff]
        %v1723 = vld [vmem:[#allocation6 + $0x130] sm:$0xff]
        %v1724 = vld [vmem:[#allocation6 + $0x138] sm:$0xff]
        %v1725 = vld [vmem:[#allocation6 + $0x140] sm:$0xff]
        %v1726 = vld [vmem:[#allocation6 + $0x148] sm:$0xff]
        %v1727 = vld [vmem:[#allocation6 + $0x150] sm:$0xff]
        %v1728 = vld [vmem:[#allocation6 + $0x158] sm:$0xff]
        %v1729 = vld [vmem:[#allocation6 + $0x160] sm:$0xff]
        %v1730 = vld [vmem:[#allocation6 + $0x168] sm:$0xff]
        %v1731 = vld [vmem:[#allocation6 + $0x170] sm:$0xff]
        %v1732 = vld [vmem:[#allocation6 + $0x178] sm:$0xff]
        %1733 = vmatpush.msra.mxu0 %v1700
        %1734 = vmatpush.msra.mxu0 %v1699
        %1735 = vmatpush.msra.mxu0 %v1698
        %1736 = vmatpush.msra.mxu0 %v1697
        %1737 = vmatpush.msra.mxu0 %v1696
        %1738 = vmatpush.msra.mxu0 %v1695
        %1739 = vmatpush.msra.mxu0 %v1694
        %1740 = vmatpush.msra.mxu0 %v1693
        %1741 = vmatpush.msra.mxu0 %v1692
        %1742 = vmatpush.msra.mxu0 %v1691
        %1743 = vmatpush.msra.mxu0 %v1690
        %1744 = vmatpush.msra.mxu0 %v1689
        %1745 = vmatpush.msra.mxu0 %v1688
        %1746 = vmatpush.msra.mxu0 %v1687
        %1747 = vmatpush.msra.mxu0 %v1686
        %1748 = vmatpush.msra.mxu0 %v1685
        %1749 = vmatmul.f32.gmra.mxu0 %v1682
        %v1750 = vpop.f32.mrf.mxu0
        %v1751 = vadd.f32 0.0, %v1750
        %1752 = vdwg.mxu0
        %1753 = vmatpush.msra.mxu0 %v1716
        %1754 = vmatpush.msra.mxu0 %v1715
        %1755 = vmatpush.msra.mxu0 %v1714
        %1756 = vmatpush.msra.mxu0 %v1713
        %1757 = vmatpush.msra.mxu0 %v1712
        %1758 = vmatpush.msra.mxu0 %v1711
        %1759 = vmatpush.msra.mxu0 %v1710
        %1760 = vmatpush.msra.mxu0 %v1709
        %1761 = vmatpush.msra.mxu0 %v1708
        %1762 = vmatpush.msra.mxu0 %v1707
        %1763 = vmatpush.msra.mxu0 %v1706
        %1764 = vmatpush.msra.mxu0 %v1705
        %1765 = vmatpush.msra.mxu0 %v1704
        %1766 = vmatpush.msra.mxu0 %v1703
        %1767 = vmatpush.msra.mxu0 %v1702
        %1768 = vmatpush.msra.mxu0 %v1701
        %1769 = vmatmul.f32.gmra.mxu0 %v1683
        %v1770 = vpop.f32.mrf.mxu0
        %v1771 = vadd.f32 %v1751, %v1770
        %1772 = vdwg.mxu0
        %1773 = vmatpush.msra.mxu0 %v1732
        %1774 = vmatpush.msra.mxu0 %v1731
        %1775 = vmatpush.msra.mxu0 %v1730
        %1776 = vmatpush.msra.mxu0 %v1729
        %1777 = vmatpush.msra.mxu0 %v1728
        %1778 = vmatpush.msra.mxu0 %v1727
        %1779 = vmatpush.msra.mxu0 %v1726
        %1780 = vmatpush.msra.mxu0 %v1725
        %1781 = vmatpush.msra.mxu0 %v1724
        %1782 = vmatpush.msra.mxu0 %v1723
        %1783 = vmatpush.msra.mxu0 %v1722
        %1784 = vmatpush.msra.mxu0 %v1721
        %1785 = vmatpush.msra.mxu0 %v1720
        %1786 = vmatpush.msra.mxu0 %v1719
        %1787 = vmatpush.msra.mxu0 %v1718
        %1788 = vmatpush.msra.mxu0 %v1717
        %1789 = vmatmul.f32.gmra.mxu0 %v1684
        %v1790 = vpop.f32.mrf.mxu0
        %v1791 = vadd.f32 %v1771, %v1790
        %1792 = vdwg.mxu0
        %1793 = vst [vmem:[%s282 + $0x58] sm:$0xff] %v1791
        %v1794 = vld [vmem:[#allocation4] sm:$0xff]
        %v1795 = vand.u32 2147483647, %v1791
        %v1796 = vadd.f32 %v1794, %v1795
        %1797 = vst [vmem:[#allocation4] sm:$0xff] %v1796
        %v1798 = vld [vmem:[#allocation3] sm:$0xff]
        %v1799 = vld [vmem:[%s238 + $0x58] sm:$0xff]
        %v1800 = vand.u32 2147483647, %v1799
        %v1801 = vadd.f32 %v1798, %v1800
        %1802 = vst [vmem:[#allocation3] sm:$0xff] %v1801
        %v1803 = vld [vmem:[#allocation5] sm:$0xff]
        %v1804 = vld [vmem:[%s248 + $0x58] sm:$0xff]
        %v1805 = vand.u32 2147483647, %v1804
        %v1806 = vadd.f32 %v1803, %v1805
        %1807 = vst [vmem:[#allocation5] sm:$0xff] %v1806
        %v1808 = vld [vmem:[%s238 + $0x58] sm:$0xff]
        %v1809 = vld [vmem:[%s238 + $0x60] sm:$0xff]
        %v1810 = vld [vmem:[%s238 + $0x68] sm:$0xff]
        %v1811 = vld [vmem:[#allocation6] sm:$0xff]
        %v1812 = vld [vmem:[#allocation6 + $0x8] sm:$0xff]
        %v1813 = vld [vmem:[#allocation6 + $0x10] sm:$0xff]
        %v1814 = vld [vmem:[#allocation6 + $0x18] sm:$0xff]
        %v1815 = vld [vmem:[#allocation6 + $0x20] sm:$0xff]
        %v1816 = vld [vmem:[#allocation6 + $0x28] sm:$0xff]
        %v1817 = vld [vmem:[#allocation6 + $0x30] sm:$0xff]
        %v1818 = vld [vmem:[#allocation6 + $0x38] sm:$0xff]
        %v1819 = vld [vmem:[#allocation6 + $0x40] sm:$0xff]
        %v1820 = vld [vmem:[#allocation6 + $0x48] sm:$0xff]
        %v1821 = vld [vmem:[#allocation6 + $0x50] sm:$0xff]
        %v1822 = vld [vmem:[#allocation6 + $0x58] sm:$0xff]
        %v1823 = vld [vmem:[#allocation6 + $0x60] sm:$0xff]
        %v1824 = vld [vmem:[#allocation6 + $0x68] sm:$0xff]
        %v1825 = vld [vmem:[#allocation6 + $0x70] sm:$0xff]
        %v1826 = vld [vmem:[#allocation6 + $0x78] sm:$0xff]
        %v1827 = vld [vmem:[#allocation6 + $0x80] sm:$0xff]
        %v1828 = vld [vmem:[#allocation6 + $0x88] sm:$0xff]
        %v1829 = vld [vmem:[#allocation6 + $0x90] sm:$0xff]
        %v1830 = vld [vmem:[#allocation6 + $0x98] sm:$0xff]
        %v1831 = vld [vmem:[#allocation6 + $0xa0] sm:$0xff]
        %v1832 = vld [vmem:[#allocation6 + $0xa8] sm:$0xff]
        %v1833 = vld [vmem:[#allocation6 + $0xb0] sm:$0xff]
        %v1834 = vld [vmem:[#allocation6 + $0xb8] sm:$0xff]
        %v1835 = vld [vmem:[#allocation6 + $0xc0] sm:$0xff]
        %v1836 = vld [vmem:[#allocation6 + $0xc8] sm:$0xff]
        %v1837 = vld [vmem:[#allocation6 + $0xd0] sm:$0xff]
        %v1838 = vld [vmem:[#allocation6 + $0xd8] sm:$0xff]
        %v1839 = vld [vmem:[#allocation6 + $0xe0] sm:$0xff]
        %v1840 = vld [vmem:[#allocation6 + $0xe8] sm:$0xff]
        %v1841 = vld [vmem:[#allocation6 + $0xf0] sm:$0xff]
        %v1842 = vld [vmem:[#allocation6 + $0xf8] sm:$0xff]
        %v1843 = vld [vmem:[#allocation6 + $0x100] sm:$0xff]
        %v1844 = vld [vmem:[#allocation6 + $0x108] sm:$0xff]
        %v1845 = vld [vmem:[#allocation6 + $0x110] sm:$0xff]
        %v1846 = vld [vmem:[#allocation6 + $0x118] sm:$0xff]
        %v1847 = vld [vmem:[#allocation6 + $0x120] sm:$0xff]
        %v1848 = vld [vmem:[#allocation6 + $0x128] sm:$0xff]
        %v1849 = vld [vmem:[#allocation6 + $0x130] sm:$0xff]
        %v1850 = vld [vmem:[#allocation6 + $0x138] sm:$0xff]
        %v1851 = vld [vmem:[#allocation6 + $0x140] sm:$0xff]
        %v1852 = vld [vmem:[#allocation6 + $0x148] sm:$0xff]
        %v1853 = vld [vmem:[#allocation6 + $0x150] sm:$0xff]
        %v1854 = vld [vmem:[#allocation6 + $0x158] sm:$0xff]
        %v1855 = vld [vmem:[#allocation6 + $0x160] sm:$0xff]
        %v1856 = vld [vmem:[#allocation6 + $0x168] sm:$0xff]
        %v1857 = vld [vmem:[#allocation6 + $0x170] sm:$0xff]
        %v1858 = vld [vmem:[#allocation6 + $0x178] sm:$0xff]
        %1859 = vmatpush.msra.mxu0 %v1826
        %1860 = vmatpush.msra.mxu0 %v1825
        %1861 = vmatpush.msra.mxu0 %v1824
        %1862 = vmatpush.msra.mxu0 %v1823
        %1863 = vmatpush.msra.mxu0 %v1822
        %1864 = vmatpush.msra.mxu0 %v1821
        %1865 = vmatpush.msra.mxu0 %v1820
        %1866 = vmatpush.msra.mxu0 %v1819
        %1867 = vmatpush.msra.mxu0 %v1818
        %1868 = vmatpush.msra.mxu0 %v1817
        %1869 = vmatpush.msra.mxu0 %v1816
        %1870 = vmatpush.msra.mxu0 %v1815
        %1871 = vmatpush.msra.mxu0 %v1814
        %1872 = vmatpush.msra.mxu0 %v1813
        %1873 = vmatpush.msra.mxu0 %v1812
        %1874 = vmatpush.msra.mxu0 %v1811
        %1875 = vmatmul.f32.gmra.mxu0 %v1808
        %v1876 = vpop.f32.mrf.mxu0
        %v1877 = vadd.f32 0.0, %v1876
        %1878 = vdwg.mxu0
        %1879 = vmatpush.msra.mxu0 %v1842
        %1880 = vmatpush.msra.mxu0 %v1841
        %1881 = vmatpush.msra.mxu0 %v1840
        %1882 = vmatpush.msra.mxu0 %v1839
        %1883 = vmatpush.msra.mxu0 %v1838
        %1884 = vmatpush.msra.mxu0 %v1837
        %1885 = vmatpush.msra.mxu0 %v1836
        %1886 = vmatpush.msra.mxu0 %v1835
        %1887 = vmatpush.msra.mxu0 %v1834
        %1888 = vmatpush.msra.mxu0 %v1833
        %1889 = vmatpush.msra.mxu0 %v1832
        %1890 = vmatpush.msra.mxu0 %v1831
        %1891 = vmatpush.msra.mxu0 %v1830
        %1892 = vmatpush.msra.mxu0 %v1829
        %1893 = vmatpush.msra.mxu0 %v1828
        %1894 = vmatpush.msra.mxu0 %v1827
        %1895 = vmatmul.f32.gmra.mxu0 %v1809
        %v1896 = vpop.f32.mrf.mxu0
        %v1897 = vadd.f32 %v1877, %v1896
        %1898 = vdwg.mxu0
        %1899 = vmatpush.msra.mxu0 %v1858
        %1900 = vmatpush.msra.mxu0 %v1857
        %1901 = vmatpush.msra.mxu0 %v1856
        %1902 = vmatpush.msra.mxu0 %v1855
        %1903 = vmatpush.msra.mxu0 %v1854
        %1904 = vmatpush.msra.mxu0 %v1853
        %1905 = vmatpush.msra.mxu0 %v1852
        %1906 = vmatpush.msra.mxu0 %v1851
        %1907 = vmatpush.msra.mxu0 %v1850
        %1908 = vmatpush.msra.mxu0 %v1849
        %1909 = vmatpush.msra.mxu0 %v1848
        %1910 = vmatpush.msra.mxu0 %v1847
        %1911 = vmatpush.msra.mxu0 %v1846
        %1912 = vmatpush.msra.mxu0 %v1845
        %1913 = vmatpush.msra.mxu0 %v1844
        %1914 = vmatpush.msra.mxu0 %v1843
        %1915 = vmatmul.f32.gmra.mxu0 %v1810
        %v1916 = vpop.f32.mrf.mxu0
        %v1917 = vadd.f32 %v1897, %v1916
        %1918 = vdwg.mxu0
        %1919 = vst [vmem:[%s282 + $0x60] sm:$0xff] %v1917
        %v1920 = vld [vmem:[#allocation4] sm:$0xff]
        %v1921 = vand.u32 2147483647, %v1917
        %v1922 = vadd.f32 %v1920, %v1921
        %1923 = vst [vmem:[#allocation4] sm:$0xff] %v1922
        %v1924 = vld [vmem:[#allocation3] sm:$0xff]
        %v1925 = vld [vmem:[%s238 + $0x60] sm:$0xff]
        %v1926 = vand.u32 2147483647, %v1925
        %v1927 = vadd.f32 %v1924, %v1926
        %1928 = vst [vmem:[#allocation3] sm:$0xff] %v1927
        %v1929 = vld [vmem:[#allocation5] sm:$0xff]
        %v1930 = vld [vmem:[%s248 + $0x60] sm:$0xff]
        %v1931 = vand.u32 2147483647, %v1930
        %v1932 = vadd.f32 %v1929, %v1931
        %1933 = vst [vmem:[#allocation5] sm:$0xff] %v1932
        %v1934 = vld [vmem:[%s238 + $0x60] sm:$0xff]
        %v1935 = vld [vmem:[%s238 + $0x68] sm:$0xff]
        %v1936 = vld [vmem:[%s238 + $0x70] sm:$0xff]
        %v1937 = vld [vmem:[#allocation6] sm:$0xff]
        %v1938 = vld [vmem:[#allocation6 + $0x8] sm:$0xff]
        %v1939 = vld [vmem:[#allocation6 + $0x10] sm:$0xff]
        %v1940 = vld [vmem:[#allocation6 + $0x18] sm:$0xff]
        %v1941 = vld [vmem:[#allocation6 + $0x20] sm:$0xff]
        %v1942 = vld [vmem:[#allocation6 + $0x28] sm:$0xff]
        %v1943 = vld [vmem:[#allocation6 + $0x30] sm:$0xff]
        %v1944 = vld [vmem:[#allocation6 + $0x38] sm:$0xff]
        %v1945 = vld [vmem:[#allocation6 + $0x40] sm:$0xff]
        %v1946 = vld [vmem:[#allocation6 + $0x48] sm:$0xff]
        %v1947 = vld [vmem:[#allocation6 + $0x50] sm:$0xff]
        %v1948 = vld [vmem:[#allocation6 + $0x58] sm:$0xff]
        %v1949 = vld [vmem:[#allocation6 + $0x60] sm:$0xff]
        %v1950 = vld [vmem:[#allocation6 + $0x68] sm:$0xff]
        %v1951 = vld [vmem:[#allocation6 + $0x70] sm:$0xff]
        %v1952 = vld [vmem:[#allocation6 + $0x78] sm:$0xff]
        %v1953 = vld [vmem:[#allocation6 + $0x80] sm:$0xff]
        %v1954 = vld [vmem:[#allocation6 + $0x88] sm:$0xff]
        %v1955 = vld [vmem:[#allocation6 + $0x90] sm:$0xff]
        %v1956 = vld [vmem:[#allocation6 + $0x98] sm:$0xff]
        %v1957 = vld [vmem:[#allocation6 + $0xa0] sm:$0xff]
        %v1958 = vld [vmem:[#allocation6 + $0xa8] sm:$0xff]
        %v1959 = vld [vmem:[#allocation6 + $0xb0] sm:$0xff]
        %v1960 = vld [vmem:[#allocation6 + $0xb8] sm:$0xff]
        %v1961 = vld [vmem:[#allocation6 + $0xc0] sm:$0xff]
        %v1962 = vld [vmem:[#allocation6 + $0xc8] sm:$0xff]
        %v1963 = vld [vmem:[#allocation6 + $0xd0] sm:$0xff]
        %v1964 = vld [vmem:[#allocation6 + $0xd8] sm:$0xff]
        %v1965 = vld [vmem:[#allocation6 + $0xe0] sm:$0xff]
        %v1966 = vld [vmem:[#allocation6 + $0xe8] sm:$0xff]
        %v1967 = vld [vmem:[#allocation6 + $0xf0] sm:$0xff]
        %v1968 = vld [vmem:[#allocation6 + $0xf8] sm:$0xff]
        %v1969 = vld [vmem:[#allocation6 + $0x100] sm:$0xff]
        %v1970 = vld [vmem:[#allocation6 + $0x108] sm:$0xff]
        %v1971 = vld [vmem:[#allocation6 + $0x110] sm:$0xff]
        %v1972 = vld [vmem:[#allocation6 + $0x118] sm:$0xff]
        %v1973 = vld [vmem:[#allocation6 + $0x120] sm:$0xff]
        %v1974 = vld [vmem:[#allocation6 + $0x128] sm:$0xff]
        %v1975 = vld [vmem:[#allocation6 + $0x130] sm:$0xff]
        %v1976 = vld [vmem:[#allocation6 + $0x138] sm:$0xff]
        %v1977 = vld [vmem:[#allocation6 + $0x140] sm:$0xff]
        %v1978 = vld [vmem:[#allocation6 + $0x148] sm:$0xff]
        %v1979 = vld [vmem:[#allocation6 + $0x150] sm:$0xff]
        %v1980 = vld [vmem:[#allocation6 + $0x158] sm:$0xff]
        %v1981 = vld [vmem:[#allocation6 + $0x160] sm:$0xff]
        %v1982 = vld [vmem:[#allocation6 + $0x168] sm:$0xff]
        %v1983 = vld [vmem:[#allocation6 + $0x170] sm:$0xff]
        %v1984 = vld [vmem:[#allocation6 + $0x178] sm:$0xff]
        %1985 = vmatpush.msra.mxu0 %v1952
        %1986 = vmatpush.msra.mxu0 %v1951
        %1987 = vmatpush.msra.mxu0 %v1950
        %1988 = vmatpush.msra.mxu0 %v1949
        %1989 = vmatpush.msra.mxu0 %v1948
        %1990 = vmatpush.msra.mxu0 %v1947
        %1991 = vmatpush.msra.mxu0 %v1946
        %1992 = vmatpush.msra.mxu0 %v1945
        %1993 = vmatpush.msra.mxu0 %v1944
        %1994 = vmatpush.msra.mxu0 %v1943
        %1995 = vmatpush.msra.mxu0 %v1942
        %1996 = vmatpush.msra.mxu0 %v1941
        %1997 = vmatpush.msra.mxu0 %v1940
        %1998 = vmatpush.msra.mxu0 %v1939
        %1999 = vmatpush.msra.mxu0 %v1938
        %2000 = vmatpush.msra.mxu0 %v1937
        %2001 = vmatmul.f32.gmra.mxu0 %v1934
        %v2002 = vpop.f32.mrf.mxu0
        %v2003 = vadd.f32 0.0, %v2002
        %2004 = vdwg.mxu0
        %2005 = vmatpush.msra.mxu0 %v1968
        %2006 = vmatpush.msra.mxu0 %v1967
        %2007 = vmatpush.msra.mxu0 %v1966
        %2008 = vmatpush.msra.mxu0 %v1965
        %2009 = vmatpush.msra.mxu0 %v1964
        %2010 = vmatpush.msra.mxu0 %v1963
        %2011 = vmatpush.msra.mxu0 %v1962
        %2012 = vmatpush.msra.mxu0 %v1961
        %2013 = vmatpush.msra.mxu0 %v1960
        %2014 = vmatpush.msra.mxu0 %v1959
        %2015 = vmatpush.msra.mxu0 %v1958
        %2016 = vmatpush.msra.mxu0 %v1957
        %2017 = vmatpush.msra.mxu0 %v1956
        %2018 = vmatpush.msra.mxu0 %v1955
        %2019 = vmatpush.msra.mxu0 %v1954
        %2020 = vmatpush.msra.mxu0 %v1953
        %2021 = vmatmul.f32.gmra.mxu0 %v1935
        %v2022 = vpop.f32.mrf.mxu0
        %v2023 = vadd.f32 %v2003, %v2022
        %2024 = vdwg.mxu0
        %2025 = vmatpush.msra.mxu0 %v1984
        %2026 = vmatpush.msra.mxu0 %v1983
        %2027 = vmatpush.msra.mxu0 %v1982
        %2028 = vmatpush.msra.mxu0 %v1981
        %2029 = vmatpush.msra.mxu0 %v1980
        %2030 = vmatpush.msra.mxu0 %v1979
        %2031 = vmatpush.msra.mxu0 %v1978
        %2032 = vmatpush.msra.mxu0 %v1977
        %2033 = vmatpush.msra.mxu0 %v1976
        %2034 = vmatpush.msra.mxu0 %v1975
        %2035 = vmatpush.msra.mxu0 %v1974
        %2036 = vmatpush.msra.mxu0 %v1973
        %2037 = vmatpush.msra.mxu0 %v1972
        %2038 = vmatpush.msra.mxu0 %v1971
        %2039 = vmatpush.msra.mxu0 %v1970
        %2040 = vmatpush.msra.mxu0 %v1969
        %2041 = vmatmul.f32.gmra.mxu0 %v1936
        %v2042 = vpop.f32.mrf.mxu0
        %v2043 = vadd.f32 %v2023, %v2042
        %2044 = vdwg.mxu0
        %2045 = vst [vmem:[%s282 + $0x68] sm:$0xff] %v2043
        %v2046 = vld [vmem:[#allocation4] sm:$0xff]
        %v2047 = vand.u32 2147483647, %v2043
        %v2048 = vadd.f32 %v2046, %v2047
        %2049 = vst [vmem:[#allocation4] sm:$0xff] %v2048
        %v2050 = vld [vmem:[#allocation3] sm:$0xff]
        %v2051 = vld [vmem:[%s238 + $0x68] sm:$0xff]
        %v2052 = vand.u32 2147483647, %v2051
        %v2053 = vadd.f32 %v2050, %v2052
        %2054 = vst [vmem:[#allocation3] sm:$0xff] %v2053
        %v2055 = vld [vmem:[#allocation5] sm:$0xff]
        %v2056 = vld [vmem:[%s248 + $0x68] sm:$0xff]
        %v2057 = vand.u32 2147483647, %v2056
        %v2058 = vadd.f32 %v2055, %v2057
        %2059 = vst [vmem:[#allocation5] sm:$0xff] %v2058
        %v2060 = vld [vmem:[%s238 + $0x68] sm:$0xff]
        %v2061 = vld [vmem:[%s238 + $0x70] sm:$0xff]
        %v2062 = vld [vmem:[%s238 + $0x78] sm:$0xff]
        %v2063 = vld [vmem:[#allocation6] sm:$0xff]
        %v2064 = vld [vmem:[#allocation6 + $0x8] sm:$0xff]
        %v2065 = vld [vmem:[#allocation6 + $0x10] sm:$0xff]
        %v2066 = vld [vmem:[#allocation6 + $0x18] sm:$0xff]
        %v2067 = vld [vmem:[#allocation6 + $0x20] sm:$0xff]
        %v2068 = vld [vmem:[#allocation6 + $0x28] sm:$0xff]
        %v2069 = vld [vmem:[#allocation6 + $0x30] sm:$0xff]
        %v2070 = vld [vmem:[#allocation6 + $0x38] sm:$0xff]
        %v2071 = vld [vmem:[#allocation6 + $0x40] sm:$0xff]
        %v2072 = vld [vmem:[#allocation6 + $0x48] sm:$0xff]
        %v2073 = vld [vmem:[#allocation6 + $0x50] sm:$0xff]
        %v2074 = vld [vmem:[#allocation6 + $0x58] sm:$0xff]
        %v2075 = vld [vmem:[#allocation6 + $0x60] sm:$0xff]
        %v2076 = vld [vmem:[#allocation6 + $0x68] sm:$0xff]
        %v2077 = vld [vmem:[#allocation6 + $0x70] sm:$0xff]
        %v2078 = vld [vmem:[#allocation6 + $0x78] sm:$0xff]
        %v2079 = vld [vmem:[#allocation6 + $0x80] sm:$0xff]
        %v2080 = vld [vmem:[#allocation6 + $0x88] sm:$0xff]
        %v2081 = vld [vmem:[#allocation6 + $0x90] sm:$0xff]
        %v2082 = vld [vmem:[#allocation6 + $0x98] sm:$0xff]
        %v2083 = vld [vmem:[#allocation6 + $0xa0] sm:$0xff]
        %v2084 = vld [vmem:[#allocation6 + $0xa8] sm:$0xff]
        %v2085 = vld [vmem:[#allocation6 + $0xb0] sm:$0xff]
        %v2086 = vld [vmem:[#allocation6 + $0xb8] sm:$0xff]
        %v2087 = vld [vmem:[#allocation6 + $0xc0] sm:$0xff]
        %v2088 = vld [vmem:[#allocation6 + $0xc8] sm:$0xff]
        %v2089 = vld [vmem:[#allocation6 + $0xd0] sm:$0xff]
        %v2090 = vld [vmem:[#allocation6 + $0xd8] sm:$0xff]
        %v2091 = vld [vmem:[#allocation6 + $0xe0] sm:$0xff]
        %v2092 = vld [vmem:[#allocation6 + $0xe8] sm:$0xff]
        %v2093 = vld [vmem:[#allocation6 + $0xf0] sm:$0xff]
        %v2094 = vld [vmem:[#allocation6 + $0xf8] sm:$0xff]
        %v2095 = vld [vmem:[#allocation6 + $0x100] sm:$0xff]
        %v2096 = vld [vmem:[#allocation6 + $0x108] sm:$0xff]
        %v2097 = vld [vmem:[#allocation6 + $0x110] sm:$0xff]
        %v2098 = vld [vmem:[#allocation6 + $0x118] sm:$0xff]
        %v2099 = vld [vmem:[#allocation6 + $0x120] sm:$0xff]
        %v2100 = vld [vmem:[#allocation6 + $0x128] sm:$0xff]
        %v2101 = vld [vmem:[#allocation6 + $0x130] sm:$0xff]
        %v2102 = vld [vmem:[#allocation6 + $0x138] sm:$0xff]
        %v2103 = vld [vmem:[#allocation6 + $0x140] sm:$0xff]
        %v2104 = vld [vmem:[#allocation6 + $0x148] sm:$0xff]
        %v2105 = vld [vmem:[#allocation6 + $0x150] sm:$0xff]
        %v2106 = vld [vmem:[#allocation6 + $0x158] sm:$0xff]
        %v2107 = vld [vmem:[#allocation6 + $0x160] sm:$0xff]
        %v2108 = vld [vmem:[#allocation6 + $0x168] sm:$0xff]
        %v2109 = vld [vmem:[#allocation6 + $0x170] sm:$0xff]
        %v2110 = vld [vmem:[#allocation6 + $0x178] sm:$0xff]
        %2111 = vmatpush.msra.mxu0 %v2078
        %2112 = vmatpush.msra.mxu0 %v2077
        %2113 = vmatpush.msra.mxu0 %v2076
        %2114 = vmatpush.msra.mxu0 %v2075
        %2115 = vmatpush.msra.mxu0 %v2074
        %2116 = vmatpush.msra.mxu0 %v2073
        %2117 = vmatpush.msra.mxu0 %v2072
        %2118 = vmatpush.msra.mxu0 %v2071
        %2119 = vmatpush.msra.mxu0 %v2070
        %2120 = vmatpush.msra.mxu0 %v2069
        %2121 = vmatpush.msra.mxu0 %v2068
        %2122 = vmatpush.msra.mxu0 %v2067
        %2123 = vmatpush.msra.mxu0 %v2066
        %2124 = vmatpush.msra.mxu0 %v2065
        %2125 = vmatpush.msra.mxu0 %v2064
        %2126 = vmatpush.msra.mxu0 %v2063
        %2127 = vmatmul.f32.gmra.mxu0 %v2060
        %v2128 = vpop.f32.mrf.mxu0
        %v2129 = vadd.f32 0.0, %v2128
        %2130 = vdwg.mxu0
        %2131 = vmatpush.msra.mxu0 %v2094
        %2132 = vmatpush.msra.mxu0 %v2093
        %2133 = vmatpush.msra.mxu0 %v2092
        %2134 = vmatpush.msra.mxu0 %v2091
        %2135 = vmatpush.msra.mxu0 %v2090
        %2136 = vmatpush.msra.mxu0 %v2089
        %2137 = vmatpush.msra.mxu0 %v2088
        %2138 = vmatpush.msra.mxu0 %v2087
        %2139 = vmatpush.msra.mxu0 %v2086
        %2140 = vmatpush.msra.mxu0 %v2085
        %2141 = vmatpush.msra.mxu0 %v2084
        %2142 = vmatpush.msra.mxu0 %v2083
        %2143 = vmatpush.msra.mxu0 %v2082
        %2144 = vmatpush.msra.mxu0 %v2081
        %2145 = vmatpush.msra.mxu0 %v2080
        %2146 = vmatpush.msra.mxu0 %v2079
        %2147 = vmatmul.f32.gmra.mxu0 %v2061
        %v2148 = vpop.f32.mrf.mxu0
        %v2149 = vadd.f32 %v2129, %v2148
        %2150 = vdwg.mxu0
        %2151 = vmatpush.msra.mxu0 %v2110
        %2152 = vmatpush.msra.mxu0 %v2109
        %2153 = vmatpush.msra.mxu0 %v2108
        %2154 = vmatpush.msra.mxu0 %v2107
        %2155 = vmatpush.msra.mxu0 %v2106
        %2156 = vmatpush.msra.mxu0 %v2105
        %2157 = vmatpush.msra.mxu0 %v2104
        %2158 = vmatpush.msra.mxu0 %v2103
        %2159 = vmatpush.msra.mxu0 %v2102
        %2160 = vmatpush.msra.mxu0 %v2101
        %2161 = vmatpush.msra.mxu0 %v2100
        %2162 = vmatpush.msra.mxu0 %v2099
        %2163 = vmatpush.msra.mxu0 %v2098
        %2164 = vmatpush.msra.mxu0 %v2097
        %2165 = vmatpush.msra.mxu0 %v2096
        %2166 = vmatpush.msra.mxu0 %v2095
        %2167 = vmatmul.f32.gmra.mxu0 %v2062
        %v2168 = vpop.f32.mrf.mxu0
        %v2169 = vadd.f32 %v2149, %v2168
        %2170 = vdwg.mxu0
        %2171 = vst [vmem:[%s282 + $0x70] sm:$0xff] %v2169
        %v2172 = vld [vmem:[#allocation4] sm:$0xff]
        %v2173 = vand.u32 2147483647, %v2169
        %v2174 = vadd.f32 %v2172, %v2173
        %2175 = vst [vmem:[#allocation4] sm:$0xff] %v2174
        %v2176 = vld [vmem:[#allocation3] sm:$0xff]
        %v2177 = vld [vmem:[%s238 + $0x70] sm:$0xff]
        %v2178 = vand.u32 2147483647, %v2177
        %v2179 = vadd.f32 %v2176, %v2178
        %2180 = vst [vmem:[#allocation3] sm:$0xff] %v2179
        %v2181 = vld [vmem:[#allocation5] sm:$0xff]
        %v2182 = vld [vmem:[%s248 + $0x70] sm:$0xff]
        %v2183 = vand.u32 2147483647, %v2182
        %v2184 = vadd.f32 %v2181, %v2183
        %2185 = vst [vmem:[#allocation5] sm:$0xff] %v2184
        %v2186 = vld [vmem:[%s238 + $0x70] sm:$0xff]
        %v2187 = vld [vmem:[%s238 + $0x78] sm:$0xff]
        %2188 = vst [vmem:[#allocation2] sm:$0xff] %v2186
        %2189 = vst [vmem:[#allocation2 + $0x8] sm:$0xff] %v2187
        %v2190 = vld [vmem:[%s238] sm:$0xff]
        %2191 = vst [vmem:[#allocation2 + $0x10] sm:$0xff] %v2190
        %v2192 = vld [vmem:[#allocation2] sm:$0xff]
        %v2193 = vld [vmem:[#allocation2 + $0x8] sm:$0xff]
        %v2194 = vld [vmem:[#allocation2 + $0x10] sm:$0xff]
        %v2195 = vld [vmem:[#allocation6] sm:$0xff]
        %v2196 = vld [vmem:[#allocation6 + $0x8] sm:$0xff]
        %v2197 = vld [vmem:[#allocation6 + $0x10] sm:$0xff]
        %v2198 = vld [vmem:[#allocation6 + $0x18] sm:$0xff]
        %v2199 = vld [vmem:[#allocation6 + $0x20] sm:$0xff]
        %v2200 = vld [vmem:[#allocation6 + $0x28] sm:$0xff]
        %v2201 = vld [vmem:[#allocation6 + $0x30] sm:$0xff]
        %v2202 = vld [vmem:[#allocation6 + $0x38] sm:$0xff]
        %v2203 = vld [vmem:[#allocation6 + $0x40] sm:$0xff]
        %v2204 = vld [vmem:[#allocation6 + $0x48] sm:$0xff]
        %v2205 = vld [vmem:[#allocation6 + $0x50] sm:$0xff]
        %v2206 = vld [vmem:[#allocation6 + $0x58] sm:$0xff]
        %v2207 = vld [vmem:[#allocation6 + $0x60] sm:$0xff]
        %v2208 = vld [vmem:[#allocation6 + $0x68] sm:$0xff]
        %v2209 = vld [vmem:[#allocation6 + $0x70] sm:$0xff]
        %v2210 = vld [vmem:[#allocation6 + $0x78] sm:$0xff]
        %v2211 = vld [vmem:[#allocation6 + $0x80] sm:$0xff]
        %v2212 = vld [vmem:[#allocation6 + $0x88] sm:$0xff]
        %v2213 = vld [vmem:[#allocation6 + $0x90] sm:$0xff]
        %v2214 = vld [vmem:[#allocation6 + $0x98] sm:$0xff]
        %v2215 = vld [vmem:[#allocation6 + $0xa0] sm:$0xff]
        %v2216 = vld [vmem:[#allocation6 + $0xa8] sm:$0xff]
        %v2217 = vld [vmem:[#allocation6 + $0xb0] sm:$0xff]
        %v2218 = vld [vmem:[#allocation6 + $0xb8] sm:$0xff]
        %v2219 = vld [vmem:[#allocation6 + $0xc0] sm:$0xff]
        %v2220 = vld [vmem:[#allocation6 + $0xc8] sm:$0xff]
        %v2221 = vld [vmem:[#allocation6 + $0xd0] sm:$0xff]
        %v2222 = vld [vmem:[#allocation6 + $0xd8] sm:$0xff]
        %v2223 = vld [vmem:[#allocation6 + $0xe0] sm:$0xff]
        %v2224 = vld [vmem:[#allocation6 + $0xe8] sm:$0xff]
        %v2225 = vld [vmem:[#allocation6 + $0xf0] sm:$0xff]
        %v2226 = vld [vmem:[#allocation6 + $0xf8] sm:$0xff]
        %v2227 = vld [vmem:[#allocation6 + $0x100] sm:$0xff]
        %v2228 = vld [vmem:[#allocation6 + $0x108] sm:$0xff]
        %v2229 = vld [vmem:[#allocation6 + $0x110] sm:$0xff]
        %v2230 = vld [vmem:[#allocation6 + $0x118] sm:$0xff]
        %v2231 = vld [vmem:[#allocation6 + $0x120] sm:$0xff]
        %v2232 = vld [vmem:[#allocation6 + $0x128] sm:$0xff]
        %v2233 = vld [vmem:[#allocation6 + $0x130] sm:$0xff]
        %v2234 = vld [vmem:[#allocation6 + $0x138] sm:$0xff]
        %v2235 = vld [vmem:[#allocation6 + $0x140] sm:$0xff]
        %v2236 = vld [vmem:[#allocation6 + $0x148] sm:$0xff]
        %v2237 = vld [vmem:[#allocation6 + $0x150] sm:$0xff]
        %v2238 = vld [vmem:[#allocation6 + $0x158] sm:$0xff]
        %v2239 = vld [vmem:[#allocation6 + $0x160] sm:$0xff]
        %v2240 = vld [vmem:[#allocation6 + $0x168] sm:$0xff]
        %v2241 = vld [vmem:[#allocation6 + $0x170] sm:$0xff]
        %v2242 = vld [vmem:[#allocation6 + $0x178] sm:$0xff]
        %2243 = vmatpush.msra.mxu0 %v2210
        %2244 = vmatpush.msra.mxu0 %v2209
        %2245 = vmatpush.msra.mxu0 %v2208
        %2246 = vmatpush.msra.mxu0 %v2207
        %2247 = vmatpush.msra.mxu0 %v2206
        %2248 = vmatpush.msra.mxu0 %v2205
        %2249 = vmatpush.msra.mxu0 %v2204
        %2250 = vmatpush.msra.mxu0 %v2203
        %2251 = vmatpush.msra.mxu0 %v2202
        %2252 = vmatpush.msra.mxu0 %v2201
        %2253 = vmatpush.msra.mxu0 %v2200
        %2254 = vmatpush.msra.mxu0 %v2199
        %2255 = vmatpush.msra.mxu0 %v2198
        %2256 = vmatpush.msra.mxu0 %v2197
        %2257 = vmatpush.msra.mxu0 %v2196
        %2258 = vmatpush.msra.mxu0 %v2195
        %2259 = vmatmul.f32.gmra.mxu0 %v2192
        %v2260 = vpop.f32.mrf.mxu0
        %v2261 = vadd.f32 0.0, %v2260
        %2262 = vdwg.mxu0
        %2263 = vmatpush.msra.mxu0 %v2226
        %2264 = vmatpush.msra.mxu0 %v2225
        %2265 = vmatpush.msra.mxu0 %v2224
        %2266 = vmatpush.msra.mxu0 %v2223
        %2267 = vmatpush.msra.mxu0 %v2222
        %2268 = vmatpush.msra.mxu0 %v2221
        %2269 = vmatpush.msra.mxu0 %v2220
        %2270 = vmatpush.msra.mxu0 %v2219
        %2271 = vmatpush.msra.mxu0 %v2218
        %2272 = vmatpush.msra.mxu0 %v2217
        %2273 = vmatpush.msra.mxu0 %v2216
        %2274 = vmatpush.msra.mxu0 %v2215
        %2275 = vmatpush.msra.mxu0 %v2214
        %2276 = vmatpush.msra.mxu0 %v2213
        %2277 = vmatpush.msra.mxu0 %v2212
        %2278 = vmatpush.msra.mxu0 %v2211
        %2279 = vmatmul.f32.gmra.mxu0 %v2193
        %v2280 = vpop.f32.mrf.mxu0
        %v2281 = vadd.f32 %v2261, %v2280
        %2282 = vdwg.mxu0
        %2283 = vmatpush.msra.mxu0 %v2242
        %2284 = vmatpush.msra.mxu0 %v2241
        %2285 = vmatpush.msra.mxu0 %v2240
        %2286 = vmatpush.msra.mxu0 %v2239
        %2287 = vmatpush.msra.mxu0 %v2238
        %2288 = vmatpush.msra.mxu0 %v2237
        %2289 = vmatpush.msra.mxu0 %v2236
        %2290 = vmatpush.msra.mxu0 %v2235
        %2291 = vmatpush.msra.mxu0 %v2234
        %2292 = vmatpush.msra.mxu0 %v2233
        %2293 = vmatpush.msra.mxu0 %v2232
        %2294 = vmatpush.msra.mxu0 %v2231
        %2295 = vmatpush.msra.mxu0 %v2230
        %2296 = vmatpush.msra.mxu0 %v2229
        %2297 = vmatpush.msra.mxu0 %v2228
        %2298 = vmatpush.msra.mxu0 %v2227
        %2299 = vmatmul.f32.gmra.mxu0 %v2194
        %v2300 = vpop.f32.mrf.mxu0
        %v2301 = vadd.f32 %v2281, %v2300
        %2302 = vdwg.mxu0
        %2303 = vst [vmem:[%s282 + $0x78] sm:$0xff] %v2301
        %v2304 = vld [vmem:[#allocation4] sm:$0xff]
        %v2305 = vand.u32 2147483647, %v2301
        %v2306 = vadd.f32 %v2304, %v2305
        %2307 = vst [vmem:[#allocation4] sm:$0xff] %v2306
        %v2308 = vld [vmem:[#allocation3] sm:$0xff]
        %v2309 = vld [vmem:[%s238 + $0x78] sm:$0xff]
        %v2310 = vand.u32 2147483647, %v2309
        %v2311 = vadd.f32 %v2308, %v2310
        %2312 = vst [vmem:[#allocation3] sm:$0xff] %v2311
        %v2313 = vld [vmem:[#allocation5] sm:$0xff]
        %v2314 = vld [vmem:[%s248 + $0x78] sm:$0xff]
        %v2315 = vand.u32 2147483647, %v2314
        %v2316 = vadd.f32 %v2313, %v2315
        %2317 = vst [vmem:[#allocation5] sm:$0xff] %v2316
        %v2318 = vld [vmem:[#allocation3] sm:$0xff]
        %2319 = vadd.xlane.f32.xlu0 %v2318
        %v2320 = vpop.xlane.xlu0 %2319
        %v2321 = vmul.f32 %v2320, 0.00048828125
        %v2322 = vld [vmem:[#allocation4] sm:$0xff]
        %2323 = vadd.xlane.f32.xlu0 %v2322
        %v2324 = vpop.xlane.xlu0 %2323
        %v2325 = vld [vmem:[#allocation5] sm:$0xff]
        %2326 = vadd.xlane.f32.xlu0 %v2325
        %v2327 = vpop.xlane.xlu0 %2326
        %v2328 = vld [vmem:[%s286] sm:$0xff]
        %v2329 = vmul.f32 %v2324, 0.00048828125
        %v2330 = vadd.f32 %v2329, 1e-14
        %v2331 = vrcp.pop %v2330
        %v2332 = vmul.f32 %v2324, %v2321
        %v2333 = vmul.f32 %v2332, %v2331
        %v2334 = vmul.f32 %v2333, %v2328
        %v2335 = vmul.f32 %v2327, %v2328
        %v2336 = vmul.f32 %v2321, %v2331
        %v2337 = vsub.f32 1.0, %v2328
        %v2338 = vmul.f32 %v2336, %v2337
        %2340 = vrot.lane.b32.xlu0 %v2334, 127
        %v2341 = vpop.permute.xlu0 %2340
        %v2343 = vmul.f32 %v2328, %v2341
        %v2344 = vadd.f32 %v2335, 1e-14
        %v2345 = vrcp.pop %v2344
        %2347 = vrot.lane.b32.xlu0 %v2345, 126
        %v2348 = vpop.permute.xlu0 %2347
        %v2350 = vmul.f32 %v2343, %v2348
        %v2351 = vld [vmem:[%s282] sm:$0xff]
        %v2352 = vld [vmem:[%s282 + $0x8] sm:$0xff]
        %v2353 = vld [vmem:[%s282 + $0x10] sm:$0xff]
        %v2354 = vld [vmem:[%s282 + $0x18] sm:$0xff]
        %v2355 = vld [vmem:[%s282 + $0x20] sm:$0xff]
        %v2356 = vld [vmem:[%s282 + $0x28] sm:$0xff]
        %v2357 = vld [vmem:[%s282 + $0x30] sm:$0xff]
        %v2358 = vld [vmem:[%s282 + $0x38] sm:$0xff]
        %v2359 = vld [vmem:[%s282 + $0x40] sm:$0xff]
        %v2360 = vld [vmem:[%s282 + $0x48] sm:$0xff]
        %v2361 = vld [vmem:[%s282 + $0x50] sm:$0xff]
        %v2362 = vld [vmem:[%s282 + $0x58] sm:$0xff]
        %v2363 = vld [vmem:[%s282 + $0x60] sm:$0xff]
        %v2364 = vld [vmem:[%s282 + $0x68] sm:$0xff]
        %v2365 = vld [vmem:[%s282 + $0x70] sm:$0xff]
        %v2366 = vld [vmem:[%s282 + $0x78] sm:$0xff]
        %2368 = vset.pattern.permute.xlu0 0
        %2369 = vperm.xlu0 %2368, %v2338
        %v2370 = vpop.permute.xlu0 %2369
        %v2372 = vmul.f32 %v2351, %v2370
        %v2373 = vmul.f32 %v2352, %v2370
        %v2374 = vmul.f32 %v2353, %v2370
        %v2375 = vmul.f32 %v2354, %v2370
        %v2376 = vmul.f32 %v2355, %v2370
        %v2377 = vmul.f32 %v2356, %v2370
        %v2378 = vmul.f32 %v2357, %v2370
        %v2379 = vmul.f32 %v2358, %v2370
        %v2380 = vmul.f32 %v2359, %v2370
        %v2381 = vmul.f32 %v2360, %v2370
        %v2382 = vmul.f32 %v2361, %v2370
        %v2383 = vmul.f32 %v2362, %v2370
        %v2384 = vmul.f32 %v2363, %v2370
        %v2385 = vmul.f32 %v2364, %v2370
        %v2386 = vmul.f32 %v2365, %v2370
        %v2387 = vmul.f32 %v2366, %v2370
        %v2388 = vld [vmem:[%s248] sm:$0xff]
        %v2389 = vld [vmem:[%s248 + $0x8] sm:$0xff]
        %v2390 = vld [vmem:[%s248 + $0x10] sm:$0xff]
        %v2391 = vld [vmem:[%s248 + $0x18] sm:$0xff]
        %v2392 = vld [vmem:[%s248 + $0x20] sm:$0xff]
        %v2393 = vld [vmem:[%s248 + $0x28] sm:$0xff]
        %v2394 = vld [vmem:[%s248 + $0x30] sm:$0xff]
        %v2395 = vld [vmem:[%s248 + $0x38] sm:$0xff]
        %v2396 = vld [vmem:[%s248 + $0x40] sm:$0xff]
        %v2397 = vld [vmem:[%s248 + $0x48] sm:$0xff]
        %v2398 = vld [vmem:[%s248 + $0x50] sm:$0xff]
        %v2399 = vld [vmem:[%s248 + $0x58] sm:$0xff]
        %v2400 = vld [vmem:[%s248 + $0x60] sm:$0xff]
        %v2401 = vld [vmem:[%s248 + $0x68] sm:$0xff]
        %v2402 = vld [vmem:[%s248 + $0x70] sm:$0xff]
        %v2403 = vld [vmem:[%s248 + $0x78] sm:$0xff]
        %2405 = vset.pattern.permute.xlu0 0
        %2406 = vperm.xlu0 %2405, %v2350
        %v2407 = vpop.permute.xlu0 %2406
        %v2409 = vmul.f32 %v2388, %v2407
        %v2410 = vmul.f32 %v2389, %v2407
        %v2411 = vmul.f32 %v2390, %v2407
        %v2412 = vmul.f32 %v2391, %v2407
        %v2413 = vmul.f32 %v2392, %v2407
        %v2414 = vmul.f32 %v2393, %v2407
        %v2415 = vmul.f32 %v2394, %v2407
        %v2416 = vmul.f32 %v2395, %v2407
        %v2417 = vmul.f32 %v2396, %v2407
        %v2418 = vmul.f32 %v2397, %v2407
        %v2419 = vmul.f32 %v2398, %v2407
        %v2420 = vmul.f32 %v2399, %v2407
        %v2421 = vmul.f32 %v2400, %v2407
        %v2422 = vmul.f32 %v2401, %v2407
        %v2423 = vmul.f32 %v2402, %v2407
        %v2424 = vmul.f32 %v2403, %v2407
        %v2425 = vadd.f32 %v2372, %v2409
        %v2426 = vadd.f32 %v2373, %v2410
        %v2427 = vadd.f32 %v2374, %v2411
        %v2428 = vadd.f32 %v2375, %v2412
        %v2429 = vadd.f32 %v2376, %v2413
        %v2430 = vadd.f32 %v2377, %v2414
        %v2431 = vadd.f32 %v2378, %v2415
        %v2432 = vadd.f32 %v2379, %v2416
        %v2433 = vadd.f32 %v2380, %v2417
        %v2434 = vadd.f32 %v2381, %v2418
        %v2435 = vadd.f32 %v2382, %v2419
        %v2436 = vadd.f32 %v2383, %v2420
        %v2437 = vadd.f32 %v2384, %v2421
        %v2438 = vadd.f32 %v2385, %v2422
        %v2439 = vadd.f32 %v2386, %v2423
        %v2440 = vadd.f32 %v2387, %v2424
        %2441 = vst [vmem:[%s282] sm:$0xff] %v2425
        %2442 = vst [vmem:[%s282 + $0x8] sm:$0xff] %v2426
        %2443 = vst [vmem:[%s282 + $0x10] sm:$0xff] %v2427
        %2444 = vst [vmem:[%s282 + $0x18] sm:$0xff] %v2428
        %2445 = vst [vmem:[%s282 + $0x20] sm:$0xff] %v2429
        %2446 = vst [vmem:[%s282 + $0x28] sm:$0xff] %v2430
        %2447 = vst [vmem:[%s282 + $0x30] sm:$0xff] %v2431
        %2448 = vst [vmem:[%s282 + $0x38] sm:$0xff] %v2432
        %2449 = vst [vmem:[%s282 + $0x40] sm:$0xff] %v2433
        %2450 = vst [vmem:[%s282 + $0x48] sm:$0xff] %v2434
        %2451 = vst [vmem:[%s282 + $0x50] sm:$0xff] %v2435
        %2452 = vst [vmem:[%s282 + $0x58] sm:$0xff] %v2436
        %2453 = vst [vmem:[%s282 + $0x60] sm:$0xff] %v2437
        %2454 = vst [vmem:[%s282 + $0x68] sm:$0xff] %v2438
        %2455 = vst [vmem:[%s282 + $0x70] sm:$0xff] %v2439
        %2456 = vst [vmem:[%s282 + $0x78] sm:$0xff] %v2440
        %s2457 = sand.u32 %s129, 1
        %s2458 = scalar_lea.sflag [#allocation8], %s2457
        %s2459 = sand.u32 %s129, 1
        %s2460 = smul.addr %s2459, 128
        %s2461 = scalar_lea.vmem [#allocation12], %s2460
        // Predicated region
        $region49: #{tpu_custom_call.1} parent=35 // pred_check
          %p2462 = pneg %p139
        $region50: #{tpu_custom_call.1} parent=35 // pred_check_branch
          %2464 = sbr.rel (%p2462) target = $region52
        $region51: #{tpu_custom_call.1} parent=35 // pred_region
          %2466 = vsyncadd %s2458, 0
          %s2467 = smul.addr %s22, 16
          %s2468 = smul.addr %s2467, 8
          %s2469 = scalar_lea.hbm %s4, %s2468
          %s2471 = sshll.u32 %s2461, 4
          %s2472 = int_to_ptr.vmem [resolvable:$true] %s2471
          %s2473 = sshll.u32 %s2469, 4
          %s2474 = int_to_ptr.hbm [resolvable:$true] %s2473
          %2476 = dma.vmem_to_hbm [thread:$0]  %s2472, 2048, %s2474, %s2458
        $region52: #{tpu_custom_call.1} parent=35 // pred_fallthru
          _
      $region36: #{tpu_custom_call.1} parent=5 // pred_fallthru
        _
      %p2477 = scmp.le.s32.totalorder 2, %s17
      // Predicated region
      $region53: #{tpu_custom_call.1} parent=5 // pred_check
        %p2478 = pneg %p2477
      $region54: #{tpu_custom_call.1} parent=5 // pred_check_branch
        %2480 = sbr.rel (%p2478) target = $region56
      $region55: #{tpu_custom_call.1} parent=5 // pred_region
        %s2481 = ssub.s32 %s17, 2
        // Predicated region
        $region57: #{tpu_custom_call.1} parent=55 // pred_check
          %p2482 = pneg %p145
        $region58: #{tpu_custom_call.1} parent=55 // pred_check_branch
          %2484 = sbr.rel (%p2482) target = $region60
        $region59: #{tpu_custom_call.1} parent=55 // pred_region
          %s2485 = sand.u32 %s130, 1
          %s2486 = scalar_lea.sflag [#allocation8], %s2485
          %s2487 = sand.u32 %s130, 1
          %s2488 = smul.addr %s2487, 128
          %s2489 = scalar_lea.vmem [#allocation12], %s2488
          %2491 = dma.done %s2486, 2048
        $region60: #{tpu_custom_call.1} parent=55 // pred_fallthru
          _
      $region56: #{tpu_custom_call.1} parent=5 // pred_fallthru
        _
    $region6: #{tpu_custom_call.1} parent=1 // loop_footer
      %s21 = sadd.s32 1, %s17
    $region7: #{tpu_custom_call.1} parent=1 // loop_footer_branch
      %16 = sbr.rel target = $region3
    $region8: #{tpu_custom_call.1} parent=1 // loop_exit
      _
    %2492 = vsyncpa [#allocation7], 1
    %s2493 = scalar_lea.sflag [#allocation7], 1
    %2494 = vsyncpa %s2493, 1
    %2495 = vsyncpa [#allocation10], 1
    %s2496 = scalar_lea.sflag [#allocation10], 1
    %2497 = vsyncpa %s2496, 1
    %2498 = vsyncpa [#allocation8], 1
    %s2499 = scalar_lea.sflag [#allocation8], 1
    %2500 = vsyncpa %s2499, 1

</llo_original>
